<compile_context>
chip_gen: v7x
topology: tpu7x:2x2x1
jax: 0.10.0
libtpu: 0.0.40
codegen_flags: <defaults>
</compile_context>

<pallas_src>
import functools

import jax
import jax.numpy as jnp
import numpy as np
from jax import lax
from jax.experimental import pallas as pl
from jax.experimental.pallas import tpu as pltpu

EPS = 1e-5


# ---------------------------------------------------------------------------
# In-kernel helpers
# ---------------------------------------------------------------------------
def _tap(start, size, stride):
  """Contiguous slice when stride==1, strided pl.ds otherwise."""
  return pl.ds(start, size) if stride == 1 else pl.ds(start, size, stride=stride)


def _zero_border(pad_scr, H, W):
  """Zero ONLY the 1-pixel border of an (N, H+2, W+2, C) padded scratch."""
  N, _, _, C = pad_scr.shape
  dt = pad_scr.dtype
  zrow = jnp.zeros((N, 1, W + 2, C), dt)
  pad_scr[:, 0:1, :, :] = zrow
  pad_scr[:, H + 1:H + 2, :, :] = zrow
  zcol = jnp.zeros((N, H, 1, C), dt)
  pad_scr[:, 1:H + 1, 0:1, :] = zcol
  pad_scr[:, 1:H + 1, W + 1:W + 2, :] = zcol


def _conv3x3(pad_scr, w_ref, N, Ho, Wo, Cin, stride):
  """3x3 conv from a zero-padded VMEM scratch as nine accumulated MXU matmuls
  (one per tap) -- no lane-axis im2col concatenate is ever materialised.
  w_ref has shape (9, Cin, Cout) in bf16.  Returns (N*Ho*Wo, Cout) f32."""
  rows = N * Ho * Wo
  acc = None
  t = 0
  for kh in range(3):
    for kw in range(3):
      tap = pad_scr[:, _tap(kh, Ho, stride), _tap(kw, Wo, stride), :]
      tap = tap.reshape(rows, Cin).astype(jnp.bfloat16)
      part = jnp.dot(tap, w_ref[t], preferred_element_type=jnp.float32)
      acc = part if acc is None else acc + part
      t += 1
  return acc


def _bn_train(flat, gamma, beta):
  """Training-mode BatchNorm over (rows, C): biased variance, eps=1e-5.
  Stats in a single fused pass: independent sum and sum-of-squares over one
  read of `flat` (no dependent second pass over (x - mean)).
  TODO(synk): at production row counts route these two reductions through the
  MXU (ones(1, rows) @ flat and @ (flat*flat)) to take them off the XLU."""
  inv_rows = 1.0 / flat.shape[0]
  s = jnp.sum(flat, axis=0, keepdims=True)
  sq = jnp.sum(flat * flat, axis=0, keepdims=True)
  mean = s * inv_rows
  var = jnp.maximum(sq * inv_rows - mean * mean, 0.0)
  return (flat - mean) * lax.rsqrt(var + EPS) * gamma + beta


def _trunk(x_ref, w1_ref, g1_ref, be1_ref, w2_ref, g2_ref, be2_ref,
           xpad_scr, ypad_scr, *, N, H, W, Ci, Co, stride):
  """y2 = bn2(conv2(relu(bn1(conv1(x))))) -- fully VMEM resident."""
  Ho = (H - 1) // stride + 1
  Wo = (W - 1) // stride + 1

  # In-kernel zero padding: border-only zeroing + interior write.
  _zero_border(xpad_scr, H, W)
  xpad_scr[:, 1:H + 1, 1:W + 1, :] = x_ref[...]

  # conv1 (stride folded into tap extraction) + bn1 + relu.
  # conv1/conv2 biases omitted: train-mode BN mean subtraction cancels a
  # per-channel bias exactly (the f32 reference keeps them, proving it).
  y1 = _conv3x3(xpad_scr, w1_ref, N, Ho, Wo, Ci, stride)
  y1 = jnp.maximum(_bn_train(y1, g1_ref[...], be1_ref[...]), 0.0)

  # Intermediate stays in VMEM (re-padded) and feeds conv2 directly.
  _zero_border(ypad_scr, Ho, Wo)
  ypad_scr[:, 1:Ho + 1, 1:Wo + 1, :] = y1.reshape(N, Ho, Wo, Co)

  y2 = _conv3x3(ypad_scr, w2_ref, N, Ho, Wo, Co, 1)
  return _bn_train(y2, g2_ref[...], be2_ref[...]), Ho, Wo


def _add_relu_store(o_ref, y2, skip, N, Ho, Wo, Co, lane_fold):
  if lane_fold:
    # Fold W into the lane dim BEFORE the residual add + relu: the epilogue
    # VPU work runs lane-dense and the store is wide and unmasked.
    o_ref[...] = jnp.maximum(y2.reshape(N * Ho, Wo * Co)
                             + skip.reshape(N * Ho, Wo * Co), 0.0)
  else:
    o_ref[...] = jnp.maximum(y2 + skip, 0.0).reshape(N, Ho, Wo, Co)


# ---------------------------------------------------------------------------
# Fused Pallas kernels (projection skip / identity skip)
# ---------------------------------------------------------------------------
def _residual_proj_kernel(x_ref, w1_ref, g1_ref, be1_ref,
                          w2_ref, g2_ref, be2_ref, w3_ref, b3_ref,
                          o_ref, xpad_scr, ypad_scr,
                          *, N, H, W, Ci, Co, stride, lane_fold):
  y2, Ho, Wo = _trunk(x_ref, w1_ref, g1_ref, be1_ref, w2_ref, g2_ref, be2_ref,
                      xpad_scr, ypad_scr,
                      N=N, H=H, W=W, Ci=Ci, Co=Co, stride=stride)
  # Skip path: 1x1 conv == channel matmul on the stride-subsampled input.
  if stride == 1:
    x_s = x_ref[...]
  else:
    x_s = x_ref[:, _tap(0, Ho, stride), _tap(0, Wo, stride), :]
  skip = jnp.dot(x_s.reshape(N * Ho * Wo, Ci).astype(jnp.bfloat16),
                 w3_ref[...], preferred_element_type=jnp.float32) + b3_ref[...]
  _add_relu_store(o_ref, y2, skip, N, Ho, Wo, Co, lane_fold)


def _residual_identity_kernel(x_ref, w1_ref, g1_ref, be1_ref,
                              w2_ref, g2_ref, be2_ref,
                              o_ref, xpad_scr, ypad_scr,
                              *, N, H, W, Ci, Co, lane_fold):
  y2, Ho, Wo = _trunk(x_ref, w1_ref, g1_ref, be1_ref, w2_ref, g2_ref, be2_ref,
                      xpad_scr, ypad_scr,
                      N=N, H=H, W=W, Ci=Ci, Co=Co, stride=1)
  skip = x_ref[...].reshape(N * H * W, Ci)       # identity skip, exact f32
  _add_relu_store(o_ref, y2, skip, N, Ho, Wo, Co, lane_fold)


# ---------------------------------------------------------------------------
# One-time lane-fold capability probe (replaces the per-call try/except)
# ---------------------------------------------------------------------------
@functools.cache
def _lane_fold_supported():
  """AOT-compiles (never executes) a tiny kernel containing only the
  minor-dim-folding reshape (rows, C) -> (rows/W, W*C) used by the lane-dense
  output path.  Cached so the decision is made exactly once; the real kernel
  is never wrapped in a bare except, so unrelated errors surface normally."""
  def probe_kernel(x_ref, o_ref):
    o_ref[...] = x_ref[...].reshape(16, 64)

  vmem = pl.BlockSpec(memory_space=pltpu.MemorySpace.VMEM)
  try:
    fn = pl.pallas_call(
        probe_kernel,
        out_shape=jax.ShapeDtypeStruct((16, 64), jnp.float32),
        in_specs=[vmem], out_specs=vmem)
    jax.jit(fn).lower(jax.ShapeDtypeStruct((128, 8), jnp.float32)).compile()
    return True
  except Exception:
    return False


# ---------------------------------------------------------------------------
# Wrapper
# ---------------------------------------------------------------------------
def _run_block(x_nhwc, params, *, use_1x1conv, stride, lane_fold):
  N, H, W, Ci = x_nhwc.shape
  Co = params["w1"].shape[3]
  Ho = (H - 1) // stride + 1
  Wo = (W - 1) // stride + 1

  # Per-tap weight layout (9, Cin, Cout); bf16 MXU operands (f32 accumulation).
  w1 = params["w1"].reshape(9, Ci, Co).astype(jnp.bfloat16)
  w2 = params["w2"].reshape(9, Co, Co).astype(jnp.bfloat16)

  args = [x_nhwc, w1, params["g1"], params["be1"], w2,
          params["g2"], params["be2"]]
  if use_1x1conv:
    args += [params["w3"].astype(jnp.bfloat16), params["b3"]]
    kern = functools.partial(_residual_proj_kernel, N=N, H=H, W=W, Ci=Ci,
                             Co=Co, stride=stride, lane_fold=lane_fold)
  else:
    kern = functools.partial(_residual_identity_kernel, N=N, H=H, W=W, Ci=Ci,
                             Co=Co, lane_fold=lane_fold)

  out_shape = (N * Ho, Wo * Co) if lane_fold else (N, Ho, Wo, Co)
  vmem = pl.BlockSpec(memory_space=pltpu.MemorySpace.VMEM)

  out = pl.pallas_call(
      kern,
      out_shape=jax.ShapeDtypeStruct(out_shape, jnp.float32),
      in_specs=[vmem] * len(args),
      out_specs=vmem,
      scratch_shapes=[pltpu.VMEM((N, H + 2, W + 2, Ci), jnp.float32),
                      pltpu.VMEM((N, Ho + 2, Wo + 2, Co), jnp.float32)],
      compiler_params=pltpu.CompilerParams(
          vmem_limit_bytes=48 * 1024 * 1024),
  )(*args)

  out = out.reshape(N, Ho, Wo, Co)
  return jnp.transpose(out, (0, 3, 1, 2))         # back to NCHW


def residual_forward(x_nchw, params, *, use_1x1conv, stride):
  N, Ci, H, W = x_nchw.shape
  Co = params["w1"].shape[3]
  if not use_1x1conv:
    assert Ci == Co and stride == 1, (
        "identity skip requires in_channels == out_channels and stride == 1")
  x = jnp.transpose(x_nchw, (0, 2, 3, 1)).astype(jnp.float32)   # NHWC
  return _run_block(x, params, use_1x1conv=use_1x1conv, stride=stride,
                    lane_fold=_lane_fold_supported())


# ---------------------------------------------------------------------------
# Deterministic parameter init (shapes follow the module's __init__)
# ---------------------------------------------------------------------------
def make_params(key, Ci, Co, use_1x1conv):
  k1, k2, k3, k4, k5, k6 = jax.random.split(key, 6)
  params = {
      # conv weights stored HWIO: (kh, kw, Cin, Cout)
      "w1": 0.1 * jax.random.normal(k1, (3, 3, Ci, Co), jnp.float32),
      "b1": 0.05 * jax.random.normal(k2, (1, Co), jnp.float32),  # ref only
      "w2": 0.1 * jax.random.normal(k3, (3, 3, Co, Co), jnp.float32),
      "b2": 0.05 * jax.random.normal(k4, (1, Co), jnp.float32),  # ref only
      # BatchNorm affine params at PyTorch init values
      "g1": jnp.ones((1, Co), jnp.float32),
      "be1": jnp.zeros((1, Co), jnp.float32),
      "g2": jnp.ones((1, Co), jnp.float32),
      "be2": jnp.zeros((1, Co), jnp.float32),
  }
  if use_1x1conv:
    params["w3"] = 0.1 * jax.random.normal(k5, (Ci, Co), jnp.float32)
    params["b3"] = 0.05 * jax.random.normal(k6, (1, Co), jnp.float32)
  return params


# ---------------------------------------------------------------------------
# Pure-JAX reference (NCHW, lax.conv, f32, WITH conv biases) for checking
# ---------------------------------------------------------------------------
def reference(x_nchw, params, *, use_1x1conv, stride):
  def conv(x, w_hwio, b, s, pad):
    y = lax.conv_general_dilated(
        x, w_hwio, window_strides=(s, s), padding=[(pad, pad), (pad, pad)],
        dimension_numbers=("NCHW", "HWIO", "NCHW"))
    return y + b.reshape(1, -1, 1, 1)

  def bn(y, g, be):
    mean = jnp.mean(y, axis=(0, 2, 3), keepdims=True)
    var = jnp.mean((y - mean) ** 2, axis=(0, 2, 3), keepdims=True)
    return ((y - mean) * lax.rsqrt(var + EPS) * g.reshape(1, -1, 1, 1)
            + be.reshape(1, -1, 1, 1))

  x = x_nchw.astype(jnp.float32)
  y = jax.nn.relu(bn(conv(x, params["w1"], params["b1"], stride, 1),
                     params["g1"], params["be1"]))
  y = bn(conv(y, params["w2"], params["b2"], 1, 1),
         params["g2"], params["be2"])
  if use_1x1conv:
    Ci, Co = params["w3"].shape
    sk = conv(x, params["w3"].reshape(1, 1, Ci, Co), params["b3"], stride, 0)
  else:
    sk = x
  return jax.nn.relu(y + sk)


if __name__ == "__main__":
  key = jax.random.PRNGKey(0)
  configs = [
      # (N, Ci, H, W, Co, use_1x1conv, stride)
      (2, 4, 16, 16, 8, True, 2),    # downsampling block with 1x1 projection
      (2, 8, 16, 16, 8, False, 1),   # identity-skip block
  ]
  for (N, Ci, H, W, Co, use_1x1conv, stride) in configs:
    kx, kp, key = jax.random.split(key, 3)
    x = jax.random.normal(kx, (N, Ci, H, W), jnp.float32)
    params = make_params(kp, Ci, Co, use_1x1conv)

    out = residual_forward(x, params, use_1x1conv=use_1x1conv, stride=stride)
    out = jax.block_until_ready(out)

    ref = reference(x, params, use_1x1conv=use_1x1conv, stride=stride)
    # bf16 MXU operands (f32 accumulation) -> compare at bf16-level tolerance.
    np.testing.assert_allclose(np.asarray(out), np.asarray(ref),
                               rtol=2e-2, atol=2e-2)
  print("KERNEL_OK")
</pallas_src>

<mosaic_0001>
module attributes {stable_mosaic.version = 11 : i64} {
  func.func @_residual_proj_kernel(%arg0: memref<2x16x16x4xf32, #tpu.memory_space<vmem>>, %arg1: memref<9x4x8xbf16, #tpu.memory_space<vmem>>, %arg2: memref<1x8xf32, #tpu.memory_space<vmem>>, %arg3: memref<1x8xf32, #tpu.memory_space<vmem>>, %arg4: memref<9x8x8xbf16, #tpu.memory_space<vmem>>, %arg5: memref<1x8xf32, #tpu.memory_space<vmem>>, %arg6: memref<1x8xf32, #tpu.memory_space<vmem>>, %arg7: memref<4x8xbf16, #tpu.memory_space<vmem>>, %arg8: memref<1x8xf32, #tpu.memory_space<vmem>>, %arg9: memref<2x8x8x8xf32, #tpu.memory_space<vmem>>, %arg10: memref<2x18x18x4xf32, #tpu.memory_space<vmem>>, %arg11: memref<2x10x10x8xf32, #tpu.memory_space<vmem>>) attributes {dimension_semantics = [], scalar_prefetch = 0 : i64, scratch_operands = 2 : i64, tpu.core_type = #tpu.core_type<tc>} {
    %cst = arith.constant 0.000000e+00 : f32
    %0 = vector.broadcast %cst : f32 to vector<2x1x18x4xf32>
    %c0 = arith.constant 0 : index
    %c0_0 = arith.constant 0 : index
    %c0_1 = arith.constant 0 : index
    %c0_2 = arith.constant 0 : index
    %1 = vector.load %arg10[%c0, %c0_0, %c0_1, %c0_2] : memref<2x18x18x4xf32, #tpu.memory_space<vmem>>, vector<2x1x18x4xf32>
    tpu.vector_store %arg10[%c0, %c0_0, %c0_1, %c0_2], %0 {strides = array<i32>} : memref<2x18x18x4xf32, #tpu.memory_space<vmem>>, vector<2x1x18x4xf32>,
    %c0_3 = arith.constant 0 : index
    %c17 = arith.constant 17 : index
    %c0_4 = arith.constant 0 : index
    %c0_5 = arith.constant 0 : index
    %2 = vector.load %arg10[%c0_3, %c17, %c0_4, %c0_5] : memref<2x18x18x4xf32, #tpu.memory_space<vmem>>, vector<2x1x18x4xf32>
    tpu.vector_store %arg10[%c0_3, %c17, %c0_4, %c0_5], %0 {strides = array<i32>} : memref<2x18x18x4xf32, #tpu.memory_space<vmem>>, vector<2x1x18x4xf32>,
    %cst_6 = arith.constant 0.000000e+00 : f32
    %3 = vector.broadcast %cst_6 : f32 to vector<2x16x1x4xf32>
    %c0_7 = arith.constant 0 : index
    %c1 = arith.constant 1 : index
    %c0_8 = arith.constant 0 : index
    %c0_9 = arith.constant 0 : index
    %4 = vector.load %arg10[%c0_7, %c1, %c0_8, %c0_9] : memref<2x18x18x4xf32, #tpu.memory_space<vmem>>, vector<2x16x1x4xf32>
    tpu.vector_store %arg10[%c0_7, %c1, %c0_8, %c0_9], %3 {strides = array<i32>} : memref<2x18x18x4xf32, #tpu.memory_space<vmem>>, vector<2x16x1x4xf32>,
    %c0_10 = arith.constant 0 : index
    %c1_11 = arith.constant 1 : index
    %c17_12 = arith.constant 17 : index
    %c0_13 = arith.constant 0 : index
    %5 = vector.load %arg10[%c0_10, %c1_11, %c17_12, %c0_13] : memref<2x18x18x4xf32, #tpu.memory_space<vmem>>, vector<2x16x1x4xf32>
    tpu.vector_store %arg10[%c0_10, %c1_11, %c17_12, %c0_13], %3 {strides = array<i32>} : memref<2x18x18x4xf32, #tpu.memory_space<vmem>>, vector<2x16x1x4xf32>,
    %c0_14 = arith.constant 0 : index
    %c0_15 = arith.constant 0 : index
    %c0_16 = arith.constant 0 : index
    %c0_17 = arith.constant 0 : index
    %6 = vector.load %arg0[%c0_14, %c0_15, %c0_16, %c0_17] : memref<2x16x16x4xf32, #tpu.memory_space<vmem>>, vector<2x16x16x4xf32>
    %c0_18 = arith.constant 0 : index
    %c1_19 = arith.constant 1 : index
    %c1_20 = arith.constant 1 : index
    %c0_21 = arith.constant 0 : index
    %7 = vector.load %arg10[%c0_18, %c1_19, %c1_20, %c0_21] : memref<2x18x18x4xf32, #tpu.memory_space<vmem>>, vector<2x16x16x4xf32>
    tpu.vector_store %arg10[%c0_18, %c1_19, %c1_20, %c0_21], %6 {strides = array<i32>} : memref<2x18x18x4xf32, #tpu.memory_space<vmem>>, vector<2x16x16x4xf32>,
    %c0_22 = arith.constant 0 : index
    %c0_23 = arith.constant 0 : index
    %c0_24 = arith.constant 0 : index
    %c0_25 = arith.constant 0 : index
    %8 = tpu.strided_load %arg10[%c0_22, %c0_23, %c0_24, %c0_25] {strides = array<i32: 1, 2, 2, 1>} : memref<2x18x18x4xf32, #tpu.memory_space<vmem>>, vector<2x8x8x4xf32>
    %9 = vector.shape_cast %8 : vector<2x8x8x4xf32> to vector<128x4xf32>
    %10 = arith.truncf %9 : vector<128x4xf32> to vector<128x4xbf16>
    %c0_26 = arith.constant 0 : index
    %c0_27 = arith.constant 0 : index
    %c0_28 = arith.constant 0 : index
    %11 = vector.load %arg1[%c0_26, %c0_27, %c0_28] : memref<9x4x8xbf16, #tpu.memory_space<vmem>>, vector<1x4x8xbf16>
    %12 = vector.shape_cast %11 : vector<1x4x8xbf16> to vector<4x8xbf16>
    %cst_29 = arith.constant dense<0.000000e+00> : vector<128x8xf32>
    %13 = tpu.matmul %10, %12, %cst_29 {dimension_numbers = #tpu.dot_dimension_numbers<[1], [0], [0], [1], [0, 0, 1, 1], [], []>} : vector<128x4xbf16>, vector<4x8xbf16>, vector<128x8xf32> -> vector<128x8xf32>
    %c0_30 = arith.constant 0 : index
    %c0_31 = arith.constant 0 : index
    %c1_32 = arith.constant 1 : index
    %c0_33 = arith.constant 0 : index
    %14 = tpu.strided_load %arg10[%c0_30, %c0_31, %c1_32, %c0_33] {strides = array<i32: 1, 2, 2, 1>} : memref<2x18x18x4xf32, #tpu.memory_space<vmem>>, vector<2x8x8x4xf32>
    %15 = vector.shape_cast %14 : vector<2x8x8x4xf32> to vector<128x4xf32>
    %16 = arith.truncf %15 : vector<128x4xf32> to vector<128x4xbf16>
    %c1_34 = arith.constant 1 : index
    %c0_35 = arith.constant 0 : index
    %c0_36 = arith.constant 0 : index
    %17 = vector.load %arg1[%c1_34, %c0_35, %c0_36] : memref<9x4x8xbf16, #tpu.memory_space<vmem>>, vector<1x4x8xbf16>
    %18 = vector.shape_cast %17 : vector<1x4x8xbf16> to vector<4x8xbf16>
    %cst_37 = arith.constant dense<0.000000e+00> : vector<128x8xf32>
    %19 = tpu.matmul %16, %18, %cst_37 {dimension_numbers = #tpu.dot_dimension_numbers<[1], [0], [0], [1], [0, 0, 1, 1], [], []>} : vector<128x4xbf16>, vector<4x8xbf16>, vector<128x8xf32> -> vector<128x8xf32>
    %20 = arith.addf %13, %19 : vector<128x8xf32>
    %c0_38 = arith.constant 0 : index
    %c0_39 = arith.constant 0 : index
    %c2 = arith.constant 2 : index
    %c0_40 = arith.constant 0 : index
    %21 = tpu.strided_load %arg10[%c0_38, %c0_39, %c2, %c0_40] {strides = array<i32: 1, 2, 2, 1>} : memref<2x18x18x4xf32, #tpu.memory_space<vmem>>, vector<2x8x8x4xf32>
    %22 = vector.shape_cast %21 : vector<2x8x8x4xf32> to vector<128x4xf32>
    %23 = arith.truncf %22 : vector<128x4xf32> to vector<128x4xbf16>
    %c2_41 = arith.constant 2 : index
    %c0_42 = arith.constant 0 : index
    %c0_43 = arith.constant 0 : index
    %24 = vector.load %arg1[%c2_41, %c0_42, %c0_43] : memref<9x4x8xbf16, #tpu.memory_space<vmem>>, vector<1x4x8xbf16>
    %25 = vector.shape_cast %24 : vector<1x4x8xbf16> to vector<4x8xbf16>
    %cst_44 = arith.constant dense<0.000000e+00> : vector<128x8xf32>
    %26 = tpu.matmul %23, %25, %cst_44 {dimension_numbers = #tpu.dot_dimension_numbers<[1], [0], [0], [1], [0, 0, 1, 1], [], []>} : vector<128x4xbf16>, vector<4x8xbf16>, vector<128x8xf32> -> vector<128x8xf32>
    %27 = arith.addf %20, %26 : vector<128x8xf32>
    %c0_45 = arith.constant 0 : index
    %c1_46 = arith.constant 1 : index
    %c0_47 = arith.constant 0 : index
    %c0_48 = arith.constant 0 : index
    %28 = tpu.strided_load %arg10[%c0_45, %c1_46, %c0_47, %c0_48] {strides = array<i32: 1, 2, 2, 1>} : memref<2x18x18x4xf32, #tpu.memory_space<vmem>>, vector<2x8x8x4xf32>
    %29 = vector.shape_cast %28 : vector<2x8x8x4xf32> to vector<128x4xf32>
    %30 = arith.truncf %29 : vector<128x4xf32> to vector<128x4xbf16>
    %c3 = arith.constant 3 : index
    %c0_49 = arith.constant 0 : index
    %c0_50 = arith.constant 0 : index
    %31 = vector.load %arg1[%c3, %c0_49, %c0_50] : memref<9x4x8xbf16, #tpu.memory_space<vmem>>, vector<1x4x8xbf16>
    %32 = vector.shape_cast %31 : vector<1x4x8xbf16> to vector<4x8xbf16>
    %cst_51 = arith.constant dense<0.000000e+00> : vector<128x8xf32>
    %33 = tpu.matmul %30, %32, %cst_51 {dimension_numbers = #tpu.dot_dimension_numbers<[1], [0], [0], [1], [0, 0, 1, 1], [], []>} : vector<128x4xbf16>, vector<4x8xbf16>, vector<128x8xf32> -> vector<128x8xf32>
    %34 = arith.addf %27, %33 : vector<128x8xf32>
    %c0_52 = arith.constant 0 : index
    %c1_53 = arith.constant 1 : index
    %c1_54 = arith.constant 1 : index
    %c0_55 = arith.constant 0 : index
    %35 = tpu.strided_load %arg10[%c0_52, %c1_53, %c1_54, %c0_55] {strides = array<i32: 1, 2, 2, 1>} : memref<2x18x18x4xf32, #tpu.memory_space<vmem>>, vector<2x8x8x4xf32>
    %36 = vector.shape_cast %35 : vector<2x8x8x4xf32> to vector<128x4xf32>
    %37 = arith.truncf %36 : vector<128x4xf32> to vector<128x4xbf16>
    %c4 = arith.constant 4 : index
    %c0_56 = arith.constant 0 : index
    %c0_57 = arith.constant 0 : index
    %38 = vector.load %arg1[%c4, %c0_56, %c0_57] : memref<9x4x8xbf16, #tpu.memory_space<vmem>>, vector<1x4x8xbf16>
    %39 = vector.shape_cast %38 : vector<1x4x8xbf16> to vector<4x8xbf16>
    %cst_58 = arith.constant dense<0.000000e+00> : vector<128x8xf32>
    %40 = tpu.matmul %37, %39, %cst_58 {dimension_numbers = #tpu.dot_dimension_numbers<[1], [0], [0], [1], [0, 0, 1, 1], [], []>} : vector<128x4xbf16>, vector<4x8xbf16>, vector<128x8xf32> -> vector<128x8xf32>
    %41 = arith.addf %34, %40 : vector<128x8xf32>
    %c0_59 = arith.constant 0 : index
    %c1_60 = arith.constant 1 : index
    %c2_61 = arith.constant 2 : index
    %c0_62 = arith.constant 0 : index
    %42 = tpu.strided_load %arg10[%c0_59, %c1_60, %c2_61, %c0_62] {strides = array<i32: 1, 2, 2, 1>} : memref<2x18x18x4xf32, #tpu.memory_space<vmem>>, vector<2x8x8x4xf32>
    %43 = vector.shape_cast %42 : vector<2x8x8x4xf32> to vector<128x4xf32>
    %44 = arith.truncf %43 : vector<128x4xf32> to vector<128x4xbf16>
    %c5 = arith.constant 5 : index
    %c0_63 = arith.constant 0 : index
    %c0_64 = arith.constant 0 : index
    %45 = vector.load %arg1[%c5, %c0_63, %c0_64] : memref<9x4x8xbf16, #tpu.memory_space<vmem>>, vector<1x4x8xbf16>
    %46 = vector.shape_cast %45 : vector<1x4x8xbf16> to vector<4x8xbf16>
    %cst_65 = arith.constant dense<0.000000e+00> : vector<128x8xf32>
    %47 = tpu.matmul %44, %46, %cst_65 {dimension_numbers = #tpu.dot_dimension_numbers<[1], [0], [0], [1], [0, 0, 1, 1], [], []>} : vector<128x4xbf16>, vector<4x8xbf16>, vector<128x8xf32> -> vector<128x8xf32>
    %48 = arith.addf %41, %47 : vector<128x8xf32>
    %c0_66 = arith.constant 0 : index
    %c2_67 = arith.constant 2 : index
    %c0_68 = arith.constant 0 : index
    %c0_69 = arith.constant 0 : index
    %49 = tpu.strided_load %arg10[%c0_66, %c2_67, %c0_68, %c0_69] {strides = array<i32: 1, 2, 2, 1>} : memref<2x18x18x4xf32, #tpu.memory_space<vmem>>, vector<2x8x8x4xf32>
    %50 = vector.shape_cast %49 : vector<2x8x8x4xf32> to vector<128x4xf32>
    %51 = arith.truncf %50 : vector<128x4xf32> to vector<128x4xbf16>
    %c6 = arith.constant 6 : index
    %c0_70 = arith.constant 0 : index
    %c0_71 = arith.constant 0 : index
    %52 = vector.load %arg1[%c6, %c0_70, %c0_71] : memref<9x4x8xbf16, #tpu.memory_space<vmem>>, vector<1x4x8xbf16>
    %53 = vector.shape_cast %52 : vector<1x4x8xbf16> to vector<4x8xbf16>
    %cst_72 = arith.constant dense<0.000000e+00> : vector<128x8xf32>
    %54 = tpu.matmul %51, %53, %cst_72 {dimension_numbers = #tpu.dot_dimension_numbers<[1], [0], [0], [1], [0, 0, 1, 1], [], []>} : vector<128x4xbf16>, vector<4x8xbf16>, vector<128x8xf32> -> vector<128x8xf32>
    %55 = arith.addf %48, %54 : vector<128x8xf32>
    %c0_73 = arith.constant 0 : index
    %c2_74 = arith.constant 2 : index
    %c1_75 = arith.constant 1 : index
    %c0_76 = arith.constant 0 : index
    %56 = tpu.strided_load %arg10[%c0_73, %c2_74, %c1_75, %c0_76] {strides = array<i32: 1, 2, 2, 1>} : memref<2x18x18x4xf32, #tpu.memory_space<vmem>>, vector<2x8x8x4xf32>
    %57 = vector.shape_cast %56 : vector<2x8x8x4xf32> to vector<128x4xf32>
    %58 = arith.truncf %57 : vector<128x4xf32> to vector<128x4xbf16>
    %c7 = arith.constant 7 : index
    %c0_77 = arith.constant 0 : index
    %c0_78 = arith.constant 0 : index
    %59 = vector.load %arg1[%c7, %c0_77, %c0_78] : memref<9x4x8xbf16, #tpu.memory_space<vmem>>, vector<1x4x8xbf16>
    %60 = vector.shape_cast %59 : vector<1x4x8xbf16> to vector<4x8xbf16>
    %cst_79 = arith.constant dense<0.000000e+00> : vector<128x8xf32>
    %61 = tpu.matmul %58, %60, %cst_79 {dimension_numbers = #tpu.dot_dimension_numbers<[1], [0], [0], [1], [0, 0, 1, 1], [], []>} : vector<128x4xbf16>, vector<4x8xbf16>, vector<128x8xf32> -> vector<128x8xf32>
    %62 = arith.addf %55, %61 : vector<128x8xf32>
    %c0_80 = arith.constant 0 : index
    %c2_81 = arith.constant 2 : index
    %c2_82 = arith.constant 2 : index
    %c0_83 = arith.constant 0 : index
    %63 = tpu.strided_load %arg10[%c0_80, %c2_81, %c2_82, %c0_83] {strides = array<i32: 1, 2, 2, 1>} : memref<2x18x18x4xf32, #tpu.memory_space<vmem>>, vector<2x8x8x4xf32>
    %64 = vector.shape_cast %63 : vector<2x8x8x4xf32> to vector<128x4xf32>
    %65 = arith.truncf %64 : vector<128x4xf32> to vector<128x4xbf16>
    %c8 = arith.constant 8 : index
    %c0_84 = arith.constant 0 : index
    %c0_85 = arith.constant 0 : index
    %66 = vector.load %arg1[%c8, %c0_84, %c0_85] : memref<9x4x8xbf16, #tpu.memory_space<vmem>>, vector<1x4x8xbf16>
    %67 = vector.shape_cast %66 : vector<1x4x8xbf16> to vector<4x8xbf16>
    %cst_86 = arith.constant dense<0.000000e+00> : vector<128x8xf32>
    %68 = tpu.matmul %65, %67, %cst_86 {dimension_numbers = #tpu.dot_dimension_numbers<[1], [0], [0], [1], [0, 0, 1, 1], [], []>} : vector<128x4xbf16>, vector<4x8xbf16>, vector<128x8xf32> -> vector<128x8xf32>
    %69 = arith.addf %62, %68 : vector<128x8xf32>
    %c0_87 = arith.constant 0 : index
    %c0_88 = arith.constant 0 : index
    %70 = vector.load %arg2[%c0_87, %c0_88] : memref<1x8xf32, #tpu.memory_space<vmem>>, vector<1x8xf32>
    %c0_89 = arith.constant 0 : index
    %c0_90 = arith.constant 0 : index
    %71 = vector.load %arg3[%c0_89, %c0_90] : memref<1x8xf32, #tpu.memory_space<vmem>>, vector<1x8xf32>
    %cst_91 = arith.constant dense<0.000000e+00> : vector<8xf32>
    %72 = vector.multi_reduction <add>, %69, %cst_91 [0] : vector<128x8xf32> to vector<8xf32>
    %73 = vector.shape_cast %72 : vector<8xf32> to vector<1x8xf32>
    %74 = arith.mulf %69, %69 : vector<128x8xf32>
    %cst_92 = arith.constant dense<0.000000e+00> : vector<8xf32>
    %75 = vector.multi_reduction <add>, %74, %cst_92 [0] : vector<128x8xf32> to vector<8xf32>
    %76 = vector.shape_cast %75 : vector<8xf32> to vector<1x8xf32>
    %cst_93 = arith.constant 7.812500e-03 : f32
    %77 = vector.broadcast %cst_93 : f32 to vector<1x8xf32>
    %78 = arith.mulf %73, %77 : vector<1x8xf32>
    %cst_94 = arith.constant 7.812500e-03 : f32
    %79 = vector.broadcast %cst_94 : f32 to vector<1x8xf32>
    %80 = arith.mulf %76, %79 : vector<1x8xf32>
    %81 = arith.mulf %78, %78 : vector<1x8xf32>
    %82 = arith.subf %80, %81 : vector<1x8xf32>
    %cst_95 = arith.constant 0.000000e+00 : f32
    %83 = vector.broadcast %cst_95 : f32 to vector<1x8xf32>
    %84 = arith.maximumf %82, %83 : vector<1x8xf32>
    %85 = vector.broadcast %78 : vector<1x8xf32> to vector<128x8xf32>
    %86 = arith.subf %69, %85 : vector<128x8xf32>
    %cst_96 = arith.constant 9.99999974E-6 : f32
    %87 = vector.broadcast %cst_96 : f32 to vector<1x8xf32>
    %88 = arith.addf %84, %87 : vector<1x8xf32>
    %89 = math.rsqrt %88 : vector<1x8xf32>
    %90 = vector.broadcast %89 : vector<1x8xf32> to vector<128x8xf32>
    %91 = arith.mulf %86, %90 : vector<128x8xf32>
    %92 = vector.broadcast %70 : vector<1x8xf32> to vector<128x8xf32>
    %93 = arith.mulf %91, %92 : vector<128x8xf32>
    %94 = vector.broadcast %71 : vector<1x8xf32> to vector<128x8xf32>
    %95 = arith.addf %93, %94 : vector<128x8xf32>
    %cst_97 = arith.constant 0.000000e+00 : f32
    %96 = vector.broadcast %cst_97 : f32 to vector<128x8xf32>
    %97 = arith.maximumf %95, %96 : vector<128x8xf32>
    %cst_98 = arith.constant 0.000000e+00 : f32
    %98 = vector.broadcast %cst_98 : f32 to vector<2x1x10x8xf32>
    %c0_99 = arith.constant 0 : index
    %c0_100 = arith.constant 0 : index
    %c0_101 = arith.constant 0 : index
    %c0_102 = arith.constant 0 : index
    %99 = vector.load %arg11[%c0_99, %c0_100, %c0_101, %c0_102] : memref<2x10x10x8xf32, #tpu.memory_space<vmem>>, vector<2x1x10x8xf32>
    tpu.vector_store %arg11[%c0_99, %c0_100, %c0_101, %c0_102], %98 {strides = array<i32>} : memref<2x10x10x8xf32, #tpu.memory_space<vmem>>, vector<2x1x10x8xf32>,
    %c0_103 = arith.constant 0 : index
    %c9 = arith.constant 9 : index
    %c0_104 = arith.constant 0 : index
    %c0_105 = arith.constant 0 : index
    %100 = vector.load %arg11[%c0_103, %c9, %c0_104, %c0_105] : memref<2x10x10x8xf32, #tpu.memory_space<vmem>>, vector<2x1x10x8xf32>
    tpu.vector_store %arg11[%c0_103, %c9, %c0_104, %c0_105], %98 {strides = array<i32>} : memref<2x10x10x8xf32, #tpu.memory_space<vmem>>, vector<2x1x10x8xf32>,
    %cst_106 = arith.constant 0.000000e+00 : f32
    %101 = vector.broadcast %cst_106 : f32 to vector<2x8x1x8xf32>
    %c0_107 = arith.constant 0 : index
    %c1_108 = arith.constant 1 : index
    %c0_109 = arith.constant 0 : index
    %c0_110 = arith.constant 0 : index
    %102 = vector.load %arg11[%c0_107, %c1_108, %c0_109, %c0_110] : memref<2x10x10x8xf32, #tpu.memory_space<vmem>>, vector<2x8x1x8xf32>
    tpu.vector_store %arg11[%c0_107, %c1_108, %c0_109, %c0_110], %101 {strides = array<i32>} : memref<2x10x10x8xf32, #tpu.memory_space<vmem>>, vector<2x8x1x8xf32>,
    %c0_111 = arith.constant 0 : index
    %c1_112 = arith.constant 1 : index
    %c9_113 = arith.constant 9 : index
    %c0_114 = arith.constant 0 : index
    %103 = vector.load %arg11[%c0_111, %c1_112, %c9_113, %c0_114] : memref<2x10x10x8xf32, #tpu.memory_space<vmem>>, vector<2x8x1x8xf32>
    tpu.vector_store %arg11[%c0_111, %c1_112, %c9_113, %c0_114], %101 {strides = array<i32>} : memref<2x10x10x8xf32, #tpu.memory_space<vmem>>, vector<2x8x1x8xf32>,
    %104 = vector.shape_cast %97 : vector<128x8xf32> to vector<2x8x8x8xf32>
    %c0_115 = arith.constant 0 : index
    %c1_116 = arith.constant 1 : index
    %c1_117 = arith.constant 1 : index
    %c0_118 = arith.constant 0 : index
    %105 = vector.load %arg11[%c0_115, %c1_116, %c1_117, %c0_118] : memref<2x10x10x8xf32, #tpu.memory_space<vmem>>, vector<2x8x8x8xf32>
    tpu.vector_store %arg11[%c0_115, %c1_116, %c1_117, %c0_118], %104 {strides = array<i32>} : memref<2x10x10x8xf32, #tpu.memory_space<vmem>>, vector<2x8x8x8xf32>,
    %c0_119 = arith.constant 0 : index
    %c0_120 = arith.constant 0 : index
    %c0_121 = arith.constant 0 : index
    %c0_122 = arith.constant 0 : index
    %106 = vector.load %arg11[%c0_119, %c0_120, %c0_121, %c0_122] : memref<2x10x10x8xf32, #tpu.memory_space<vmem>>, vector<2x8x8x8xf32>
    %107 = vector.shape_cast %106 : vector<2x8x8x8xf32> to vector<128x8xf32>
    %108 = arith.truncf %107 : vector<128x8xf32> to vector<128x8xbf16>
    %c0_123 = arith.constant 0 : index
    %c0_124 = arith.constant 0 : index
    %c0_125 = arith.constant 0 : index
    %109 = vector.load %arg4[%c0_123, %c0_124, %c0_125] : memref<9x8x8xbf16, #tpu.memory_space<vmem>>, vector<1x8x8xbf16>
    %110 = vector.shape_cast %109 : vector<1x8x8xbf16> to vector<8x8xbf16>
    %cst_126 = arith.constant dense<0.000000e+00> : vector<128x8xf32>
    %111 = tpu.matmul %108, %110, %cst_126 {dimension_numbers = #tpu.dot_dimension_numbers<[1], [0], [0], [1], [0, 0, 1, 1], [], []>} : vector<128x8xbf16>, vector<8x8xbf16>, vector<128x8xf32> -> vector<128x8xf32>
    %c0_127 = arith.constant 0 : index
    %c0_128 = arith.constant 0 : index
    %c1_129 = arith.constant 1 : index
    %c0_130 = arith.constant 0 : index
    %112 = vector.load %arg11[%c0_127, %c0_128, %c1_129, %c0_130] : memref<2x10x10x8xf32, #tpu.memory_space<vmem>>, vector<2x8x8x8xf32>
    %113 = vector.shape_cast %112 : vector<2x8x8x8xf32> to vector<128x8xf32>
    %114 = arith.truncf %113 : vector<128x8xf32> to vector<128x8xbf16>
    %c1_131 = arith.constant 1 : index
    %c0_132 = arith.constant 0 : index
    %c0_133 = arith.constant 0 : index
    %115 = vector.load %arg4[%c1_131, %c0_132, %c0_133] : memref<9x8x8xbf16, #tpu.memory_space<vmem>>, vector<1x8x8xbf16>
    %116 = vector.shape_cast %115 : vector<1x8x8xbf16> to vector<8x8xbf16>
    %cst_134 = arith.constant dense<0.000000e+00> : vector<128x8xf32>
    %117 = tpu.matmul %114, %116, %cst_134 {dimension_numbers = #tpu.dot_dimension_numbers<[1], [0], [0], [1], [0, 0, 1, 1], [], []>} : vector<128x8xbf16>, vector<8x8xbf16>, vector<128x8xf32> -> vector<128x8xf32>
    %118 = arith.addf %111, %117 : vector<128x8xf32>
    %c0_135 = arith.constant 0 : index
    %c0_136 = arith.constant 0 : index
    %c2_137 = arith.constant 2 : index
    %c0_138 = arith.constant 0 : index
    %119 = vector.load %arg11[%c0_135, %c0_136, %c2_137, %c0_138] : memref<2x10x10x8xf32, #tpu.memory_space<vmem>>, vector<2x8x8x8xf32>
    %120 = vector.shape_cast %119 : vector<2x8x8x8xf32> to vector<128x8xf32>
    %121 = arith.truncf %120 : vector<128x8xf32> to vector<128x8xbf16>
    %c2_139 = arith.constant 2 : index
    %c0_140 = arith.constant 0 : index
    %c0_141 = arith.constant 0 : index
    %122 = vector.load %arg4[%c2_139, %c0_140, %c0_141] : memref<9x8x8xbf16, #tpu.memory_space<vmem>>, vector<1x8x8xbf16>
    %123 = vector.shape_cast %122 : vector<1x8x8xbf16> to vector<8x8xbf16>
    %cst_142 = arith.constant dense<0.000000e+00> : vector<128x8xf32>
    %124 = tpu.matmul %121, %123, %cst_142 {dimension_numbers = #tpu.dot_dimension_numbers<[1], [0], [0], [1], [0, 0, 1, 1], [], []>} : vector<128x8xbf16>, vector<8x8xbf16>, vector<128x8xf32> -> vector<128x8xf32>
    %125 = arith.addf %118, %124 : vector<128x8xf32>
    %c0_143 = arith.constant 0 : index
    %c1_144 = arith.constant 1 : index
    %c0_145 = arith.constant 0 : index
    %c0_146 = arith.constant 0 : index
    %126 = vector.load %arg11[%c0_143, %c1_144, %c0_145, %c0_146] : memref<2x10x10x8xf32, #tpu.memory_space<vmem>>, vector<2x8x8x8xf32>
    %127 = vector.shape_cast %126 : vector<2x8x8x8xf32> to vector<128x8xf32>
    %128 = arith.truncf %127 : vector<128x8xf32> to vector<128x8xbf16>
    %c3_147 = arith.constant 3 : index
    %c0_148 = arith.constant 0 : index
    %c0_149 = arith.constant 0 : index
    %129 = vector.load %arg4[%c3_147, %c0_148, %c0_149] : memref<9x8x8xbf16, #tpu.memory_space<vmem>>, vector<1x8x8xbf16>
    %130 = vector.shape_cast %129 : vector<1x8x8xbf16> to vector<8x8xbf16>
    %cst_150 = arith.constant dense<0.000000e+00> : vector<128x8xf32>
    %131 = tpu.matmul %128, %130, %cst_150 {dimension_numbers = #tpu.dot_dimension_numbers<[1], [0], [0], [1], [0, 0, 1, 1], [], []>} : vector<128x8xbf16>, vector<8x8xbf16>, vector<128x8xf32> -> vector<128x8xf32>
    %132 = arith.addf %125, %131 : vector<128x8xf32>
    %c0_151 = arith.constant 0 : index
    %c1_152 = arith.constant 1 : index
    %c1_153 = arith.constant 1 : index
    %c0_154 = arith.constant 0 : index
    %133 = vector.load %arg11[%c0_151, %c1_152, %c1_153, %c0_154] : memref<2x10x10x8xf32, #tpu.memory_space<vmem>>, vector<2x8x8x8xf32>
    %134 = vector.shape_cast %133 : vector<2x8x8x8xf32> to vector<128x8xf32>
    %135 = arith.truncf %134 : vector<128x8xf32> to vector<128x8xbf16>
    %c4_155 = arith.constant 4 : index
    %c0_156 = arith.constant 0 : index
    %c0_157 = arith.constant 0 : index
    %136 = vector.load %arg4[%c4_155, %c0_156, %c0_157] : memref<9x8x8xbf16, #tpu.memory_space<vmem>>, vector<1x8x8xbf16>
    %137 = vector.shape_cast %136 : vector<1x8x8xbf16> to vector<8x8xbf16>
    %cst_158 = arith.constant dense<0.000000e+00> : vector<128x8xf32>
    %138 = tpu.matmul %135, %137, %cst_158 {dimension_numbers = #tpu.dot_dimension_numbers<[1], [0], [0], [1], [0, 0, 1, 1], [], []>} : vector<128x8xbf16>, vector<8x8xbf16>, vector<128x8xf32> -> vector<128x8xf32>
    %139 = arith.addf %132, %138 : vector<128x8xf32>
    %c0_159 = arith.constant 0 : index
    %c1_160 = arith.constant 1 : index
    %c2_161 = arith.constant 2 : index
    %c0_162 = arith.constant 0 : index
    %140 = vector.load %arg11[%c0_159, %c1_160, %c2_161, %c0_162] : memref<2x10x10x8xf32, #tpu.memory_space<vmem>>, vector<2x8x8x8xf32>
    %141 = vector.shape_cast %140 : vector<2x8x8x8xf32> to vector<128x8xf32>
    %142 = arith.truncf %141 : vector<128x8xf32> to vector<128x8xbf16>
    %c5_163 = arith.constant 5 : index
    %c0_164 = arith.constant 0 : index
    %c0_165 = arith.constant 0 : index
    %143 = vector.load %arg4[%c5_163, %c0_164, %c0_165] : memref<9x8x8xbf16, #tpu.memory_space<vmem>>, vector<1x8x8xbf16>
    %144 = vector.shape_cast %143 : vector<1x8x8xbf16> to vector<8x8xbf16>
    %cst_166 = arith.constant dense<0.000000e+00> : vector<128x8xf32>
    %145 = tpu.matmul %142, %144, %cst_166 {dimension_numbers = #tpu.dot_dimension_numbers<[1], [0], [0], [1], [0, 0, 1, 1], [], []>} : vector<128x8xbf16>, vector<8x8xbf16>, vector<128x8xf32> -> vector<128x8xf32>
    %146 = arith.addf %139, %145 : vector<128x8xf32>
    %c0_167 = arith.constant 0 : index
    %c2_168 = arith.constant 2 : index
    %c0_169 = arith.constant 0 : index
    %c0_170 = arith.constant 0 : index
    %147 = vector.load %arg11[%c0_167, %c2_168, %c0_169, %c0_170] : memref<2x10x10x8xf32, #tpu.memory_space<vmem>>, vector<2x8x8x8xf32>
    %148 = vector.shape_cast %147 : vector<2x8x8x8xf32> to vector<128x8xf32>
    %149 = arith.truncf %148 : vector<128x8xf32> to vector<128x8xbf16>
    %c6_171 = arith.constant 6 : index
    %c0_172 = arith.constant 0 : index
    %c0_173 = arith.constant 0 : index
    %150 = vector.load %arg4[%c6_171, %c0_172, %c0_173] : memref<9x8x8xbf16, #tpu.memory_space<vmem>>, vector<1x8x8xbf16>
    %151 = vector.shape_cast %150 : vector<1x8x8xbf16> to vector<8x8xbf16>
    %cst_174 = arith.constant dense<0.000000e+00> : vector<128x8xf32>
    %152 = tpu.matmul %149, %151, %cst_174 {dimension_numbers = #tpu.dot_dimension_numbers<[1], [0], [0], [1], [0, 0, 1, 1], [], []>} : vector<128x8xbf16>, vector<8x8xbf16>, vector<128x8xf32> -> vector<128x8xf32>
    %153 = arith.addf %146, %152 : vector<128x8xf32>
    %c0_175 = arith.constant 0 : index
    %c2_176 = arith.constant 2 : index
    %c1_177 = arith.constant 1 : index
    %c0_178 = arith.constant 0 : index
    %154 = vector.load %arg11[%c0_175, %c2_176, %c1_177, %c0_178] : memref<2x10x10x8xf32, #tpu.memory_space<vmem>>, vector<2x8x8x8xf32>
    %155 = vector.shape_cast %154 : vector<2x8x8x8xf32> to vector<128x8xf32>
    %156 = arith.truncf %155 : vector<128x8xf32> to vector<128x8xbf16>
    %c7_179 = arith.constant 7 : index
    %c0_180 = arith.constant 0 : index
    %c0_181 = arith.constant 0 : index
    %157 = vector.load %arg4[%c7_179, %c0_180, %c0_181] : memref<9x8x8xbf16, #tpu.memory_space<vmem>>, vector<1x8x8xbf16>
    %158 = vector.shape_cast %157 : vector<1x8x8xbf16> to vector<8x8xbf16>
    %cst_182 = arith.constant dense<0.000000e+00> : vector<128x8xf32>
    %159 = tpu.matmul %156, %158, %cst_182 {dimension_numbers = #tpu.dot_dimension_numbers<[1], [0], [0], [1], [0, 0, 1, 1], [], []>} : vector<128x8xbf16>, vector<8x8xbf16>, vector<128x8xf32> -> vector<128x8xf32>
    %160 = arith.addf %153, %159 : vector<128x8xf32>
    %c0_183 = arith.constant 0 : index
    %c2_184 = arith.constant 2 : index
    %c2_185 = arith.constant 2 : index
    %c0_186 = arith.constant 0 : index
    %161 = vector.load %arg11[%c0_183, %c2_184, %c2_185, %c0_186] : memref<2x10x10x8xf32, #tpu.memory_space<vmem>>, vector<2x8x8x8xf32>
    %162 = vector.shape_cast %161 : vector<2x8x8x8xf32> to vector<128x8xf32>
    %163 = arith.truncf %162 : vector<128x8xf32> to vector<128x8xbf16>
    %c8_187 = arith.constant 8 : index
    %c0_188 = arith.constant 0 : index
    %c0_189 = arith.constant 0 : index
    %164 = vector.load %arg4[%c8_187, %c0_188, %c0_189] : memref<9x8x8xbf16, #tpu.memory_space<vmem>>, vector<1x8x8xbf16>
    %165 = vector.shape_cast %164 : vector<1x8x8xbf16> to vector<8x8xbf16>
    %cst_190 = arith.constant dense<0.000000e+00> : vector<128x8xf32>
    %166 = tpu.matmul %163, %165, %cst_190 {dimension_numbers = #tpu.dot_dimension_numbers<[1], [0], [0], [1], [0, 0, 1, 1], [], []>} : vector<128x8xbf16>, vector<8x8xbf16>, vector<128x8xf32> -> vector<128x8xf32>
    %167 = arith.addf %160, %166 : vector<128x8xf32>
    %c0_191 = arith.constant 0 : index
    %c0_192 = arith.constant 0 : index
    %168 = vector.load %arg5[%c0_191, %c0_192] : memref<1x8xf32, #tpu.memory_space<vmem>>, vector<1x8xf32>
    %c0_193 = arith.constant 0 : index
    %c0_194 = arith.constant 0 : index
    %169 = vector.load %arg6[%c0_193, %c0_194] : memref<1x8xf32, #tpu.memory_space<vmem>>, vector<1x8xf32>
    %cst_195 = arith.constant dense<0.000000e+00> : vector<8xf32>
    %170 = vector.multi_reduction <add>, %167, %cst_195 [0] : vector<128x8xf32> to vector<8xf32>
    %171 = vector.shape_cast %170 : vector<8xf32> to vector<1x8xf32>
    %172 = arith.mulf %167, %167 : vector<128x8xf32>
    %cst_196 = arith.constant dense<0.000000e+00> : vector<8xf32>
    %173 = vector.multi_reduction <add>, %172, %cst_196 [0] : vector<128x8xf32> to vector<8xf32>
    %174 = vector.shape_cast %173 : vector<8xf32> to vector<1x8xf32>
    %cst_197 = arith.constant 7.812500e-03 : f32
    %175 = vector.broadcast %cst_197 : f32 to vector<1x8xf32>
    %176 = arith.mulf %171, %175 : vector<1x8xf32>
    %cst_198 = arith.constant 7.812500e-03 : f32
    %177 = vector.broadcast %cst_198 : f32 to vector<1x8xf32>
    %178 = arith.mulf %174, %177 : vector<1x8xf32>
    %179 = arith.mulf %176, %176 : vector<1x8xf32>
    %180 = arith.subf %178, %179 : vector<1x8xf32>
    %cst_199 = arith.constant 0.000000e+00 : f32
    %181 = vector.broadcast %cst_199 : f32 to vector<1x8xf32>
    %182 = arith.maximumf %180, %181 : vector<1x8xf32>
    %183 = vector.broadcast %176 : vector<1x8xf32> to vector<128x8xf32>
    %184 = arith.subf %167, %183 : vector<128x8xf32>
    %cst_200 = arith.constant 9.99999974E-6 : f32
    %185 = vector.broadcast %cst_200 : f32 to vector<1x8xf32>
    %186 = arith.addf %182, %185 : vector<1x8xf32>
    %187 = math.rsqrt %186 : vector<1x8xf32>
    %188 = vector.broadcast %187 : vector<1x8xf32> to vector<128x8xf32>
    %189 = arith.mulf %184, %188 : vector<128x8xf32>
    %190 = vector.broadcast %168 : vector<1x8xf32> to vector<128x8xf32>
    %191 = arith.mulf %189, %190 : vector<128x8xf32>
    %192 = vector.broadcast %169 : vector<1x8xf32> to vector<128x8xf32>
    %193 = arith.addf %191, %192 : vector<128x8xf32>
    %c0_201 = arith.constant 0 : index
    %c0_202 = arith.constant 0 : index
    %c0_203 = arith.constant 0 : index
    %c0_204 = arith.constant 0 : index
    %194 = tpu.strided_load %arg0[%c0_201, %c0_202, %c0_203, %c0_204] {strides = array<i32: 1, 2, 2, 1>} : memref<2x16x16x4xf32, #tpu.memory_space<vmem>>, vector<2x8x8x4xf32>
    %195 = vector.shape_cast %194 : vector<2x8x8x4xf32> to vector<128x4xf32>
    %196 = arith.truncf %195 : vector<128x4xf32> to vector<128x4xbf16>
    %c0_205 = arith.constant 0 : index
    %c0_206 = arith.constant 0 : index
    %197 = vector.load %arg7[%c0_205, %c0_206] : memref<4x8xbf16, #tpu.memory_space<vmem>>, vector<4x8xbf16>
    %cst_207 = arith.constant dense<0.000000e+00> : vector<128x8xf32>
    %198 = tpu.matmul %196, %197, %cst_207 {dimension_numbers = #tpu.dot_dimension_numbers<[1], [0], [0], [1], [0, 0, 1, 1], [], []>} : vector<128x4xbf16>, vector<4x8xbf16>, vector<128x8xf32> -> vector<128x8xf32>
    %c0_208 = arith.constant 0 : index
    %c0_209 = arith.constant 0 : index
    %199 = vector.load %arg8[%c0_208, %c0_209] : memref<1x8xf32, #tpu.memory_space<vmem>>, vector<1x8xf32>
    %200 = vector.broadcast %199 : vector<1x8xf32> to vector<128x8xf32>
    %201 = arith.addf %198, %200 : vector<128x8xf32>
    %202 = arith.addf %193, %201 : vector<128x8xf32>
    %cst_210 = arith.constant 0.000000e+00 : f32
    %203 = vector.broadcast %cst_210 : f32 to vector<128x8xf32>
    %204 = arith.maximumf %202, %203 : vector<128x8xf32>
    %205 = vector.shape_cast %204 : vector<128x8xf32> to vector<2x8x8x8xf32>
    %c0_211 = arith.constant 0 : index
    %c0_212 = arith.constant 0 : index
    %c0_213 = arith.constant 0 : index
    %c0_214 = arith.constant 0 : index
    %206 = vector.load %arg9[%c0_211, %c0_212, %c0_213, %c0_214] : memref<2x8x8x8xf32, #tpu.memory_space<vmem>>, vector<2x8x8x8xf32>
    tpu.vector_store %arg9[%c0_211, %c0_212, %c0_213, %c0_214], %205 {strides = array<i32>} : memref<2x8x8x8xf32, #tpu.memory_space<vmem>>, vector<2x8x8x8xf32>,
    return
  }
}

</mosaic_0001>

<llo_original>
// kernel: tpu_custom_call.1
$region0: #{tpu_custom_call.1}
  #allocation0 [shape = 'u32[]', space=smem, size = 0x4, offset = 0x4, fixed_abs, tag = 'smem constant byte address 0x4 - core index']
  #allocation1 [shape = 'u32[144,128]{1,0:T(1,128)}', space=vmem, size = 0x12000, scoped, tag = 'internal scratch']
  #allocation2 [shape = 'f32[2,18,18,4]{3,2,1,0:T(8,128)}', space=vmem, size = 0x6c000, scoped, tag = 'scratch operand']
  #allocation3 [shape = 'f32[2,10,10,8]{3,2,1,0:T(8,128)}', space=vmem, size = 0x28000, scoped, tag = 'scratch operand']
  %s0 = inlined_call_operand.vmem [shape: f32[2,16,16,4], index: 0, kind: input, shape index: {}]
  %s1 = inlined_call_operand.vmem [shape: bf16[9,4,8], index: 1, kind: input, shape index: {}]
  %s2 = inlined_call_operand.vmem [shape: f32[1,8], index: 2, kind: input, shape index: {}]
  %s3 = inlined_call_operand.vmem [shape: f32[1,8], index: 3, kind: input, shape index: {}]
  %s4 = inlined_call_operand.vmem [shape: bf16[9,8,8], index: 4, kind: input, shape index: {}]
  %s5 = inlined_call_operand.vmem [shape: f32[1,8], index: 5, kind: input, shape index: {}]
  %s6 = inlined_call_operand.vmem [shape: f32[1,8], index: 6, kind: input, shape index: {}]
  %s7 = inlined_call_operand.vmem [shape: bf16[4,8], index: 7, kind: input, shape index: {}]
  %s8 = inlined_call_operand.vmem [shape: f32[1,8], index: 8, kind: input, shape index: {}]
  %s9 = inlined_call_operand.hbm [shape: f32[2,8,8,8], index: 9, kind: output, shape index: {}]
  %s10 = sld [smem:[#allocation0]]
  $region46: #{tpu_custom_call.1} parent=0
    _
  %s12 = ssub.s32 1, %s10
  %s13 = scalar_select 0, %s12, %s10
  $region1: #{tpu_custom_call.1} parent=0
    #allocation4 [shape = 'u8[65536]{0}', space=vmem, size = 0x10000, scoped, tag = 'output window, operand 0, single buffered']
    #allocation5 [shape = 's32[1]{0}', space=sflag, size = 0x4, scoped, tag = 'scoped memory for tpu_custom_call.1']
    %14 = vsyncpa [#allocation5], 0
    // Predicated region
    $region2: #{tpu_custom_call.1} parent=1 // pred_check
      _
    $region3: #{tpu_custom_call.1} parent=1 // pred_check_branch
      %16 = sbr.rel (0) target = $region5
    $region4: #{tpu_custom_call.1} parent=1 // pred_region
      _
    $region5: #{tpu_custom_call.1} parent=1 // pred_fallthru
      _
    // Predicated region
    $region6: #{tpu_custom_call.1} parent=1 // pred_check
      _
    $region7: #{tpu_custom_call.1} parent=1 // pred_check_branch
      %18 = sbr.rel (0) target = $region9
    $region8: #{tpu_custom_call.1} parent=1 // pred_region
      _
    $region9: #{tpu_custom_call.1} parent=1 // pred_fallthru
      _
    // Predicated region
    $region10: #{tpu_custom_call.1} parent=1 // pred_check
      _
    $region11: #{tpu_custom_call.1} parent=1 // pred_check_branch
      %20 = sbr.rel (0) target = $region13
    $region12: #{tpu_custom_call.1} parent=1 // pred_region
      _
    $region13: #{tpu_custom_call.1} parent=1 // pred_fallthru
      _
    // Predicated region
    $region14: #{tpu_custom_call.1} parent=1 // pred_check
      _
    $region15: #{tpu_custom_call.1} parent=1 // pred_check_branch
      %22 = sbr.rel (0) target = $region17
    $region16: #{tpu_custom_call.1} parent=1 // pred_region
      _
    $region17: #{tpu_custom_call.1} parent=1 // pred_fallthru
      _
    // Predicated region
    $region18: #{tpu_custom_call.1} parent=1 // pred_check
      _
    $region19: #{tpu_custom_call.1} parent=1 // pred_check_branch
      %24 = sbr.rel (0) target = $region21
    $region20: #{tpu_custom_call.1} parent=1 // pred_region
      _
    $region21: #{tpu_custom_call.1} parent=1 // pred_fallthru
      _
    // Predicated region
    $region22: #{tpu_custom_call.1} parent=1 // pred_check
      _
    $region23: #{tpu_custom_call.1} parent=1 // pred_check_branch
      %26 = sbr.rel (0) target = $region25
    $region24: #{tpu_custom_call.1} parent=1 // pred_region
      _
    $region25: #{tpu_custom_call.1} parent=1 // pred_fallthru
      _
    // Predicated region
    $region26: #{tpu_custom_call.1} parent=1 // pred_check
      _
    $region27: #{tpu_custom_call.1} parent=1 // pred_check_branch
      %28 = sbr.rel (0) target = $region29
    $region28: #{tpu_custom_call.1} parent=1 // pred_region
      _
    $region29: #{tpu_custom_call.1} parent=1 // pred_fallthru
      _
    // Predicated region
    $region30: #{tpu_custom_call.1} parent=1 // pred_check
      _
    $region31: #{tpu_custom_call.1} parent=1 // pred_check_branch
      %30 = sbr.rel (0) target = $region33
    $region32: #{tpu_custom_call.1} parent=1 // pred_region
      _
    $region33: #{tpu_custom_call.1} parent=1 // pred_fallthru
      _
    // Predicated region
    $region34: #{tpu_custom_call.1} parent=1 // pred_check
      _
    $region35: #{tpu_custom_call.1} parent=1 // pred_check_branch
      %32 = sbr.rel (0) target = $region37
    $region36: #{tpu_custom_call.1} parent=1 // pred_region
      _
    $region37: #{tpu_custom_call.1} parent=1 // pred_fallthru
      _
    %vm34 = vcmask 31744
    %35 = vst.msk [vmem:[#allocation2] sm:$0xff] %vm34, 0.0
    %36 = vst.msk [vmem:[#allocation2 + $0x8] sm:$0xff] %vm34, 0.0
    %vm37 = vcmask 25600
    %38 = vst.msk [vmem:[#allocation2 + $0x10] sm:$0x3] %vm37, 0.0
    %39 = vst.msk [vmem:[#allocation2 + $0x1b0] sm:$0xff] %vm34, 0.0
    %40 = vst.msk [vmem:[#allocation2 + $0x1b8] sm:$0xff] %vm34, 0.0
    %41 = vst.msk [vmem:[#allocation2 + $0x1c0] sm:$0x3] %vm37, 0.0
    %s42 = scalar_lea.vmem [#allocation2], 408
    %43 = vst.msk [vmem:[%s42] sm:$0xff] %vm34, 0.0
    %44 = vst.msk [vmem:[%s42 + $0x8] sm:$0xff] %vm34, 0.0
    %45 = vst.msk [vmem:[%s42 + $0x10] sm:$0x3] %vm37, 0.0
    %46 = vst.msk [vmem:[%s42 + $0x1b0] sm:$0xff] %vm34, 0.0
    %47 = vst.msk [vmem:[%s42 + $0x1b8] sm:$0xff] %vm34, 0.0
    %48 = vst.msk [vmem:[%s42 + $0x1c0] sm:$0x3] %vm37, 0.0
    %s49 = scalar_lea.vmem [#allocation2], 24
    %vm50 = vcmask 24576
    %51 = vst.msk [vmem:[%s49] sm:$0x1] %vm50, 0.0
    %52 = vst.msk [vmem:[%s49 + $0x18] sm:$0x1] %vm50, 0.0
    %53 = vst.msk [vmem:[%s49 + $0x30] sm:$0x1] %vm50, 0.0
    %54 = vst.msk [vmem:[%s49 + $0x48] sm:$0x1] %vm50, 0.0
    %55 = vst.msk [vmem:[%s49 + $0x60] sm:$0x1] %vm50, 0.0
    %56 = vst.msk [vmem:[%s49 + $0x78] sm:$0x1] %vm50, 0.0
    %57 = vst.msk [vmem:[%s49 + $0x90] sm:$0x1] %vm50, 0.0
    %58 = vst.msk [vmem:[%s49 + $0xa8] sm:$0x1] %vm50, 0.0
    %59 = vst.msk [vmem:[%s49 + $0xc0] sm:$0x1] %vm50, 0.0
    %60 = vst.msk [vmem:[%s49 + $0xd8] sm:$0x1] %vm50, 0.0
    %61 = vst.msk [vmem:[%s49 + $0xf0] sm:$0x1] %vm50, 0.0
    %62 = vst.msk [vmem:[%s49 + $0x108] sm:$0x1] %vm50, 0.0
    %63 = vst.msk [vmem:[%s49 + $0x120] sm:$0x1] %vm50, 0.0
    %64 = vst.msk [vmem:[%s49 + $0x138] sm:$0x1] %vm50, 0.0
    %65 = vst.msk [vmem:[%s49 + $0x150] sm:$0x1] %vm50, 0.0
    %66 = vst.msk [vmem:[%s49 + $0x168] sm:$0x1] %vm50, 0.0
    %67 = vst.msk [vmem:[%s49 + $0x1b0] sm:$0x1] %vm50, 0.0
    %68 = vst.msk [vmem:[%s49 + $0x1c8] sm:$0x1] %vm50, 0.0
    %69 = vst.msk [vmem:[%s49 + $0x1e0] sm:$0x1] %vm50, 0.0
    %70 = vst.msk [vmem:[%s49 + $0x1f8] sm:$0x1] %vm50, 0.0
    %71 = vst.msk [vmem:[%s49 + $0x210] sm:$0x1] %vm50, 0.0
    %72 = vst.msk [vmem:[%s49 + $0x228] sm:$0x1] %vm50, 0.0
    %73 = vst.msk [vmem:[%s49 + $0x240] sm:$0x1] %vm50, 0.0
    %74 = vst.msk [vmem:[%s49 + $0x258] sm:$0x1] %vm50, 0.0
    %75 = vst.msk [vmem:[%s49 + $0x270] sm:$0x1] %vm50, 0.0
    %76 = vst.msk [vmem:[%s49 + $0x288] sm:$0x1] %vm50, 0.0
    %77 = vst.msk [vmem:[%s49 + $0x2a0] sm:$0x1] %vm50, 0.0
    %78 = vst.msk [vmem:[%s49 + $0x2b8] sm:$0x1] %vm50, 0.0
    %79 = vst.msk [vmem:[%s49 + $0x2d0] sm:$0x1] %vm50, 0.0
    %80 = vst.msk [vmem:[%s49 + $0x2e8] sm:$0x1] %vm50, 0.0
    %81 = vst.msk [vmem:[%s49 + $0x300] sm:$0x1] %vm50, 0.0
    %82 = vst.msk [vmem:[%s49 + $0x318] sm:$0x1] %vm50, 0.0
    %83 = vst.msk [vmem:[%s49 + $0x11] sm:$0x1] %vm50, 0.0
    %84 = vst.msk [vmem:[%s49 + $0x29] sm:$0x1] %vm50, 0.0
    %85 = vst.msk [vmem:[%s49 + $0x41] sm:$0x1] %vm50, 0.0
    %86 = vst.msk [vmem:[%s49 + $0x59] sm:$0x1] %vm50, 0.0
    %87 = vst.msk [vmem:[%s49 + $0x71] sm:$0x1] %vm50, 0.0
    %88 = vst.msk [vmem:[%s49 + $0x89] sm:$0x1] %vm50, 0.0
    %89 = vst.msk [vmem:[%s49 + $0xa1] sm:$0x1] %vm50, 0.0
    %90 = vst.msk [vmem:[%s49 + $0xb9] sm:$0x1] %vm50, 0.0
    %91 = vst.msk [vmem:[%s49 + $0xd1] sm:$0x1] %vm50, 0.0
    %92 = vst.msk [vmem:[%s49 + $0xe9] sm:$0x1] %vm50, 0.0
    %93 = vst.msk [vmem:[%s49 + $0x101] sm:$0x1] %vm50, 0.0
    %94 = vst.msk [vmem:[%s49 + $0x119] sm:$0x1] %vm50, 0.0
    %95 = vst.msk [vmem:[%s49 + $0x131] sm:$0x1] %vm50, 0.0
    %96 = vst.msk [vmem:[%s49 + $0x149] sm:$0x1] %vm50, 0.0
    %97 = vst.msk [vmem:[%s49 + $0x161] sm:$0x1] %vm50, 0.0
    %98 = vst.msk [vmem:[%s49 + $0x179] sm:$0x1] %vm50, 0.0
    %99 = vst.msk [vmem:[%s49 + $0x1c1] sm:$0x1] %vm50, 0.0
    %100 = vst.msk [vmem:[%s49 + $0x1d9] sm:$0x1] %vm50, 0.0
    %101 = vst.msk [vmem:[%s49 + $0x1f1] sm:$0x1] %vm50, 0.0
    %102 = vst.msk [vmem:[%s49 + $0x209] sm:$0x1] %vm50, 0.0
    %103 = vst.msk [vmem:[%s49 + $0x221] sm:$0x1] %vm50, 0.0
    %104 = vst.msk [vmem:[%s49 + $0x239] sm:$0x1] %vm50, 0.0
    %105 = vst.msk [vmem:[%s49 + $0x251] sm:$0x1] %vm50, 0.0
    %106 = vst.msk [vmem:[%s49 + $0x269] sm:$0x1] %vm50, 0.0
    %107 = vst.msk [vmem:[%s49 + $0x281] sm:$0x1] %vm50, 0.0
    %108 = vst.msk [vmem:[%s49 + $0x299] sm:$0x1] %vm50, 0.0
    %109 = vst.msk [vmem:[%s49 + $0x2b1] sm:$0x1] %vm50, 0.0
    %110 = vst.msk [vmem:[%s49 + $0x2c9] sm:$0x1] %vm50, 0.0
    %111 = vst.msk [vmem:[%s49 + $0x2e1] sm:$0x1] %vm50, 0.0
    %112 = vst.msk [vmem:[%s49 + $0x2f9] sm:$0x1] %vm50, 0.0
    %113 = vst.msk [vmem:[%s49 + $0x311] sm:$0x1] %vm50, 0.0
    %114 = vst.msk [vmem:[%s49 + $0x329] sm:$0x1] %vm50, 0.0
    %v115 = vld [vmem:[%s0] sm:$0xff]
    %v116 = vld [vmem:[%s0 + $0x8] sm:$0xff]
    %v117 = vld [vmem:[%s0 + $0x10] sm:$0xff]
    %v118 = vld [vmem:[%s0 + $0x18] sm:$0xff]
    %v119 = vld [vmem:[%s0 + $0x20] sm:$0xff]
    %v120 = vld [vmem:[%s0 + $0x28] sm:$0xff]
    %v121 = vld [vmem:[%s0 + $0x30] sm:$0xff]
    %v122 = vld [vmem:[%s0 + $0x38] sm:$0xff]
    %v123 = vld [vmem:[%s0 + $0x40] sm:$0xff]
    %v124 = vld [vmem:[%s0 + $0x48] sm:$0xff]
    %v125 = vld [vmem:[%s0 + $0x50] sm:$0xff]
    %v126 = vld [vmem:[%s0 + $0x58] sm:$0xff]
    %v127 = vld [vmem:[%s0 + $0x60] sm:$0xff]
    %v128 = vld [vmem:[%s0 + $0x68] sm:$0xff]
    %v129 = vld [vmem:[%s0 + $0x70] sm:$0xff]
    %v130 = vld [vmem:[%s0 + $0x78] sm:$0xff]
    %v131 = vld [vmem:[%s0 + $0x80] sm:$0xff]
    %v132 = vld [vmem:[%s0 + $0x88] sm:$0xff]
    %v133 = vld [vmem:[%s0 + $0x90] sm:$0xff]
    %v134 = vld [vmem:[%s0 + $0x98] sm:$0xff]
    %v135 = vld [vmem:[%s0 + $0xa0] sm:$0xff]
    %v136 = vld [vmem:[%s0 + $0xa8] sm:$0xff]
    %v137 = vld [vmem:[%s0 + $0xb0] sm:$0xff]
    %v138 = vld [vmem:[%s0 + $0xb8] sm:$0xff]
    %v139 = vld [vmem:[%s0 + $0xc0] sm:$0xff]
    %v140 = vld [vmem:[%s0 + $0xc8] sm:$0xff]
    %v141 = vld [vmem:[%s0 + $0xd0] sm:$0xff]
    %v142 = vld [vmem:[%s0 + $0xd8] sm:$0xff]
    %v143 = vld [vmem:[%s0 + $0xe0] sm:$0xff]
    %v144 = vld [vmem:[%s0 + $0xe8] sm:$0xff]
    %v145 = vld [vmem:[%s0 + $0xf0] sm:$0xff]
    %v146 = vld [vmem:[%s0 + $0xf8] sm:$0xff]
    %v147 = vld [vmem:[%s0 + $0x100] sm:$0xff]
    %v148 = vld [vmem:[%s0 + $0x108] sm:$0xff]
    %v149 = vld [vmem:[%s0 + $0x110] sm:$0xff]
    %v150 = vld [vmem:[%s0 + $0x118] sm:$0xff]
    %v151 = vld [vmem:[%s0 + $0x120] sm:$0xff]
    %v152 = vld [vmem:[%s0 + $0x128] sm:$0xff]
    %v153 = vld [vmem:[%s0 + $0x130] sm:$0xff]
    %v154 = vld [vmem:[%s0 + $0x138] sm:$0xff]
    %v155 = vld [vmem:[%s0 + $0x140] sm:$0xff]
    %v156 = vld [vmem:[%s0 + $0x148] sm:$0xff]
    %v157 = vld [vmem:[%s0 + $0x150] sm:$0xff]
    %v158 = vld [vmem:[%s0 + $0x158] sm:$0xff]
    %v159 = vld [vmem:[%s0 + $0x160] sm:$0xff]
    %v160 = vld [vmem:[%s0 + $0x168] sm:$0xff]
    %v161 = vld [vmem:[%s0 + $0x170] sm:$0xff]
    %v162 = vld [vmem:[%s0 + $0x178] sm:$0xff]
    %v163 = vld [vmem:[%s0 + $0x180] sm:$0xff]
    %v164 = vld [vmem:[%s0 + $0x188] sm:$0xff]
    %v165 = vld [vmem:[%s0 + $0x190] sm:$0xff]
    %v166 = vld [vmem:[%s0 + $0x198] sm:$0xff]
    %v167 = vld [vmem:[%s0 + $0x1a0] sm:$0xff]
    %v168 = vld [vmem:[%s0 + $0x1a8] sm:$0xff]
    %v169 = vld [vmem:[%s0 + $0x1b0] sm:$0xff]
    %v170 = vld [vmem:[%s0 + $0x1b8] sm:$0xff]
    %v171 = vld [vmem:[%s0 + $0x1c0] sm:$0xff]
    %v172 = vld [vmem:[%s0 + $0x1c8] sm:$0xff]
    %v173 = vld [vmem:[%s0 + $0x1d0] sm:$0xff]
    %v174 = vld [vmem:[%s0 + $0x1d8] sm:$0xff]
    %v175 = vld [vmem:[%s0 + $0x1e0] sm:$0xff]
    %v176 = vld [vmem:[%s0 + $0x1e8] sm:$0xff]
    %v177 = vld [vmem:[%s0 + $0x1f0] sm:$0xff]
    %v178 = vld [vmem:[%s0 + $0x1f8] sm:$0xff]
    %179 = vst.msk [vmem:[%s49 + $0x1] sm:$0xff] %vm34, %v115
    %180 = vst.msk [vmem:[%s49 + $0x9] sm:$0xff] %vm34, %v116
    %181 = vst.msk [vmem:[%s49 + $0x19] sm:$0xff] %vm34, %v117
    %182 = vst.msk [vmem:[%s49 + $0x21] sm:$0xff] %vm34, %v118
    %183 = vst.msk [vmem:[%s49 + $0x31] sm:$0xff] %vm34, %v119
    %184 = vst.msk [vmem:[%s49 + $0x39] sm:$0xff] %vm34, %v120
    %185 = vst.msk [vmem:[%s49 + $0x49] sm:$0xff] %vm34, %v121
    %186 = vst.msk [vmem:[%s49 + $0x51] sm:$0xff] %vm34, %v122
    %187 = vst.msk [vmem:[%s49 + $0x61] sm:$0xff] %vm34, %v123
    %188 = vst.msk [vmem:[%s49 + $0x69] sm:$0xff] %vm34, %v124
    %189 = vst.msk [vmem:[%s49 + $0x79] sm:$0xff] %vm34, %v125
    %190 = vst.msk [vmem:[%s49 + $0x81] sm:$0xff] %vm34, %v126
    %191 = vst.msk [vmem:[%s49 + $0x91] sm:$0xff] %vm34, %v127
    %192 = vst.msk [vmem:[%s49 + $0x99] sm:$0xff] %vm34, %v128
    %193 = vst.msk [vmem:[%s49 + $0xa9] sm:$0xff] %vm34, %v129
    %194 = vst.msk [vmem:[%s49 + $0xb1] sm:$0xff] %vm34, %v130
    %195 = vst.msk [vmem:[%s49 + $0xc1] sm:$0xff] %vm34, %v131
    %196 = vst.msk [vmem:[%s49 + $0xc9] sm:$0xff] %vm34, %v132
    %197 = vst.msk [vmem:[%s49 + $0xd9] sm:$0xff] %vm34, %v133
    %198 = vst.msk [vmem:[%s49 + $0xe1] sm:$0xff] %vm34, %v134
    %199 = vst.msk [vmem:[%s49 + $0xf1] sm:$0xff] %vm34, %v135
    %200 = vst.msk [vmem:[%s49 + $0xf9] sm:$0xff] %vm34, %v136
    %201 = vst.msk [vmem:[%s49 + $0x109] sm:$0xff] %vm34, %v137
    %202 = vst.msk [vmem:[%s49 + $0x111] sm:$0xff] %vm34, %v138
    %203 = vst.msk [vmem:[%s49 + $0x121] sm:$0xff] %vm34, %v139
    %204 = vst.msk [vmem:[%s49 + $0x129] sm:$0xff] %vm34, %v140
    %205 = vst.msk [vmem:[%s49 + $0x139] sm:$0xff] %vm34, %v141
    %206 = vst.msk [vmem:[%s49 + $0x141] sm:$0xff] %vm34, %v142
    %207 = vst.msk [vmem:[%s49 + $0x151] sm:$0xff] %vm34, %v143
    %208 = vst.msk [vmem:[%s49 + $0x159] sm:$0xff] %vm34, %v144
    %209 = vst.msk [vmem:[%s49 + $0x169] sm:$0xff] %vm34, %v145
    %210 = vst.msk [vmem:[%s49 + $0x171] sm:$0xff] %vm34, %v146
    %211 = vst.msk [vmem:[%s49 + $0x1b1] sm:$0xff] %vm34, %v147
    %212 = vst.msk [vmem:[%s49 + $0x1b9] sm:$0xff] %vm34, %v148
    %213 = vst.msk [vmem:[%s49 + $0x1c9] sm:$0xff] %vm34, %v149
    %214 = vst.msk [vmem:[%s49 + $0x1d1] sm:$0xff] %vm34, %v150
    %215 = vst.msk [vmem:[%s49 + $0x1e1] sm:$0xff] %vm34, %v151
    %216 = vst.msk [vmem:[%s49 + $0x1e9] sm:$0xff] %vm34, %v152
    %217 = vst.msk [vmem:[%s49 + $0x1f9] sm:$0xff] %vm34, %v153
    %218 = vst.msk [vmem:[%s49 + $0x201] sm:$0xff] %vm34, %v154
    %219 = vst.msk [vmem:[%s49 + $0x211] sm:$0xff] %vm34, %v155
    %220 = vst.msk [vmem:[%s49 + $0x219] sm:$0xff] %vm34, %v156
    %221 = vst.msk [vmem:[%s49 + $0x229] sm:$0xff] %vm34, %v157
    %222 = vst.msk [vmem:[%s49 + $0x231] sm:$0xff] %vm34, %v158
    %223 = vst.msk [vmem:[%s49 + $0x241] sm:$0xff] %vm34, %v159
    %224 = vst.msk [vmem:[%s49 + $0x249] sm:$0xff] %vm34, %v160
    %225 = vst.msk [vmem:[%s49 + $0x259] sm:$0xff] %vm34, %v161
    %226 = vst.msk [vmem:[%s49 + $0x261] sm:$0xff] %vm34, %v162
    %227 = vst.msk [vmem:[%s49 + $0x271] sm:$0xff] %vm34, %v163
    %228 = vst.msk [vmem:[%s49 + $0x279] sm:$0xff] %vm34, %v164
    %229 = vst.msk [vmem:[%s49 + $0x289] sm:$0xff] %vm34, %v165
    %230 = vst.msk [vmem:[%s49 + $0x291] sm:$0xff] %vm34, %v166
    %231 = vst.msk [vmem:[%s49 + $0x2a1] sm:$0xff] %vm34, %v167
    %232 = vst.msk [vmem:[%s49 + $0x2a9] sm:$0xff] %vm34, %v168
    %233 = vst.msk [vmem:[%s49 + $0x2b9] sm:$0xff] %vm34, %v169
    %234 = vst.msk [vmem:[%s49 + $0x2c1] sm:$0xff] %vm34, %v170
    %235 = vst.msk [vmem:[%s49 + $0x2d1] sm:$0xff] %vm34, %v171
    %236 = vst.msk [vmem:[%s49 + $0x2d9] sm:$0xff] %vm34, %v172
    %237 = vst.msk [vmem:[%s49 + $0x2e9] sm:$0xff] %vm34, %v173
    %238 = vst.msk [vmem:[%s49 + $0x2f1] sm:$0xff] %vm34, %v174
    %239 = vst.msk [vmem:[%s49 + $0x301] sm:$0xff] %vm34, %v175
    %240 = vst.msk [vmem:[%s49 + $0x309] sm:$0xff] %vm34, %v176
    %241 = vst.msk [vmem:[%s49 + $0x319] sm:$0xff] %vm34, %v177
    %242 = vst.msk [vmem:[%s49 + $0x321] sm:$0xff] %vm34, %v178
    %v243 = vld [vmem:[#allocation2] ss:$2 sm:$0xff]
    %s244 = scalar_lea.vmem [#allocation2], 48
    %v245 = vld [vmem:[%s244] ss:$2 sm:$0xff]
    %s246 = scalar_lea.vmem [#allocation2], 96
    %v247 = vld [vmem:[%s246] ss:$2 sm:$0xff]
    %s248 = scalar_lea.vmem [#allocation2], 144
    %v249 = vld [vmem:[%s248] ss:$2 sm:$0xff]
    %s250 = scalar_lea.vmem [#allocation2], 192
    %v251 = vld [vmem:[%s250] ss:$2 sm:$0xff]
    %s252 = scalar_lea.vmem [#allocation2], 240
    %v253 = vld [vmem:[%s252] ss:$2 sm:$0xff]
    %s254 = scalar_lea.vmem [#allocation2], 288
    %v255 = vld [vmem:[%s254] ss:$2 sm:$0xff]
    %s256 = scalar_lea.vmem [#allocation2], 336
    %v257 = vld [vmem:[%s256] ss:$2 sm:$0xff]
    %s258 = scalar_lea.vmem [#allocation2], 432
    %v259 = vld [vmem:[%s258] ss:$2 sm:$0xff]
    %s260 = scalar_lea.vmem [#allocation2], 480
    %v261 = vld [vmem:[%s260] ss:$2 sm:$0xff]
    %s262 = scalar_lea.vmem [#allocation2], 528
    %v263 = vld [vmem:[%s262] ss:$2 sm:$0xff]
    %s264 = scalar_lea.vmem [#allocation2], 576
    %v265 = vld [vmem:[%s264] ss:$2 sm:$0xff]
    %s266 = scalar_lea.vmem [#allocation2], 624
    %v267 = vld [vmem:[%s266] ss:$2 sm:$0xff]
    %s268 = scalar_lea.vmem [#allocation2], 672
    %v269 = vld [vmem:[%s268] ss:$2 sm:$0xff]
    %s270 = scalar_lea.vmem [#allocation2], 720
    %v271 = vld [vmem:[%s270] ss:$2 sm:$0xff]
    %s272 = scalar_lea.vmem [#allocation2], 768
    %v273 = vld [vmem:[%s272] ss:$2 sm:$0xff]
    %v274 = vpack.c.bf16 %v245, %v243
    %v275 = vpack.c.bf16 %v249, %v247
    %v276 = vpack.c.bf16 %v253, %v251
    %v277 = vpack.c.bf16 %v257, %v255
    %v278 = vpack.c.bf16 %v261, %v259
    %v279 = vpack.c.bf16 %v265, %v263
    %v280 = vpack.c.bf16 %v269, %v267
    %v281 = vpack.c.bf16 %v273, %v271
    %v282 = vld [vmem:[%s1] sm:$0x3]
    %s283 = scalar_lea.vmem [#allocation2], 1
    %v284 = vld [vmem:[%s283] ss:$2 sm:$0xff]
    %s285 = scalar_lea.vmem [#allocation2], 49
    %v286 = vld [vmem:[%s285] ss:$2 sm:$0xff]
    %s287 = scalar_lea.vmem [#allocation2], 97
    %v288 = vld [vmem:[%s287] ss:$2 sm:$0xff]
    %s289 = scalar_lea.vmem [#allocation2], 145
    %v290 = vld [vmem:[%s289] ss:$2 sm:$0xff]
    %s291 = scalar_lea.vmem [#allocation2], 193
    %v292 = vld [vmem:[%s291] ss:$2 sm:$0xff]
    %s293 = scalar_lea.vmem [#allocation2], 241
    %v294 = vld [vmem:[%s293] ss:$2 sm:$0xff]
    %s295 = scalar_lea.vmem [#allocation2], 289
    %v296 = vld [vmem:[%s295] ss:$2 sm:$0xff]
    %s297 = scalar_lea.vmem [#allocation2], 337
    %v298 = vld [vmem:[%s297] ss:$2 sm:$0xff]
    %s299 = scalar_lea.vmem [#allocation2], 433
    %v300 = vld [vmem:[%s299] ss:$2 sm:$0xff]
    %s301 = scalar_lea.vmem [#allocation2], 481
    %v302 = vld [vmem:[%s301] ss:$2 sm:$0xff]
    %s303 = scalar_lea.vmem [#allocation2], 529
    %v304 = vld [vmem:[%s303] ss:$2 sm:$0xff]
    %s305 = scalar_lea.vmem [#allocation2], 577
    %v306 = vld [vmem:[%s305] ss:$2 sm:$0xff]
    %s307 = scalar_lea.vmem [#allocation2], 625
    %v308 = vld [vmem:[%s307] ss:$2 sm:$0xff]
    %s309 = scalar_lea.vmem [#allocation2], 673
    %v310 = vld [vmem:[%s309] ss:$2 sm:$0xff]
    %s311 = scalar_lea.vmem [#allocation2], 721
    %v312 = vld [vmem:[%s311] ss:$2 sm:$0xff]
    %s313 = scalar_lea.vmem [#allocation2], 769
    %v314 = vld [vmem:[%s313] ss:$2 sm:$0xff]
    %v315 = vpack.c.bf16 %v286, %v284
    %v316 = vpack.c.bf16 %v290, %v288
    %v317 = vpack.c.bf16 %v294, %v292
    %v318 = vpack.c.bf16 %v298, %v296
    %v319 = vpack.c.bf16 %v302, %v300
    %v320 = vpack.c.bf16 %v306, %v304
    %v321 = vpack.c.bf16 %v310, %v308
    %v322 = vpack.c.bf16 %v314, %v312
    %s323 = scalar_lea.vmem %s1, 2
    %v324 = vld [vmem:[%s323] sm:$0x3]
    %v326 = vsel %vm34, %v315, 0
    %v329 = vsel %vm34, %v316, 0
    %v332 = vsel %vm34, %v317, 0
    %v335 = vsel %vm34, %v318, 0
    %v338 = vsel %vm34, %v319, 0
    %v341 = vsel %vm34, %v320, 0
    %v344 = vsel %vm34, %v321, 0
    %v347 = vsel %vm34, %v322, 0
    %vm349 = vcmask 1041408
    %v351 = vsel %vm349, %v324, 0
    %353 = vmatprep.subr.bf16.mxu0 0
    %354 = vmatpush1.bf16.msra.mxu0 %v351
    %355 = vmatprep.subr.bf16.mxu0 0
    %356 = vmatpush1.bf16.msra.mxu0 0
    %357 = vmatprep.subr.bf16.mxu0 0
    %358 = vmatpush1.bf16.msra.mxu0 0
    %359 = vmatprep.subr.bf16.mxu0 0
    %360 = vmatpush1.bf16.msra.mxu0 0
    %361 = vmatprep.subr.bf16.mxu0 0
    %362 = vmatpush1.bf16.msra.mxu0 0
    %363 = vmatprep.subr.bf16.mxu0 0
    %364 = vmatpush1.bf16.msra.mxu0 0
    %365 = vmatprep.subr.bf16.mxu0 0
    %366 = vmatpush1.bf16.msra.mxu0 0
    %367 = vmatprep.subr.bf16.mxu0 0
    %368 = vmatpush1.bf16.msra.mxu0 0
    %369 = vmatprep.subr.bf16.mxu0 0
    %370 = vmatpush1.bf16.msra.mxu0 0
    %371 = vmatprep.subr.bf16.mxu0 0
    %372 = vmatpush1.bf16.msra.mxu0 0
    %373 = vmatprep.subr.bf16.mxu0 0
    %374 = vmatpush1.bf16.msra.mxu0 0
    %375 = vmatprep.subr.bf16.mxu0 0
    %376 = vmatpush1.bf16.msra.mxu0 0
    %377 = vmatprep.subr.bf16.mxu0 0
    %378 = vmatpush1.bf16.msra.mxu0 0
    %379 = vmatprep.subr.bf16.mxu0 0
    %380 = vmatpush1.bf16.msra.mxu0 0
    %381 = vmatprep.subr.bf16.mxu0 0
    %382 = vmatpush1.bf16.msra.mxu0 0
    %383 = vmatprep.subr.bf16.mxu0 0
    %384 = vmatpush1.bf16.msra.mxu0 0
    %385 = vmatprep.mubr.bf16.mxu0 0
    %386 = vmatmul.mubr.bf16.gmra.mrb[0].mxu0 %v326
    %v387 = vpop.f32.mrb[0].mxu0
    %v388 = vadd.f32 0.0, %v387
    %v389 = vpop.f32.mrb[0].mxu0
    %v390 = vpop.f32.mrb[0].mxu0
    %v391 = vadd.f32 0.0, %v390
    %v392 = vpop.f32.mrb[0].mxu0
    %393 = vmatprep.mubr.bf16.mxu0 0
    %394 = vmatmul.mubr.bf16.gmra.mrb[0].mxu0 %v329
    %v395 = vpop.f32.mrb[0].mxu0
    %v396 = vadd.f32 0.0, %v395
    %v397 = vpop.f32.mrb[0].mxu0
    %v398 = vpop.f32.mrb[0].mxu0
    %v399 = vadd.f32 0.0, %v398
    %v400 = vpop.f32.mrb[0].mxu0
    %401 = vmatprep.mubr.bf16.mxu0 0
    %402 = vmatmul.mubr.bf16.gmra.mrb[0].mxu0 %v332
    %v403 = vpop.f32.mrb[0].mxu0
    %v404 = vadd.f32 0.0, %v403
    %v405 = vpop.f32.mrb[0].mxu0
    %v406 = vpop.f32.mrb[0].mxu0
    %v407 = vadd.f32 0.0, %v406
    %v408 = vpop.f32.mrb[0].mxu0
    %409 = vmatprep.mubr.bf16.mxu0 0
    %410 = vmatmul.mubr.bf16.gmra.mrb[0].mxu0 %v335
    %v411 = vpop.f32.mrb[0].mxu0
    %v412 = vadd.f32 0.0, %v411
    %v413 = vpop.f32.mrb[0].mxu0
    %v414 = vpop.f32.mrb[0].mxu0
    %v415 = vadd.f32 0.0, %v414
    %v416 = vpop.f32.mrb[0].mxu0
    %417 = vmatprep.mubr.bf16.mxu0 0
    %418 = vmatmul.mubr.bf16.gmra.mrb[0].mxu0 %v338
    %v419 = vpop.f32.mrb[0].mxu0
    %v420 = vadd.f32 0.0, %v419
    %v421 = vpop.f32.mrb[0].mxu0
    %v422 = vpop.f32.mrb[0].mxu0
    %v423 = vadd.f32 0.0, %v422
    %v424 = vpop.f32.mrb[0].mxu0
    %425 = vmatprep.mubr.bf16.mxu0 0
    %426 = vmatmul.mubr.bf16.gmra.mrb[0].mxu0 %v341
    %v427 = vpop.f32.mrb[0].mxu0
    %v428 = vadd.f32 0.0, %v427
    %v429 = vpop.f32.mrb[0].mxu0
    %v430 = vpop.f32.mrb[0].mxu0
    %v431 = vadd.f32 0.0, %v430
    %v432 = vpop.f32.mrb[0].mxu0
    %433 = vmatprep.mubr.bf16.mxu0 0
    %434 = vmatmul.mubr.bf16.gmra.mrb[0].mxu0 %v344
    %v435 = vpop.f32.mrb[0].mxu0
    %v436 = vadd.f32 0.0, %v435
    %v437 = vpop.f32.mrb[0].mxu0
    %v438 = vpop.f32.mrb[0].mxu0
    %v439 = vadd.f32 0.0, %v438
    %v440 = vpop.f32.mrb[0].mxu0
    %441 = vmatprep.mubr.bf16.mxu0 0
    %442 = vmatmul.mubr.bf16.gmra.mrb[0].mxu0 %v347
    %v443 = vpop.f32.mrb[0].mxu0
    %v444 = vadd.f32 0.0, %v443
    %v445 = vpop.f32.mrb[0].mxu0
    %v446 = vpop.f32.mrb[0].mxu0
    %v447 = vadd.f32 0.0, %v446
    %v448 = vpop.f32.mrb[0].mxu0
    %449 = vdwg.mxu0
    %v451 = vsel %vm34, %v274, 0
    %v454 = vsel %vm34, %v275, 0
    %v457 = vsel %vm34, %v276, 0
    %v460 = vsel %vm34, %v277, 0
    %v463 = vsel %vm34, %v278, 0
    %v466 = vsel %vm34, %v279, 0
    %v469 = vsel %vm34, %v280, 0
    %v472 = vsel %vm34, %v281, 0
    %v475 = vsel %vm349, %v282, 0
    %477 = vmatprep.subr.bf16.mxu0 0
    %478 = vmatpush1.bf16.msra.mxu0 %v475
    %479 = vmatprep.subr.bf16.mxu0 0
    %480 = vmatpush1.bf16.msra.mxu0 0
    %481 = vmatprep.subr.bf16.mxu0 0
    %482 = vmatpush1.bf16.msra.mxu0 0
    %483 = vmatprep.subr.bf16.mxu0 0
    %484 = vmatpush1.bf16.msra.mxu0 0
    %485 = vmatprep.subr.bf16.mxu0 0
    %486 = vmatpush1.bf16.msra.mxu0 0
    %487 = vmatprep.subr.bf16.mxu0 0
    %488 = vmatpush1.bf16.msra.mxu0 0
    %489 = vmatprep.subr.bf16.mxu0 0
    %490 = vmatpush1.bf16.msra.mxu0 0
    %491 = vmatprep.subr.bf16.mxu0 0
    %492 = vmatpush1.bf16.msra.mxu0 0
    %493 = vmatprep.subr.bf16.mxu0 0
    %494 = vmatpush1.bf16.msra.mxu0 0
    %495 = vmatprep.subr.bf16.mxu0 0
    %496 = vmatpush1.bf16.msra.mxu0 0
    %497 = vmatprep.subr.bf16.mxu0 0
    %498 = vmatpush1.bf16.msra.mxu0 0
    %499 = vmatprep.subr.bf16.mxu0 0
    %500 = vmatpush1.bf16.msra.mxu0 0
    %501 = vmatprep.subr.bf16.mxu0 0
    %502 = vmatpush1.bf16.msra.mxu0 0
    %503 = vmatprep.subr.bf16.mxu0 0
    %504 = vmatpush1.bf16.msra.mxu0 0
    %505 = vmatprep.subr.bf16.mxu0 0
    %506 = vmatpush1.bf16.msra.mxu0 0
    %507 = vmatprep.subr.bf16.mxu0 0
    %508 = vmatpush1.bf16.msra.mxu0 0
    %509 = vmatprep.mubr.bf16.mxu0 0
    %510 = vmatmul.mubr.bf16.gmra.mrb[0].mxu0 %v451
    %v511 = vpop.f32.mrb[0].mxu0
    %v512 = vadd.f32 %v388, %v511
    %v513 = vpop.f32.mrb[0].mxu0
    %v514 = vpop.f32.mrb[0].mxu0
    %v515 = vadd.f32 %v391, %v514
    %v516 = vpop.f32.mrb[0].mxu0
    %517 = vmatprep.mubr.bf16.mxu0 0
    %518 = vmatmul.mubr.bf16.gmra.mrb[0].mxu0 %v454
    %v519 = vpop.f32.mrb[0].mxu0
    %v520 = vadd.f32 %v396, %v519
    %v521 = vpop.f32.mrb[0].mxu0
    %v522 = vpop.f32.mrb[0].mxu0
    %v523 = vadd.f32 %v399, %v522
    %v524 = vpop.f32.mrb[0].mxu0
    %525 = vmatprep.mubr.bf16.mxu0 0
    %526 = vmatmul.mubr.bf16.gmra.mrb[0].mxu0 %v457
    %v527 = vpop.f32.mrb[0].mxu0
    %v528 = vadd.f32 %v404, %v527
    %v529 = vpop.f32.mrb[0].mxu0
    %v530 = vpop.f32.mrb[0].mxu0
    %v531 = vadd.f32 %v407, %v530
    %v532 = vpop.f32.mrb[0].mxu0
    %533 = vmatprep.mubr.bf16.mxu0 0
    %534 = vmatmul.mubr.bf16.gmra.mrb[0].mxu0 %v460
    %v535 = vpop.f32.mrb[0].mxu0
    %v536 = vadd.f32 %v412, %v535
    %v537 = vpop.f32.mrb[0].mxu0
    %v538 = vpop.f32.mrb[0].mxu0
    %v539 = vadd.f32 %v415, %v538
    %v540 = vpop.f32.mrb[0].mxu0
    %541 = vmatprep.mubr.bf16.mxu0 0
    %542 = vmatmul.mubr.bf16.gmra.mrb[0].mxu0 %v463
    %v543 = vpop.f32.mrb[0].mxu0
    %v544 = vadd.f32 %v420, %v543
    %v545 = vpop.f32.mrb[0].mxu0
    %v546 = vpop.f32.mrb[0].mxu0
    %v547 = vadd.f32 %v423, %v546
    %v548 = vpop.f32.mrb[0].mxu0
    %549 = vmatprep.mubr.bf16.mxu0 0
    %550 = vmatmul.mubr.bf16.gmra.mrb[0].mxu0 %v466
    %v551 = vpop.f32.mrb[0].mxu0
    %v552 = vadd.f32 %v428, %v551
    %v553 = vpop.f32.mrb[0].mxu0
    %v554 = vpop.f32.mrb[0].mxu0
    %v555 = vadd.f32 %v431, %v554
    %v556 = vpop.f32.mrb[0].mxu0
    %557 = vmatprep.mubr.bf16.mxu0 0
    %558 = vmatmul.mubr.bf16.gmra.mrb[0].mxu0 %v469
    %v559 = vpop.f32.mrb[0].mxu0
    %v560 = vadd.f32 %v436, %v559
    %v561 = vpop.f32.mrb[0].mxu0
    %v562 = vpop.f32.mrb[0].mxu0
    %v563 = vadd.f32 %v439, %v562
    %v564 = vpop.f32.mrb[0].mxu0
    %565 = vmatprep.mubr.bf16.mxu0 0
    %566 = vmatmul.mubr.bf16.gmra.mrb[0].mxu0 %v472
    %v567 = vpop.f32.mrb[0].mxu0
    %v568 = vadd.f32 %v444, %v567
    %v569 = vpop.f32.mrb[0].mxu0
    %v570 = vpop.f32.mrb[0].mxu0
    %v571 = vadd.f32 %v447, %v570
    %v572 = vpop.f32.mrb[0].mxu0
    %573 = vdwg.mxu0
    %s574 = scalar_lea.vmem [#allocation2], 2
    %v575 = vld [vmem:[%s574] ss:$2 sm:$0xff]
    %s576 = scalar_lea.vmem [#allocation2], 50
    %v577 = vld [vmem:[%s576] ss:$2 sm:$0xff]
    %s578 = scalar_lea.vmem [#allocation2], 98
    %v579 = vld [vmem:[%s578] ss:$2 sm:$0xff]
    %s580 = scalar_lea.vmem [#allocation2], 146
    %v581 = vld [vmem:[%s580] ss:$2 sm:$0xff]
    %s582 = scalar_lea.vmem [#allocation2], 194
    %v583 = vld [vmem:[%s582] ss:$2 sm:$0xff]
    %s584 = scalar_lea.vmem [#allocation2], 242
    %v585 = vld [vmem:[%s584] ss:$2 sm:$0xff]
    %s586 = scalar_lea.vmem [#allocation2], 290
    %v587 = vld [vmem:[%s586] ss:$2 sm:$0xff]
    %s588 = scalar_lea.vmem [#allocation2], 338
    %v589 = vld [vmem:[%s588] ss:$2 sm:$0xff]
    %s590 = scalar_lea.vmem [#allocation2], 434
    %v591 = vld [vmem:[%s590] ss:$2 sm:$0xff]
    %s592 = scalar_lea.vmem [#allocation2], 482
    %v593 = vld [vmem:[%s592] ss:$2 sm:$0xff]
    %s594 = scalar_lea.vmem [#allocation2], 530
    %v595 = vld [vmem:[%s594] ss:$2 sm:$0xff]
    %s596 = scalar_lea.vmem [#allocation2], 578
    %v597 = vld [vmem:[%s596] ss:$2 sm:$0xff]
    %s598 = scalar_lea.vmem [#allocation2], 626
    %v599 = vld [vmem:[%s598] ss:$2 sm:$0xff]
    %s600 = scalar_lea.vmem [#allocation2], 674
    %v601 = vld [vmem:[%s600] ss:$2 sm:$0xff]
    %s602 = scalar_lea.vmem [#allocation2], 722
    %v603 = vld [vmem:[%s602] ss:$2 sm:$0xff]
    %s604 = scalar_lea.vmem [#allocation2], 770
    %v605 = vld [vmem:[%s604] ss:$2 sm:$0xff]
    %v606 = vpack.c.bf16 %v577, %v575
    %v607 = vpack.c.bf16 %v581, %v579
    %v608 = vpack.c.bf16 %v585, %v583
    %v609 = vpack.c.bf16 %v589, %v587
    %v610 = vpack.c.bf16 %v593, %v591
    %v611 = vpack.c.bf16 %v597, %v595
    %v612 = vpack.c.bf16 %v601, %v599
    %v613 = vpack.c.bf16 %v605, %v603
    %s614 = scalar_lea.vmem %s1, 4
    %v615 = vld [vmem:[%s614] sm:$0x3]
    %v617 = vsel %vm34, %v606, 0
    %v620 = vsel %vm34, %v607, 0
    %v623 = vsel %vm34, %v608, 0
    %v626 = vsel %vm34, %v609, 0
    %v629 = vsel %vm34, %v610, 0
    %v632 = vsel %vm34, %v611, 0
    %v635 = vsel %vm34, %v612, 0
    %v638 = vsel %vm34, %v613, 0
    %v641 = vsel %vm349, %v615, 0
    %643 = vmatprep.subr.bf16.mxu0 0
    %644 = vmatpush1.bf16.msra.mxu0 %v641
    %645 = vmatprep.subr.bf16.mxu0 0
    %646 = vmatpush1.bf16.msra.mxu0 0
    %647 = vmatprep.subr.bf16.mxu0 0
    %648 = vmatpush1.bf16.msra.mxu0 0
    %649 = vmatprep.subr.bf16.mxu0 0
    %650 = vmatpush1.bf16.msra.mxu0 0
    %651 = vmatprep.subr.bf16.mxu0 0
    %652 = vmatpush1.bf16.msra.mxu0 0
    %653 = vmatprep.subr.bf16.mxu0 0
    %654 = vmatpush1.bf16.msra.mxu0 0
    %655 = vmatprep.subr.bf16.mxu0 0
    %656 = vmatpush1.bf16.msra.mxu0 0
    %657 = vmatprep.subr.bf16.mxu0 0
    %658 = vmatpush1.bf16.msra.mxu0 0
    %659 = vmatprep.subr.bf16.mxu0 0
    %660 = vmatpush1.bf16.msra.mxu0 0
    %661 = vmatprep.subr.bf16.mxu0 0
    %662 = vmatpush1.bf16.msra.mxu0 0
    %663 = vmatprep.subr.bf16.mxu0 0
    %664 = vmatpush1.bf16.msra.mxu0 0
    %665 = vmatprep.subr.bf16.mxu0 0
    %666 = vmatpush1.bf16.msra.mxu0 0
    %667 = vmatprep.subr.bf16.mxu0 0
    %668 = vmatpush1.bf16.msra.mxu0 0
    %669 = vmatprep.subr.bf16.mxu0 0
    %670 = vmatpush1.bf16.msra.mxu0 0
    %671 = vmatprep.subr.bf16.mxu0 0
    %672 = vmatpush1.bf16.msra.mxu0 0
    %673 = vmatprep.subr.bf16.mxu0 0
    %674 = vmatpush1.bf16.msra.mxu0 0
    %675 = vmatprep.mubr.bf16.mxu0 0
    %676 = vmatmul.mubr.bf16.gmra.mrb[0].mxu0 %v617
    %v677 = vpop.f32.mrb[0].mxu0
    %v678 = vadd.f32 0.0, %v677
    %v679 = vpop.f32.mrb[0].mxu0
    %v680 = vpop.f32.mrb[0].mxu0
    %v681 = vadd.f32 0.0, %v680
    %v682 = vpop.f32.mrb[0].mxu0
    %683 = vmatprep.mubr.bf16.mxu0 0
    %684 = vmatmul.mubr.bf16.gmra.mrb[0].mxu0 %v620
    %v685 = vpop.f32.mrb[0].mxu0
    %v686 = vadd.f32 0.0, %v685
    %v687 = vpop.f32.mrb[0].mxu0
    %v688 = vpop.f32.mrb[0].mxu0
    %v689 = vadd.f32 0.0, %v688
    %v690 = vpop.f32.mrb[0].mxu0
    %691 = vmatprep.mubr.bf16.mxu0 0
    %692 = vmatmul.mubr.bf16.gmra.mrb[0].mxu0 %v623
    %v693 = vpop.f32.mrb[0].mxu0
    %v694 = vadd.f32 0.0, %v693
    %v695 = vpop.f32.mrb[0].mxu0
    %v696 = vpop.f32.mrb[0].mxu0
    %v697 = vadd.f32 0.0, %v696
    %v698 = vpop.f32.mrb[0].mxu0
    %699 = vmatprep.mubr.bf16.mxu0 0
    %700 = vmatmul.mubr.bf16.gmra.mrb[0].mxu0 %v626
    %v701 = vpop.f32.mrb[0].mxu0
    %v702 = vadd.f32 0.0, %v701
    %v703 = vpop.f32.mrb[0].mxu0
    %v704 = vpop.f32.mrb[0].mxu0
    %v705 = vadd.f32 0.0, %v704
    %v706 = vpop.f32.mrb[0].mxu0
    %707 = vmatprep.mubr.bf16.mxu0 0
    %708 = vmatmul.mubr.bf16.gmra.mrb[0].mxu0 %v629
    %v709 = vpop.f32.mrb[0].mxu0
    %v710 = vadd.f32 0.0, %v709
    %v711 = vpop.f32.mrb[0].mxu0
    %v712 = vpop.f32.mrb[0].mxu0
    %v713 = vadd.f32 0.0, %v712
    %v714 = vpop.f32.mrb[0].mxu0
    %715 = vmatprep.mubr.bf16.mxu0 0
    %716 = vmatmul.mubr.bf16.gmra.mrb[0].mxu0 %v632
    %v717 = vpop.f32.mrb[0].mxu0
    %v718 = vadd.f32 0.0, %v717
    %v719 = vpop.f32.mrb[0].mxu0
    %v720 = vpop.f32.mrb[0].mxu0
    %v721 = vadd.f32 0.0, %v720
    %v722 = vpop.f32.mrb[0].mxu0
    %723 = vmatprep.mubr.bf16.mxu0 0
    %724 = vmatmul.mubr.bf16.gmra.mrb[0].mxu0 %v635
    %v725 = vpop.f32.mrb[0].mxu0
    %v726 = vadd.f32 0.0, %v725
    %v727 = vpop.f32.mrb[0].mxu0
    %v728 = vpop.f32.mrb[0].mxu0
    %v729 = vadd.f32 0.0, %v728
    %v730 = vpop.f32.mrb[0].mxu0
    %731 = vmatprep.mubr.bf16.mxu0 0
    %732 = vmatmul.mubr.bf16.gmra.mrb[0].mxu0 %v638
    %v733 = vpop.f32.mrb[0].mxu0
    %v734 = vadd.f32 0.0, %v733
    %v735 = vpop.f32.mrb[0].mxu0
    %v736 = vpop.f32.mrb[0].mxu0
    %v737 = vadd.f32 0.0, %v736
    %v738 = vpop.f32.mrb[0].mxu0
    %739 = vdwg.mxu0
    %v740 = vadd.f32 %v512, %v678
    %v741 = vadd.f32 %v515, %v681
    %v742 = vadd.f32 %v520, %v686
    %v743 = vadd.f32 %v523, %v689
    %v744 = vadd.f32 %v528, %v694
    %v745 = vadd.f32 %v531, %v697
    %v746 = vadd.f32 %v536, %v702
    %v747 = vadd.f32 %v539, %v705
    %v748 = vadd.f32 %v544, %v710
    %v749 = vadd.f32 %v547, %v713
    %v750 = vadd.f32 %v552, %v718
    %v751 = vadd.f32 %v555, %v721
    %v752 = vadd.f32 %v560, %v726
    %v753 = vadd.f32 %v563, %v729
    %v754 = vadd.f32 %v568, %v734
    %v755 = vadd.f32 %v571, %v737
    %v756 = vld [vmem:[%s49] ss:$2 sm:$0xff]
    %s757 = scalar_lea.vmem %s49, 48 [#allocation2]
    %v758 = vld [vmem:[%s757] ss:$2 sm:$0xff]
    %s759 = scalar_lea.vmem %s49, 96 [#allocation2]
    %v760 = vld [vmem:[%s759] ss:$2 sm:$0xff]
    %s761 = scalar_lea.vmem %s49, 144 [#allocation2]
    %v762 = vld [vmem:[%s761] ss:$2 sm:$0xff]
    %s763 = scalar_lea.vmem %s49, 192 [#allocation2]
    %v764 = vld [vmem:[%s763] ss:$2 sm:$0xff]
    %s765 = scalar_lea.vmem %s49, 240 [#allocation2]
    %v766 = vld [vmem:[%s765] ss:$2 sm:$0xff]
    %s767 = scalar_lea.vmem %s49, 288 [#allocation2]
    %v768 = vld [vmem:[%s767] ss:$2 sm:$0xff]
    %s769 = scalar_lea.vmem %s49, 336 [#allocation2]
    %v770 = vld [vmem:[%s769] ss:$2 sm:$0xff]
    %s771 = scalar_lea.vmem %s49, 432 [#allocation2]
    %v772 = vld [vmem:[%s771] ss:$2 sm:$0xff]
    %s773 = scalar_lea.vmem %s49, 480 [#allocation2]
    %v774 = vld [vmem:[%s773] ss:$2 sm:$0xff]
    %s775 = scalar_lea.vmem %s49, 528 [#allocation2]
    %v776 = vld [vmem:[%s775] ss:$2 sm:$0xff]
    %s777 = scalar_lea.vmem %s49, 576 [#allocation2]
    %v778 = vld [vmem:[%s777] ss:$2 sm:$0xff]
    %s779 = scalar_lea.vmem %s49, 624 [#allocation2]
    %v780 = vld [vmem:[%s779] ss:$2 sm:$0xff]
    %s781 = scalar_lea.vmem %s49, 672 [#allocation2]
    %v782 = vld [vmem:[%s781] ss:$2 sm:$0xff]
    %s783 = scalar_lea.vmem %s49, 720 [#allocation2]
    %v784 = vld [vmem:[%s783] ss:$2 sm:$0xff]
    %s785 = scalar_lea.vmem %s49, 768 [#allocation2]
    %v786 = vld [vmem:[%s785] ss:$2 sm:$0xff]
    %v787 = vpack.c.bf16 %v758, %v756
    %v788 = vpack.c.bf16 %v762, %v760
    %v789 = vpack.c.bf16 %v766, %v764
    %v790 = vpack.c.bf16 %v770, %v768
    %v791 = vpack.c.bf16 %v774, %v772
    %v792 = vpack.c.bf16 %v778, %v776
    %v793 = vpack.c.bf16 %v782, %v780
    %v794 = vpack.c.bf16 %v786, %v784
    %s795 = scalar_lea.vmem %s1, 6
    %v796 = vld [vmem:[%s795] sm:$0x3]
    %v798 = vsel %vm34, %v787, 0
    %v801 = vsel %vm34, %v788, 0
    %v804 = vsel %vm34, %v789, 0
    %v807 = vsel %vm34, %v790, 0
    %v810 = vsel %vm34, %v791, 0
    %v813 = vsel %vm34, %v792, 0
    %v816 = vsel %vm34, %v793, 0
    %v819 = vsel %vm34, %v794, 0
    %v822 = vsel %vm349, %v796, 0
    %824 = vmatprep.subr.bf16.mxu0 0
    %825 = vmatpush1.bf16.msra.mxu0 %v822
    %826 = vmatprep.subr.bf16.mxu0 0
    %827 = vmatpush1.bf16.msra.mxu0 0
    %828 = vmatprep.subr.bf16.mxu0 0
    %829 = vmatpush1.bf16.msra.mxu0 0
    %830 = vmatprep.subr.bf16.mxu0 0
    %831 = vmatpush1.bf16.msra.mxu0 0
    %832 = vmatprep.subr.bf16.mxu0 0
    %833 = vmatpush1.bf16.msra.mxu0 0
    %834 = vmatprep.subr.bf16.mxu0 0
    %835 = vmatpush1.bf16.msra.mxu0 0
    %836 = vmatprep.subr.bf16.mxu0 0
    %837 = vmatpush1.bf16.msra.mxu0 0
    %838 = vmatprep.subr.bf16.mxu0 0
    %839 = vmatpush1.bf16.msra.mxu0 0
    %840 = vmatprep.subr.bf16.mxu0 0
    %841 = vmatpush1.bf16.msra.mxu0 0
    %842 = vmatprep.subr.bf16.mxu0 0
    %843 = vmatpush1.bf16.msra.mxu0 0
    %844 = vmatprep.subr.bf16.mxu0 0
    %845 = vmatpush1.bf16.msra.mxu0 0
    %846 = vmatprep.subr.bf16.mxu0 0
    %847 = vmatpush1.bf16.msra.mxu0 0
    %848 = vmatprep.subr.bf16.mxu0 0
    %849 = vmatpush1.bf16.msra.mxu0 0
    %850 = vmatprep.subr.bf16.mxu0 0
    %851 = vmatpush1.bf16.msra.mxu0 0
    %852 = vmatprep.subr.bf16.mxu0 0
    %853 = vmatpush1.bf16.msra.mxu0 0
    %854 = vmatprep.subr.bf16.mxu0 0
    %855 = vmatpush1.bf16.msra.mxu0 0
    %856 = vmatprep.mubr.bf16.mxu0 0
    %857 = vmatmul.mubr.bf16.gmra.mrb[0].mxu0 %v798
    %v858 = vpop.f32.mrb[0].mxu0
    %v859 = vadd.f32 0.0, %v858
    %v860 = vpop.f32.mrb[0].mxu0
    %v861 = vpop.f32.mrb[0].mxu0
    %v862 = vadd.f32 0.0, %v861
    %v863 = vpop.f32.mrb[0].mxu0
    %864 = vmatprep.mubr.bf16.mxu0 0
    %865 = vmatmul.mubr.bf16.gmra.mrb[0].mxu0 %v801
    %v866 = vpop.f32.mrb[0].mxu0
    %v867 = vadd.f32 0.0, %v866
    %v868 = vpop.f32.mrb[0].mxu0
    %v869 = vpop.f32.mrb[0].mxu0
    %v870 = vadd.f32 0.0, %v869
    %v871 = vpop.f32.mrb[0].mxu0
    %872 = vmatprep.mubr.bf16.mxu0 0
    %873 = vmatmul.mubr.bf16.gmra.mrb[0].mxu0 %v804
    %v874 = vpop.f32.mrb[0].mxu0
    %v875 = vadd.f32 0.0, %v874
    %v876 = vpop.f32.mrb[0].mxu0
    %v877 = vpop.f32.mrb[0].mxu0
    %v878 = vadd.f32 0.0, %v877
    %v879 = vpop.f32.mrb[0].mxu0
    %880 = vmatprep.mubr.bf16.mxu0 0
    %881 = vmatmul.mubr.bf16.gmra.mrb[0].mxu0 %v807
    %v882 = vpop.f32.mrb[0].mxu0
    %v883 = vadd.f32 0.0, %v882
    %v884 = vpop.f32.mrb[0].mxu0
    %v885 = vpop.f32.mrb[0].mxu0
    %v886 = vadd.f32 0.0, %v885
    %v887 = vpop.f32.mrb[0].mxu0
    %888 = vmatprep.mubr.bf16.mxu0 0
    %889 = vmatmul.mubr.bf16.gmra.mrb[0].mxu0 %v810
    %v890 = vpop.f32.mrb[0].mxu0
    %v891 = vadd.f32 0.0, %v890
    %v892 = vpop.f32.mrb[0].mxu0
    %v893 = vpop.f32.mrb[0].mxu0
    %v894 = vadd.f32 0.0, %v893
    %v895 = vpop.f32.mrb[0].mxu0
    %896 = vmatprep.mubr.bf16.mxu0 0
    %897 = vmatmul.mubr.bf16.gmra.mrb[0].mxu0 %v813
    %v898 = vpop.f32.mrb[0].mxu0
    %v899 = vadd.f32 0.0, %v898
    %v900 = vpop.f32.mrb[0].mxu0
    %v901 = vpop.f32.mrb[0].mxu0
    %v902 = vadd.f32 0.0, %v901
    %v903 = vpop.f32.mrb[0].mxu0
    %904 = vmatprep.mubr.bf16.mxu0 0
    %905 = vmatmul.mubr.bf16.gmra.mrb[0].mxu0 %v816
    %v906 = vpop.f32.mrb[0].mxu0
    %v907 = vadd.f32 0.0, %v906
    %v908 = vpop.f32.mrb[0].mxu0
    %v909 = vpop.f32.mrb[0].mxu0
    %v910 = vadd.f32 0.0, %v909
    %v911 = vpop.f32.mrb[0].mxu0
    %912 = vmatprep.mubr.bf16.mxu0 0
    %913 = vmatmul.mubr.bf16.gmra.mrb[0].mxu0 %v819
    %v914 = vpop.f32.mrb[0].mxu0
    %v915 = vadd.f32 0.0, %v914
    %v916 = vpop.f32.mrb[0].mxu0
    %v917 = vpop.f32.mrb[0].mxu0
    %v918 = vadd.f32 0.0, %v917
    %v919 = vpop.f32.mrb[0].mxu0
    %920 = vdwg.mxu0
    %v921 = vadd.f32 %v740, %v859
    %v922 = vadd.f32 %v741, %v862
    %v923 = vadd.f32 %v742, %v867
    %v924 = vadd.f32 %v743, %v870
    %v925 = vadd.f32 %v744, %v875
    %v926 = vadd.f32 %v745, %v878
    %v927 = vadd.f32 %v746, %v883
    %v928 = vadd.f32 %v747, %v886
    %v929 = vadd.f32 %v748, %v891
    %v930 = vadd.f32 %v749, %v894
    %v931 = vadd.f32 %v750, %v899
    %v932 = vadd.f32 %v751, %v902
    %v933 = vadd.f32 %v752, %v907
    %v934 = vadd.f32 %v753, %v910
    %v935 = vadd.f32 %v754, %v915
    %v936 = vadd.f32 %v755, %v918
    %s937 = scalar_lea.vmem %s49, 1 [#allocation2]
    %v938 = vld [vmem:[%s937] ss:$2 sm:$0xff]
    %s939 = scalar_lea.vmem %s49, 49 [#allocation2]
    %v940 = vld [vmem:[%s939] ss:$2 sm:$0xff]
    %s941 = scalar_lea.vmem %s49, 97 [#allocation2]
    %v942 = vld [vmem:[%s941] ss:$2 sm:$0xff]
    %s943 = scalar_lea.vmem %s49, 145 [#allocation2]
    %v944 = vld [vmem:[%s943] ss:$2 sm:$0xff]
    %s945 = scalar_lea.vmem %s49, 193 [#allocation2]
    %v946 = vld [vmem:[%s945] ss:$2 sm:$0xff]
    %s947 = scalar_lea.vmem %s49, 241 [#allocation2]
    %v948 = vld [vmem:[%s947] ss:$2 sm:$0xff]
    %s949 = scalar_lea.vmem %s49, 289 [#allocation2]
    %v950 = vld [vmem:[%s949] ss:$2 sm:$0xff]
    %s951 = scalar_lea.vmem %s49, 337 [#allocation2]
    %v952 = vld [vmem:[%s951] ss:$2 sm:$0xff]
    %s953 = scalar_lea.vmem %s49, 433 [#allocation2]
    %v954 = vld [vmem:[%s953] ss:$2 sm:$0xff]
    %s955 = scalar_lea.vmem %s49, 481 [#allocation2]
    %v956 = vld [vmem:[%s955] ss:$2 sm:$0xff]
    %s957 = scalar_lea.vmem %s49, 529 [#allocation2]
    %v958 = vld [vmem:[%s957] ss:$2 sm:$0xff]
    %s959 = scalar_lea.vmem %s49, 577 [#allocation2]
    %v960 = vld [vmem:[%s959] ss:$2 sm:$0xff]
    %s961 = scalar_lea.vmem %s49, 625 [#allocation2]
    %v962 = vld [vmem:[%s961] ss:$2 sm:$0xff]
    %s963 = scalar_lea.vmem %s49, 673 [#allocation2]
    %v964 = vld [vmem:[%s963] ss:$2 sm:$0xff]
    %s965 = scalar_lea.vmem %s49, 721 [#allocation2]
    %v966 = vld [vmem:[%s965] ss:$2 sm:$0xff]
    %s967 = scalar_lea.vmem %s49, 769 [#allocation2]
    %v968 = vld [vmem:[%s967] ss:$2 sm:$0xff]
    %v969 = vpack.c.bf16 %v940, %v938
    %v970 = vpack.c.bf16 %v944, %v942
    %v971 = vpack.c.bf16 %v948, %v946
    %v972 = vpack.c.bf16 %v952, %v950
    %v973 = vpack.c.bf16 %v956, %v954
    %v974 = vpack.c.bf16 %v960, %v958
    %v975 = vpack.c.bf16 %v964, %v962
    %v976 = vpack.c.bf16 %v968, %v966
    %s977 = scalar_lea.vmem %s1, 8
    %v978 = vld [vmem:[%s977] sm:$0x3]
    %v980 = vsel %vm34, %v969, 0
    %v983 = vsel %vm34, %v970, 0
    %v986 = vsel %vm34, %v971, 0
    %v989 = vsel %vm34, %v972, 0
    %v992 = vsel %vm34, %v973, 0
    %v995 = vsel %vm34, %v974, 0
    %v998 = vsel %vm34, %v975, 0
    %v1001 = vsel %vm34, %v976, 0
    %v1004 = vsel %vm349, %v978, 0
    %1006 = vmatprep.subr.bf16.mxu0 0
    %1007 = vmatpush1.bf16.msra.mxu0 %v1004
    %1008 = vmatprep.subr.bf16.mxu0 0
    %1009 = vmatpush1.bf16.msra.mxu0 0
    %1010 = vmatprep.subr.bf16.mxu0 0
    %1011 = vmatpush1.bf16.msra.mxu0 0
    %1012 = vmatprep.subr.bf16.mxu0 0
    %1013 = vmatpush1.bf16.msra.mxu0 0
    %1014 = vmatprep.subr.bf16.mxu0 0
    %1015 = vmatpush1.bf16.msra.mxu0 0
    %1016 = vmatprep.subr.bf16.mxu0 0
    %1017 = vmatpush1.bf16.msra.mxu0 0
    %1018 = vmatprep.subr.bf16.mxu0 0
    %1019 = vmatpush1.bf16.msra.mxu0 0
    %1020 = vmatprep.subr.bf16.mxu0 0
    %1021 = vmatpush1.bf16.msra.mxu0 0
    %1022 = vmatprep.subr.bf16.mxu0 0
    %1023 = vmatpush1.bf16.msra.mxu0 0
    %1024 = vmatprep.subr.bf16.mxu0 0
    %1025 = vmatpush1.bf16.msra.mxu0 0
    %1026 = vmatprep.subr.bf16.mxu0 0
    %1027 = vmatpush1.bf16.msra.mxu0 0
    %1028 = vmatprep.subr.bf16.mxu0 0
    %1029 = vmatpush1.bf16.msra.mxu0 0
    %1030 = vmatprep.subr.bf16.mxu0 0
    %1031 = vmatpush1.bf16.msra.mxu0 0
    %1032 = vmatprep.subr.bf16.mxu0 0
    %1033 = vmatpush1.bf16.msra.mxu0 0
    %1034 = vmatprep.subr.bf16.mxu0 0
    %1035 = vmatpush1.bf16.msra.mxu0 0
    %1036 = vmatprep.subr.bf16.mxu0 0
    %1037 = vmatpush1.bf16.msra.mxu0 0
    %1038 = vmatprep.mubr.bf16.mxu0 0
    %1039 = vmatmul.mubr.bf16.gmra.mrb[0].mxu0 %v980
    %v1040 = vpop.f32.mrb[0].mxu0
    %v1041 = vadd.f32 0.0, %v1040
    %v1042 = vpop.f32.mrb[0].mxu0
    %v1043 = vpop.f32.mrb[0].mxu0
    %v1044 = vadd.f32 0.0, %v1043
    %v1045 = vpop.f32.mrb[0].mxu0
    %1046 = vmatprep.mubr.bf16.mxu0 0
    %1047 = vmatmul.mubr.bf16.gmra.mrb[0].mxu0 %v983
    %v1048 = vpop.f32.mrb[0].mxu0
    %v1049 = vadd.f32 0.0, %v1048
    %v1050 = vpop.f32.mrb[0].mxu0
    %v1051 = vpop.f32.mrb[0].mxu0
    %v1052 = vadd.f32 0.0, %v1051
    %v1053 = vpop.f32.mrb[0].mxu0
    %1054 = vmatprep.mubr.bf16.mxu0 0
    %1055 = vmatmul.mubr.bf16.gmra.mrb[0].mxu0 %v986
    %v1056 = vpop.f32.mrb[0].mxu0
    %v1057 = vadd.f32 0.0, %v1056
    %v1058 = vpop.f32.mrb[0].mxu0
    %v1059 = vpop.f32.mrb[0].mxu0
    %v1060 = vadd.f32 0.0, %v1059
    %v1061 = vpop.f32.mrb[0].mxu0
    %1062 = vmatprep.mubr.bf16.mxu0 0
    %1063 = vmatmul.mubr.bf16.gmra.mrb[0].mxu0 %v989
    %v1064 = vpop.f32.mrb[0].mxu0
    %v1065 = vadd.f32 0.0, %v1064
    %v1066 = vpop.f32.mrb[0].mxu0
    %v1067 = vpop.f32.mrb[0].mxu0
    %v1068 = vadd.f32 0.0, %v1067
    %v1069 = vpop.f32.mrb[0].mxu0
    %1070 = vmatprep.mubr.bf16.mxu0 0
    %1071 = vmatmul.mubr.bf16.gmra.mrb[0].mxu0 %v992
    %v1072 = vpop.f32.mrb[0].mxu0
    %v1073 = vadd.f32 0.0, %v1072
    %v1074 = vpop.f32.mrb[0].mxu0
    %v1075 = vpop.f32.mrb[0].mxu0
    %v1076 = vadd.f32 0.0, %v1075
    %v1077 = vpop.f32.mrb[0].mxu0
    %1078 = vmatprep.mubr.bf16.mxu0 0
    %1079 = vmatmul.mubr.bf16.gmra.mrb[0].mxu0 %v995
    %v1080 = vpop.f32.mrb[0].mxu0
    %v1081 = vadd.f32 0.0, %v1080
    %v1082 = vpop.f32.mrb[0].mxu0
    %v1083 = vpop.f32.mrb[0].mxu0
    %v1084 = vadd.f32 0.0, %v1083
    %v1085 = vpop.f32.mrb[0].mxu0
    %1086 = vmatprep.mubr.bf16.mxu0 0
    %1087 = vmatmul.mubr.bf16.gmra.mrb[0].mxu0 %v998
    %v1088 = vpop.f32.mrb[0].mxu0
    %v1089 = vadd.f32 0.0, %v1088
    %v1090 = vpop.f32.mrb[0].mxu0
    %v1091 = vpop.f32.mrb[0].mxu0
    %v1092 = vadd.f32 0.0, %v1091
    %v1093 = vpop.f32.mrb[0].mxu0
    %1094 = vmatprep.mubr.bf16.mxu0 0
    %1095 = vmatmul.mubr.bf16.gmra.mrb[0].mxu0 %v1001
    %v1096 = vpop.f32.mrb[0].mxu0
    %v1097 = vadd.f32 0.0, %v1096
    %v1098 = vpop.f32.mrb[0].mxu0
    %v1099 = vpop.f32.mrb[0].mxu0
    %v1100 = vadd.f32 0.0, %v1099
    %v1101 = vpop.f32.mrb[0].mxu0
    %1102 = vdwg.mxu0
    %v1103 = vadd.f32 %v921, %v1041
    %v1104 = vadd.f32 %v922, %v1044
    %v1105 = vadd.f32 %v923, %v1049
    %v1106 = vadd.f32 %v924, %v1052
    %v1107 = vadd.f32 %v925, %v1057
    %v1108 = vadd.f32 %v926, %v1060
    %v1109 = vadd.f32 %v927, %v1065
    %v1110 = vadd.f32 %v928, %v1068
    %v1111 = vadd.f32 %v929, %v1073
    %v1112 = vadd.f32 %v930, %v1076
    %v1113 = vadd.f32 %v931, %v1081
    %v1114 = vadd.f32 %v932, %v1084
    %v1115 = vadd.f32 %v933, %v1089
    %v1116 = vadd.f32 %v934, %v1092
    %v1117 = vadd.f32 %v935, %v1097
    %v1118 = vadd.f32 %v936, %v1100
    %s1119 = scalar_lea.vmem %s49, 2 [#allocation2]
    %v1120 = vld [vmem:[%s1119] ss:$2 sm:$0xff]
    %s1121 = scalar_lea.vmem %s49, 50 [#allocation2]
    %v1122 = vld [vmem:[%s1121] ss:$2 sm:$0xff]
    %s1123 = scalar_lea.vmem %s49, 98 [#allocation2]
    %v1124 = vld [vmem:[%s1123] ss:$2 sm:$0xff]
    %s1125 = scalar_lea.vmem %s49, 146 [#allocation2]
    %v1126 = vld [vmem:[%s1125] ss:$2 sm:$0xff]
    %s1127 = scalar_lea.vmem %s49, 194 [#allocation2]
    %v1128 = vld [vmem:[%s1127] ss:$2 sm:$0xff]
    %s1129 = scalar_lea.vmem %s49, 242 [#allocation2]
    %v1130 = vld [vmem:[%s1129] ss:$2 sm:$0xff]
    %s1131 = scalar_lea.vmem %s49, 290 [#allocation2]
    %v1132 = vld [vmem:[%s1131] ss:$2 sm:$0xff]
    %s1133 = scalar_lea.vmem %s49, 338 [#allocation2]
    %v1134 = vld [vmem:[%s1133] ss:$2 sm:$0xff]
    %s1135 = scalar_lea.vmem %s49, 434 [#allocation2]
    %v1136 = vld [vmem:[%s1135] ss:$2 sm:$0xff]
    %s1137 = scalar_lea.vmem %s49, 482 [#allocation2]
    %v1138 = vld [vmem:[%s1137] ss:$2 sm:$0xff]
    %s1139 = scalar_lea.vmem %s49, 530 [#allocation2]
    %v1140 = vld [vmem:[%s1139] ss:$2 sm:$0xff]
    %s1141 = scalar_lea.vmem %s49, 578 [#allocation2]
    %v1142 = vld [vmem:[%s1141] ss:$2 sm:$0xff]
    %s1143 = scalar_lea.vmem %s49, 626 [#allocation2]
    %v1144 = vld [vmem:[%s1143] ss:$2 sm:$0xff]
    %s1145 = scalar_lea.vmem %s49, 674 [#allocation2]
    %v1146 = vld [vmem:[%s1145] ss:$2 sm:$0xff]
    %s1147 = scalar_lea.vmem %s49, 722 [#allocation2]
    %v1148 = vld [vmem:[%s1147] ss:$2 sm:$0xff]
    %s1149 = scalar_lea.vmem %s49, 770 [#allocation2]
    %v1150 = vld [vmem:[%s1149] ss:$2 sm:$0xff]
    %v1151 = vpack.c.bf16 %v1122, %v1120
    %v1152 = vpack.c.bf16 %v1126, %v1124
    %v1153 = vpack.c.bf16 %v1130, %v1128
    %v1154 = vpack.c.bf16 %v1134, %v1132
    %v1155 = vpack.c.bf16 %v1138, %v1136
    %v1156 = vpack.c.bf16 %v1142, %v1140
    %v1157 = vpack.c.bf16 %v1146, %v1144
    %v1158 = vpack.c.bf16 %v1150, %v1148
    %s1159 = scalar_lea.vmem %s1, 10
    %v1160 = vld [vmem:[%s1159] sm:$0x3]
    %v1162 = vsel %vm34, %v1151, 0
    %v1165 = vsel %vm34, %v1152, 0
    %v1168 = vsel %vm34, %v1153, 0
    %v1171 = vsel %vm34, %v1154, 0
    %v1174 = vsel %vm34, %v1155, 0
    %v1177 = vsel %vm34, %v1156, 0
    %v1180 = vsel %vm34, %v1157, 0
    %v1183 = vsel %vm34, %v1158, 0
    %v1186 = vsel %vm349, %v1160, 0
    %1188 = vmatprep.subr.bf16.mxu0 0
    %1189 = vmatpush1.bf16.msra.mxu0 %v1186
    %1190 = vmatprep.subr.bf16.mxu0 0
    %1191 = vmatpush1.bf16.msra.mxu0 0
    %1192 = vmatprep.subr.bf16.mxu0 0
    %1193 = vmatpush1.bf16.msra.mxu0 0
    %1194 = vmatprep.subr.bf16.mxu0 0
    %1195 = vmatpush1.bf16.msra.mxu0 0
    %1196 = vmatprep.subr.bf16.mxu0 0
    %1197 = vmatpush1.bf16.msra.mxu0 0
    %1198 = vmatprep.subr.bf16.mxu0 0
    %1199 = vmatpush1.bf16.msra.mxu0 0
    %1200 = vmatprep.subr.bf16.mxu0 0
    %1201 = vmatpush1.bf16.msra.mxu0 0
    %1202 = vmatprep.subr.bf16.mxu0 0
    %1203 = vmatpush1.bf16.msra.mxu0 0
    %1204 = vmatprep.subr.bf16.mxu0 0
    %1205 = vmatpush1.bf16.msra.mxu0 0
    %1206 = vmatprep.subr.bf16.mxu0 0
    %1207 = vmatpush1.bf16.msra.mxu0 0
    %1208 = vmatprep.subr.bf16.mxu0 0
    %1209 = vmatpush1.bf16.msra.mxu0 0
    %1210 = vmatprep.subr.bf16.mxu0 0
    %1211 = vmatpush1.bf16.msra.mxu0 0
    %1212 = vmatprep.subr.bf16.mxu0 0
    %1213 = vmatpush1.bf16.msra.mxu0 0
    %1214 = vmatprep.subr.bf16.mxu0 0
    %1215 = vmatpush1.bf16.msra.mxu0 0
    %1216 = vmatprep.subr.bf16.mxu0 0
    %1217 = vmatpush1.bf16.msra.mxu0 0
    %1218 = vmatprep.subr.bf16.mxu0 0
    %1219 = vmatpush1.bf16.msra.mxu0 0
    %1220 = vmatprep.mubr.bf16.mxu0 0
    %1221 = vmatmul.mubr.bf16.gmra.mrb[0].mxu0 %v1162
    %v1222 = vpop.f32.mrb[0].mxu0
    %v1223 = vadd.f32 0.0, %v1222
    %v1224 = vpop.f32.mrb[0].mxu0
    %v1225 = vpop.f32.mrb[0].mxu0
    %v1226 = vadd.f32 0.0, %v1225
    %v1227 = vpop.f32.mrb[0].mxu0
    %1228 = vmatprep.mubr.bf16.mxu0 0
    %1229 = vmatmul.mubr.bf16.gmra.mrb[0].mxu0 %v1165
    %v1230 = vpop.f32.mrb[0].mxu0
    %v1231 = vadd.f32 0.0, %v1230
    %v1232 = vpop.f32.mrb[0].mxu0
    %v1233 = vpop.f32.mrb[0].mxu0
    %v1234 = vadd.f32 0.0, %v1233
    %v1235 = vpop.f32.mrb[0].mxu0
    %1236 = vmatprep.mubr.bf16.mxu0 0
    %1237 = vmatmul.mubr.bf16.gmra.mrb[0].mxu0 %v1168
    %v1238 = vpop.f32.mrb[0].mxu0
    %v1239 = vadd.f32 0.0, %v1238
    %v1240 = vpop.f32.mrb[0].mxu0
    %v1241 = vpop.f32.mrb[0].mxu0
    %v1242 = vadd.f32 0.0, %v1241
    %v1243 = vpop.f32.mrb[0].mxu0
    %1244 = vmatprep.mubr.bf16.mxu0 0
    %1245 = vmatmul.mubr.bf16.gmra.mrb[0].mxu0 %v1171
    %v1246 = vpop.f32.mrb[0].mxu0
    %v1247 = vadd.f32 0.0, %v1246
    %v1248 = vpop.f32.mrb[0].mxu0
    %v1249 = vpop.f32.mrb[0].mxu0
    %v1250 = vadd.f32 0.0, %v1249
    %v1251 = vpop.f32.mrb[0].mxu0
    %1252 = vmatprep.mubr.bf16.mxu0 0
    %1253 = vmatmul.mubr.bf16.gmra.mrb[0].mxu0 %v1174
    %v1254 = vpop.f32.mrb[0].mxu0
    %v1255 = vadd.f32 0.0, %v1254
    %v1256 = vpop.f32.mrb[0].mxu0
    %v1257 = vpop.f32.mrb[0].mxu0
    %v1258 = vadd.f32 0.0, %v1257
    %v1259 = vpop.f32.mrb[0].mxu0
    %1260 = vmatprep.mubr.bf16.mxu0 0
    %1261 = vmatmul.mubr.bf16.gmra.mrb[0].mxu0 %v1177
    %v1262 = vpop.f32.mrb[0].mxu0
    %v1263 = vadd.f32 0.0, %v1262
    %v1264 = vpop.f32.mrb[0].mxu0
    %v1265 = vpop.f32.mrb[0].mxu0
    %v1266 = vadd.f32 0.0, %v1265
    %v1267 = vpop.f32.mrb[0].mxu0
    %1268 = vmatprep.mubr.bf16.mxu0 0
    %1269 = vmatmul.mubr.bf16.gmra.mrb[0].mxu0 %v1180
    %v1270 = vpop.f32.mrb[0].mxu0
    %v1271 = vadd.f32 0.0, %v1270
    %v1272 = vpop.f32.mrb[0].mxu0
    %v1273 = vpop.f32.mrb[0].mxu0
    %v1274 = vadd.f32 0.0, %v1273
    %v1275 = vpop.f32.mrb[0].mxu0
    %1276 = vmatprep.mubr.bf16.mxu0 0
    %1277 = vmatmul.mubr.bf16.gmra.mrb[0].mxu0 %v1183
    %v1278 = vpop.f32.mrb[0].mxu0
    %v1279 = vadd.f32 0.0, %v1278
    %v1280 = vpop.f32.mrb[0].mxu0
    %v1281 = vpop.f32.mrb[0].mxu0
    %v1282 = vadd.f32 0.0, %v1281
    %v1283 = vpop.f32.mrb[0].mxu0
    %1284 = vdwg.mxu0
    %v1285 = vadd.f32 %v1103, %v1223
    %v1286 = vadd.f32 %v1104, %v1226
    %v1287 = vadd.f32 %v1105, %v1231
    %v1288 = vadd.f32 %v1106, %v1234
    %v1289 = vadd.f32 %v1107, %v1239
    %v1290 = vadd.f32 %v1108, %v1242
    %v1291 = vadd.f32 %v1109, %v1247
    %v1292 = vadd.f32 %v1110, %v1250
    %v1293 = vadd.f32 %v1111, %v1255
    %v1294 = vadd.f32 %v1112, %v1258
    %v1295 = vadd.f32 %v1113, %v1263
    %v1296 = vadd.f32 %v1114, %v1266
    %v1297 = vadd.f32 %v1115, %v1271
    %v1298 = vadd.f32 %v1116, %v1274
    %v1299 = vadd.f32 %v1117, %v1279
    %v1300 = vadd.f32 %v1118, %v1282
    %s1301 = scalar_lea.vmem [#allocation2], 48
    %v1302 = vld [vmem:[%s1301] ss:$2 sm:$0xff]
    %s1303 = scalar_lea.vmem %s1301, 48 [#allocation2]
    %v1304 = vld [vmem:[%s1303] ss:$2 sm:$0xff]
    %s1305 = scalar_lea.vmem %s1301, 96 [#allocation2]
    %v1306 = vld [vmem:[%s1305] ss:$2 sm:$0xff]
    %s1307 = scalar_lea.vmem %s1301, 144 [#allocation2]
    %v1308 = vld [vmem:[%s1307] ss:$2 sm:$0xff]
    %s1309 = scalar_lea.vmem %s1301, 192 [#allocation2]
    %v1310 = vld [vmem:[%s1309] ss:$2 sm:$0xff]
    %s1311 = scalar_lea.vmem %s1301, 240 [#allocation2]
    %v1312 = vld [vmem:[%s1311] ss:$2 sm:$0xff]
    %s1313 = scalar_lea.vmem %s1301, 288 [#allocation2]
    %v1314 = vld [vmem:[%s1313] ss:$2 sm:$0xff]
    %s1315 = scalar_lea.vmem %s1301, 336 [#allocation2]
    %v1316 = vld [vmem:[%s1315] ss:$2 sm:$0xff]
    %s1317 = scalar_lea.vmem %s1301, 432 [#allocation2]
    %v1318 = vld [vmem:[%s1317] ss:$2 sm:$0xff]
    %s1319 = scalar_lea.vmem %s1301, 480 [#allocation2]
    %v1320 = vld [vmem:[%s1319] ss:$2 sm:$0xff]
    %s1321 = scalar_lea.vmem %s1301, 528 [#allocation2]
    %v1322 = vld [vmem:[%s1321] ss:$2 sm:$0xff]
    %s1323 = scalar_lea.vmem %s1301, 576 [#allocation2]
    %v1324 = vld [vmem:[%s1323] ss:$2 sm:$0xff]
    %s1325 = scalar_lea.vmem %s1301, 624 [#allocation2]
    %v1326 = vld [vmem:[%s1325] ss:$2 sm:$0xff]
    %s1327 = scalar_lea.vmem %s1301, 672 [#allocation2]
    %v1328 = vld [vmem:[%s1327] ss:$2 sm:$0xff]
    %s1329 = scalar_lea.vmem %s1301, 720 [#allocation2]
    %v1330 = vld [vmem:[%s1329] ss:$2 sm:$0xff]
    %s1331 = scalar_lea.vmem %s1301, 768 [#allocation2]
    %v1332 = vld [vmem:[%s1331] ss:$2 sm:$0xff]
    %v1333 = vpack.c.bf16 %v1304, %v1302
    %v1334 = vpack.c.bf16 %v1308, %v1306
    %v1335 = vpack.c.bf16 %v1312, %v1310
    %v1336 = vpack.c.bf16 %v1316, %v1314
    %v1337 = vpack.c.bf16 %v1320, %v1318
    %v1338 = vpack.c.bf16 %v1324, %v1322
    %v1339 = vpack.c.bf16 %v1328, %v1326
    %v1340 = vpack.c.bf16 %v1332, %v1330
    %s1341 = scalar_lea.vmem %s1, 12
    %v1342 = vld [vmem:[%s1341] sm:$0x3]
    %v1344 = vsel %vm34, %v1333, 0
    %v1347 = vsel %vm34, %v1334, 0
    %v1350 = vsel %vm34, %v1335, 0
    %v1353 = vsel %vm34, %v1336, 0
    %v1356 = vsel %vm34, %v1337, 0
    %v1359 = vsel %vm34, %v1338, 0
    %v1362 = vsel %vm34, %v1339, 0
    %v1365 = vsel %vm34, %v1340, 0
    %v1368 = vsel %vm349, %v1342, 0
    %1370 = vmatprep.subr.bf16.mxu0 0
    %1371 = vmatpush1.bf16.msra.mxu0 %v1368
    %1372 = vmatprep.subr.bf16.mxu0 0
    %1373 = vmatpush1.bf16.msra.mxu0 0
    %1374 = vmatprep.subr.bf16.mxu0 0
    %1375 = vmatpush1.bf16.msra.mxu0 0
    %1376 = vmatprep.subr.bf16.mxu0 0
    %1377 = vmatpush1.bf16.msra.mxu0 0
    %1378 = vmatprep.subr.bf16.mxu0 0
    %1379 = vmatpush1.bf16.msra.mxu0 0
    %1380 = vmatprep.subr.bf16.mxu0 0
    %1381 = vmatpush1.bf16.msra.mxu0 0
    %1382 = vmatprep.subr.bf16.mxu0 0
    %1383 = vmatpush1.bf16.msra.mxu0 0
    %1384 = vmatprep.subr.bf16.mxu0 0
    %1385 = vmatpush1.bf16.msra.mxu0 0
    %1386 = vmatprep.subr.bf16.mxu0 0
    %1387 = vmatpush1.bf16.msra.mxu0 0
    %1388 = vmatprep.subr.bf16.mxu0 0
    %1389 = vmatpush1.bf16.msra.mxu0 0
    %1390 = vmatprep.subr.bf16.mxu0 0
    %1391 = vmatpush1.bf16.msra.mxu0 0
    %1392 = vmatprep.subr.bf16.mxu0 0
    %1393 = vmatpush1.bf16.msra.mxu0 0
    %1394 = vmatprep.subr.bf16.mxu0 0
    %1395 = vmatpush1.bf16.msra.mxu0 0
    %1396 = vmatprep.subr.bf16.mxu0 0
    %1397 = vmatpush1.bf16.msra.mxu0 0
    %1398 = vmatprep.subr.bf16.mxu0 0
    %1399 = vmatpush1.bf16.msra.mxu0 0
    %1400 = vmatprep.subr.bf16.mxu0 0
    %1401 = vmatpush1.bf16.msra.mxu0 0
    %1402 = vmatprep.mubr.bf16.mxu0 0
    %1403 = vmatmul.mubr.bf16.gmra.mrb[0].mxu0 %v1344
    %v1404 = vpop.f32.mrb[0].mxu0
    %v1405 = vadd.f32 0.0, %v1404
    %v1406 = vpop.f32.mrb[0].mxu0
    %v1407 = vpop.f32.mrb[0].mxu0
    %v1408 = vadd.f32 0.0, %v1407
    %v1409 = vpop.f32.mrb[0].mxu0
    %1410 = vmatprep.mubr.bf16.mxu0 0
    %1411 = vmatmul.mubr.bf16.gmra.mrb[0].mxu0 %v1347
    %v1412 = vpop.f32.mrb[0].mxu0
    %v1413 = vadd.f32 0.0, %v1412
    %v1414 = vpop.f32.mrb[0].mxu0
    %v1415 = vpop.f32.mrb[0].mxu0
    %v1416 = vadd.f32 0.0, %v1415
    %v1417 = vpop.f32.mrb[0].mxu0
    %1418 = vmatprep.mubr.bf16.mxu0 0
    %1419 = vmatmul.mubr.bf16.gmra.mrb[0].mxu0 %v1350
    %v1420 = vpop.f32.mrb[0].mxu0
    %v1421 = vadd.f32 0.0, %v1420
    %v1422 = vpop.f32.mrb[0].mxu0
    %v1423 = vpop.f32.mrb[0].mxu0
    %v1424 = vadd.f32 0.0, %v1423
    %v1425 = vpop.f32.mrb[0].mxu0
    %1426 = vmatprep.mubr.bf16.mxu0 0
    %1427 = vmatmul.mubr.bf16.gmra.mrb[0].mxu0 %v1353
    %v1428 = vpop.f32.mrb[0].mxu0
    %v1429 = vadd.f32 0.0, %v1428
    %v1430 = vpop.f32.mrb[0].mxu0
    %v1431 = vpop.f32.mrb[0].mxu0
    %v1432 = vadd.f32 0.0, %v1431
    %v1433 = vpop.f32.mrb[0].mxu0
    %1434 = vmatprep.mubr.bf16.mxu0 0
    %1435 = vmatmul.mubr.bf16.gmra.mrb[0].mxu0 %v1356
    %v1436 = vpop.f32.mrb[0].mxu0
    %v1437 = vadd.f32 0.0, %v1436
    %v1438 = vpop.f32.mrb[0].mxu0
    %v1439 = vpop.f32.mrb[0].mxu0
    %v1440 = vadd.f32 0.0, %v1439
    %v1441 = vpop.f32.mrb[0].mxu0
    %1442 = vmatprep.mubr.bf16.mxu0 0
    %1443 = vmatmul.mubr.bf16.gmra.mrb[0].mxu0 %v1359
    %v1444 = vpop.f32.mrb[0].mxu0
    %v1445 = vadd.f32 0.0, %v1444
    %v1446 = vpop.f32.mrb[0].mxu0
    %v1447 = vpop.f32.mrb[0].mxu0
    %v1448 = vadd.f32 0.0, %v1447
    %v1449 = vpop.f32.mrb[0].mxu0
    %1450 = vmatprep.mubr.bf16.mxu0 0
    %1451 = vmatmul.mubr.bf16.gmra.mrb[0].mxu0 %v1362
    %v1452 = vpop.f32.mrb[0].mxu0
    %v1453 = vadd.f32 0.0, %v1452
    %v1454 = vpop.f32.mrb[0].mxu0
    %v1455 = vpop.f32.mrb[0].mxu0
    %v1456 = vadd.f32 0.0, %v1455
    %v1457 = vpop.f32.mrb[0].mxu0
    %1458 = vmatprep.mubr.bf16.mxu0 0
    %1459 = vmatmul.mubr.bf16.gmra.mrb[0].mxu0 %v1365
    %v1460 = vpop.f32.mrb[0].mxu0
    %v1461 = vadd.f32 0.0, %v1460
    %v1462 = vpop.f32.mrb[0].mxu0
    %v1463 = vpop.f32.mrb[0].mxu0
    %v1464 = vadd.f32 0.0, %v1463
    %v1465 = vpop.f32.mrb[0].mxu0
    %1466 = vdwg.mxu0
    %v1467 = vadd.f32 %v1285, %v1405
    %v1468 = vadd.f32 %v1286, %v1408
    %v1469 = vadd.f32 %v1287, %v1413
    %v1470 = vadd.f32 %v1288, %v1416
    %v1471 = vadd.f32 %v1289, %v1421
    %v1472 = vadd.f32 %v1290, %v1424
    %v1473 = vadd.f32 %v1291, %v1429
    %v1474 = vadd.f32 %v1292, %v1432
    %v1475 = vadd.f32 %v1293, %v1437
    %v1476 = vadd.f32 %v1294, %v1440
    %v1477 = vadd.f32 %v1295, %v1445
    %v1478 = vadd.f32 %v1296, %v1448
    %v1479 = vadd.f32 %v1297, %v1453
    %v1480 = vadd.f32 %v1298, %v1456
    %v1481 = vadd.f32 %v1299, %v1461
    %v1482 = vadd.f32 %v1300, %v1464
    %s1483 = scalar_lea.vmem %s1301, 1 [#allocation2]
    %v1484 = vld [vmem:[%s1483] ss:$2 sm:$0xff]
    %s1485 = scalar_lea.vmem %s1301, 49 [#allocation2]
    %v1486 = vld [vmem:[%s1485] ss:$2 sm:$0xff]
    %s1487 = scalar_lea.vmem %s1301, 97 [#allocation2]
    %v1488 = vld [vmem:[%s1487] ss:$2 sm:$0xff]
    %s1489 = scalar_lea.vmem %s1301, 145 [#allocation2]
    %v1490 = vld [vmem:[%s1489] ss:$2 sm:$0xff]
    %s1491 = scalar_lea.vmem %s1301, 193 [#allocation2]
    %v1492 = vld [vmem:[%s1491] ss:$2 sm:$0xff]
    %s1493 = scalar_lea.vmem %s1301, 241 [#allocation2]
    %v1494 = vld [vmem:[%s1493] ss:$2 sm:$0xff]
    %s1495 = scalar_lea.vmem %s1301, 289 [#allocation2]
    %v1496 = vld [vmem:[%s1495] ss:$2 sm:$0xff]
    %s1497 = scalar_lea.vmem %s1301, 337 [#allocation2]
    %v1498 = vld [vmem:[%s1497] ss:$2 sm:$0xff]
    %s1499 = scalar_lea.vmem %s1301, 433 [#allocation2]
    %v1500 = vld [vmem:[%s1499] ss:$2 sm:$0xff]
    %s1501 = scalar_lea.vmem %s1301, 481 [#allocation2]
    %v1502 = vld [vmem:[%s1501] ss:$2 sm:$0xff]
    %s1503 = scalar_lea.vmem %s1301, 529 [#allocation2]
    %v1504 = vld [vmem:[%s1503] ss:$2 sm:$0xff]
    %s1505 = scalar_lea.vmem %s1301, 577 [#allocation2]
    %v1506 = vld [vmem:[%s1505] ss:$2 sm:$0xff]
    %s1507 = scalar_lea.vmem %s1301, 625 [#allocation2]
    %v1508 = vld [vmem:[%s1507] ss:$2 sm:$0xff]
    %s1509 = scalar_lea.vmem %s1301, 673 [#allocation2]
    %v1510 = vld [vmem:[%s1509] ss:$2 sm:$0xff]
    %s1511 = scalar_lea.vmem %s1301, 721 [#allocation2]
    %v1512 = vld [vmem:[%s1511] ss:$2 sm:$0xff]
    %s1513 = scalar_lea.vmem %s1301, 769 [#allocation2]
    %v1514 = vld [vmem:[%s1513] ss:$2 sm:$0xff]
    %v1515 = vpack.c.bf16 %v1486, %v1484
    %v1516 = vpack.c.bf16 %v1490, %v1488
    %v1517 = vpack.c.bf16 %v1494, %v1492
    %v1518 = vpack.c.bf16 %v1498, %v1496
    %v1519 = vpack.c.bf16 %v1502, %v1500
    %v1520 = vpack.c.bf16 %v1506, %v1504
    %v1521 = vpack.c.bf16 %v1510, %v1508
    %v1522 = vpack.c.bf16 %v1514, %v1512
    %s1523 = scalar_lea.vmem %s1, 14
    %v1524 = vld [vmem:[%s1523] sm:$0x3]
    %v1526 = vsel %vm34, %v1515, 0
    %v1529 = vsel %vm34, %v1516, 0
    %v1532 = vsel %vm34, %v1517, 0
    %v1535 = vsel %vm34, %v1518, 0
    %v1538 = vsel %vm34, %v1519, 0
    %v1541 = vsel %vm34, %v1520, 0
    %v1544 = vsel %vm34, %v1521, 0
    %v1547 = vsel %vm34, %v1522, 0
    %v1550 = vsel %vm349, %v1524, 0
    %1552 = vmatprep.subr.bf16.mxu0 0
    %1553 = vmatpush1.bf16.msra.mxu0 %v1550
    %1554 = vmatprep.subr.bf16.mxu0 0
    %1555 = vmatpush1.bf16.msra.mxu0 0
    %1556 = vmatprep.subr.bf16.mxu0 0
    %1557 = vmatpush1.bf16.msra.mxu0 0
    %1558 = vmatprep.subr.bf16.mxu0 0
    %1559 = vmatpush1.bf16.msra.mxu0 0
    %1560 = vmatprep.subr.bf16.mxu0 0
    %1561 = vmatpush1.bf16.msra.mxu0 0
    %1562 = vmatprep.subr.bf16.mxu0 0
    %1563 = vmatpush1.bf16.msra.mxu0 0
    %1564 = vmatprep.subr.bf16.mxu0 0
    %1565 = vmatpush1.bf16.msra.mxu0 0
    %1566 = vmatprep.subr.bf16.mxu0 0
    %1567 = vmatpush1.bf16.msra.mxu0 0
    %1568 = vmatprep.subr.bf16.mxu0 0
    %1569 = vmatpush1.bf16.msra.mxu0 0
    %1570 = vmatprep.subr.bf16.mxu0 0
    %1571 = vmatpush1.bf16.msra.mxu0 0
    %1572 = vmatprep.subr.bf16.mxu0 0
    %1573 = vmatpush1.bf16.msra.mxu0 0
    %1574 = vmatprep.subr.bf16.mxu0 0
    %1575 = vmatpush1.bf16.msra.mxu0 0
    %1576 = vmatprep.subr.bf16.mxu0 0
    %1577 = vmatpush1.bf16.msra.mxu0 0
    %1578 = vmatprep.subr.bf16.mxu0 0
    %1579 = vmatpush1.bf16.msra.mxu0 0
    %1580 = vmatprep.subr.bf16.mxu0 0
    %1581 = vmatpush1.bf16.msra.mxu0 0
    %1582 = vmatprep.subr.bf16.mxu0 0
    %1583 = vmatpush1.bf16.msra.mxu0 0
    %1584 = vmatprep.mubr.bf16.mxu0 0
    %1585 = vmatmul.mubr.bf16.gmra.mrb[0].mxu0 %v1526
    %v1586 = vpop.f32.mrb[0].mxu0
    %v1587 = vadd.f32 0.0, %v1586
    %v1588 = vpop.f32.mrb[0].mxu0
    %v1589 = vpop.f32.mrb[0].mxu0
    %v1590 = vadd.f32 0.0, %v1589
    %v1591 = vpop.f32.mrb[0].mxu0
    %1592 = vmatprep.mubr.bf16.mxu0 0
    %1593 = vmatmul.mubr.bf16.gmra.mrb[0].mxu0 %v1529
    %v1594 = vpop.f32.mrb[0].mxu0
    %v1595 = vadd.f32 0.0, %v1594
    %v1596 = vpop.f32.mrb[0].mxu0
    %v1597 = vpop.f32.mrb[0].mxu0
    %v1598 = vadd.f32 0.0, %v1597
    %v1599 = vpop.f32.mrb[0].mxu0
    %1600 = vmatprep.mubr.bf16.mxu0 0
    %1601 = vmatmul.mubr.bf16.gmra.mrb[0].mxu0 %v1532
    %v1602 = vpop.f32.mrb[0].mxu0
    %v1603 = vadd.f32 0.0, %v1602
    %v1604 = vpop.f32.mrb[0].mxu0
    %v1605 = vpop.f32.mrb[0].mxu0
    %v1606 = vadd.f32 0.0, %v1605
    %v1607 = vpop.f32.mrb[0].mxu0
    %1608 = vmatprep.mubr.bf16.mxu0 0
    %1609 = vmatmul.mubr.bf16.gmra.mrb[0].mxu0 %v1535
    %v1610 = vpop.f32.mrb[0].mxu0
    %v1611 = vadd.f32 0.0, %v1610
    %v1612 = vpop.f32.mrb[0].mxu0
    %v1613 = vpop.f32.mrb[0].mxu0
    %v1614 = vadd.f32 0.0, %v1613
    %v1615 = vpop.f32.mrb[0].mxu0
    %1616 = vmatprep.mubr.bf16.mxu0 0
    %1617 = vmatmul.mubr.bf16.gmra.mrb[0].mxu0 %v1538
    %v1618 = vpop.f32.mrb[0].mxu0
    %v1619 = vadd.f32 0.0, %v1618
    %v1620 = vpop.f32.mrb[0].mxu0
    %v1621 = vpop.f32.mrb[0].mxu0
    %v1622 = vadd.f32 0.0, %v1621
    %v1623 = vpop.f32.mrb[0].mxu0
    %1624 = vmatprep.mubr.bf16.mxu0 0
    %1625 = vmatmul.mubr.bf16.gmra.mrb[0].mxu0 %v1541
    %v1626 = vpop.f32.mrb[0].mxu0
    %v1627 = vadd.f32 0.0, %v1626
    %v1628 = vpop.f32.mrb[0].mxu0
    %v1629 = vpop.f32.mrb[0].mxu0
    %v1630 = vadd.f32 0.0, %v1629
    %v1631 = vpop.f32.mrb[0].mxu0
    %1632 = vmatprep.mubr.bf16.mxu0 0
    %1633 = vmatmul.mubr.bf16.gmra.mrb[0].mxu0 %v1544
    %v1634 = vpop.f32.mrb[0].mxu0
    %v1635 = vadd.f32 0.0, %v1634
    %v1636 = vpop.f32.mrb[0].mxu0
    %v1637 = vpop.f32.mrb[0].mxu0
    %v1638 = vadd.f32 0.0, %v1637
    %v1639 = vpop.f32.mrb[0].mxu0
    %1640 = vmatprep.mubr.bf16.mxu0 0
    %1641 = vmatmul.mubr.bf16.gmra.mrb[0].mxu0 %v1547
    %v1642 = vpop.f32.mrb[0].mxu0
    %v1643 = vadd.f32 0.0, %v1642
    %v1644 = vpop.f32.mrb[0].mxu0
    %v1645 = vpop.f32.mrb[0].mxu0
    %v1646 = vadd.f32 0.0, %v1645
    %v1647 = vpop.f32.mrb[0].mxu0
    %1648 = vdwg.mxu0
    %v1649 = vadd.f32 %v1467, %v1587
    %v1650 = vadd.f32 %v1468, %v1590
    %v1651 = vadd.f32 %v1469, %v1595
    %v1652 = vadd.f32 %v1470, %v1598
    %v1653 = vadd.f32 %v1471, %v1603
    %v1654 = vadd.f32 %v1472, %v1606
    %v1655 = vadd.f32 %v1473, %v1611
    %v1656 = vadd.f32 %v1474, %v1614
    %v1657 = vadd.f32 %v1475, %v1619
    %v1658 = vadd.f32 %v1476, %v1622
    %v1659 = vadd.f32 %v1477, %v1627
    %v1660 = vadd.f32 %v1478, %v1630
    %v1661 = vadd.f32 %v1479, %v1635
    %v1662 = vadd.f32 %v1480, %v1638
    %v1663 = vadd.f32 %v1481, %v1643
    %v1664 = vadd.f32 %v1482, %v1646
    %s1665 = scalar_lea.vmem %s1301, 2 [#allocation2]
    %v1666 = vld [vmem:[%s1665] ss:$2 sm:$0xff]
    %s1667 = scalar_lea.vmem %s1301, 50 [#allocation2]
    %v1668 = vld [vmem:[%s1667] ss:$2 sm:$0xff]
    %s1669 = scalar_lea.vmem %s1301, 98 [#allocation2]
    %v1670 = vld [vmem:[%s1669] ss:$2 sm:$0xff]
    %s1671 = scalar_lea.vmem %s1301, 146 [#allocation2]
    %v1672 = vld [vmem:[%s1671] ss:$2 sm:$0xff]
    %s1673 = scalar_lea.vmem %s1301, 194 [#allocation2]
    %v1674 = vld [vmem:[%s1673] ss:$2 sm:$0xff]
    %s1675 = scalar_lea.vmem %s1301, 242 [#allocation2]
    %v1676 = vld [vmem:[%s1675] ss:$2 sm:$0xff]
    %s1677 = scalar_lea.vmem %s1301, 290 [#allocation2]
    %v1678 = vld [vmem:[%s1677] ss:$2 sm:$0xff]
    %s1679 = scalar_lea.vmem %s1301, 338 [#allocation2]
    %v1680 = vld [vmem:[%s1679] ss:$2 sm:$0xff]
    %s1681 = scalar_lea.vmem %s1301, 434 [#allocation2]
    %v1682 = vld [vmem:[%s1681] ss:$2 sm:$0xff]
    %s1683 = scalar_lea.vmem %s1301, 482 [#allocation2]
    %v1684 = vld [vmem:[%s1683] ss:$2 sm:$0xff]
    %s1685 = scalar_lea.vmem %s1301, 530 [#allocation2]
    %v1686 = vld [vmem:[%s1685] ss:$2 sm:$0xff]
    %s1687 = scalar_lea.vmem %s1301, 578 [#allocation2]
    %v1688 = vld [vmem:[%s1687] ss:$2 sm:$0xff]
    %s1689 = scalar_lea.vmem %s1301, 626 [#allocation2]
    %v1690 = vld [vmem:[%s1689] ss:$2 sm:$0xff]
    %s1691 = scalar_lea.vmem %s1301, 674 [#allocation2]
    %v1692 = vld [vmem:[%s1691] ss:$2 sm:$0xff]
    %s1693 = scalar_lea.vmem %s1301, 722 [#allocation2]
    %v1694 = vld [vmem:[%s1693] ss:$2 sm:$0xff]
    %s1695 = scalar_lea.vmem %s1301, 770 [#allocation2]
    %v1696 = vld [vmem:[%s1695] ss:$2 sm:$0xff]
    %v1697 = vpack.c.bf16 %v1668, %v1666
    %v1698 = vpack.c.bf16 %v1672, %v1670
    %v1699 = vpack.c.bf16 %v1676, %v1674
    %v1700 = vpack.c.bf16 %v1680, %v1678
    %v1701 = vpack.c.bf16 %v1684, %v1682
    %v1702 = vpack.c.bf16 %v1688, %v1686
    %v1703 = vpack.c.bf16 %v1692, %v1690
    %v1704 = vpack.c.bf16 %v1696, %v1694
    %s1705 = scalar_lea.vmem %s1, 16
    %v1706 = vld [vmem:[%s1705] sm:$0x3]
    %v1708 = vsel %vm34, %v1697, 0
    %v1711 = vsel %vm34, %v1698, 0
    %v1714 = vsel %vm34, %v1699, 0
    %v1717 = vsel %vm34, %v1700, 0
    %v1720 = vsel %vm34, %v1701, 0
    %v1723 = vsel %vm34, %v1702, 0
    %v1726 = vsel %vm34, %v1703, 0
    %v1729 = vsel %vm34, %v1704, 0
    %v1732 = vsel %vm349, %v1706, 0
    %1734 = vmatprep.subr.bf16.mxu0 0
    %1735 = vmatpush1.bf16.msra.mxu0 %v1732
    %1736 = vmatprep.subr.bf16.mxu0 0
    %1737 = vmatpush1.bf16.msra.mxu0 0
    %1738 = vmatprep.subr.bf16.mxu0 0
    %1739 = vmatpush1.bf16.msra.mxu0 0
    %1740 = vmatprep.subr.bf16.mxu0 0
    %1741 = vmatpush1.bf16.msra.mxu0 0
    %1742 = vmatprep.subr.bf16.mxu0 0
    %1743 = vmatpush1.bf16.msra.mxu0 0
    %1744 = vmatprep.subr.bf16.mxu0 0
    %1745 = vmatpush1.bf16.msra.mxu0 0
    %1746 = vmatprep.subr.bf16.mxu0 0
    %1747 = vmatpush1.bf16.msra.mxu0 0
    %1748 = vmatprep.subr.bf16.mxu0 0
    %1749 = vmatpush1.bf16.msra.mxu0 0
    %1750 = vmatprep.subr.bf16.mxu0 0
    %1751 = vmatpush1.bf16.msra.mxu0 0
    %1752 = vmatprep.subr.bf16.mxu0 0
    %1753 = vmatpush1.bf16.msra.mxu0 0
    %1754 = vmatprep.subr.bf16.mxu0 0
    %1755 = vmatpush1.bf16.msra.mxu0 0
    %1756 = vmatprep.subr.bf16.mxu0 0
    %1757 = vmatpush1.bf16.msra.mxu0 0
    %1758 = vmatprep.subr.bf16.mxu0 0
    %1759 = vmatpush1.bf16.msra.mxu0 0
    %1760 = vmatprep.subr.bf16.mxu0 0
    %1761 = vmatpush1.bf16.msra.mxu0 0
    %1762 = vmatprep.subr.bf16.mxu0 0
    %1763 = vmatpush1.bf16.msra.mxu0 0
    %1764 = vmatprep.subr.bf16.mxu0 0
    %1765 = vmatpush1.bf16.msra.mxu0 0
    %1766 = vmatprep.mubr.bf16.mxu0 0
    %1767 = vmatmul.mubr.bf16.gmra.mrb[0].mxu0 %v1708
    %v1768 = vpop.f32.mrb[0].mxu0
    %v1769 = vadd.f32 0.0, %v1768
    %v1770 = vpop.f32.mrb[0].mxu0
    %v1771 = vpop.f32.mrb[0].mxu0
    %v1772 = vadd.f32 0.0, %v1771
    %v1773 = vpop.f32.mrb[0].mxu0
    %1774 = vmatprep.mubr.bf16.mxu0 0
    %1775 = vmatmul.mubr.bf16.gmra.mrb[0].mxu0 %v1711
    %v1776 = vpop.f32.mrb[0].mxu0
    %v1777 = vadd.f32 0.0, %v1776
    %v1778 = vpop.f32.mrb[0].mxu0
    %v1779 = vpop.f32.mrb[0].mxu0
    %v1780 = vadd.f32 0.0, %v1779
    %v1781 = vpop.f32.mrb[0].mxu0
    %1782 = vmatprep.mubr.bf16.mxu0 0
    %1783 = vmatmul.mubr.bf16.gmra.mrb[0].mxu0 %v1714
    %v1784 = vpop.f32.mrb[0].mxu0
    %v1785 = vadd.f32 0.0, %v1784
    %v1786 = vpop.f32.mrb[0].mxu0
    %v1787 = vpop.f32.mrb[0].mxu0
    %v1788 = vadd.f32 0.0, %v1787
    %v1789 = vpop.f32.mrb[0].mxu0
    %1790 = vmatprep.mubr.bf16.mxu0 0
    %1791 = vmatmul.mubr.bf16.gmra.mrb[0].mxu0 %v1717
    %v1792 = vpop.f32.mrb[0].mxu0
    %v1793 = vadd.f32 0.0, %v1792
    %v1794 = vpop.f32.mrb[0].mxu0
    %v1795 = vpop.f32.mrb[0].mxu0
    %v1796 = vadd.f32 0.0, %v1795
    %v1797 = vpop.f32.mrb[0].mxu0
    %1798 = vmatprep.mubr.bf16.mxu0 0
    %1799 = vmatmul.mubr.bf16.gmra.mrb[0].mxu0 %v1720
    %v1800 = vpop.f32.mrb[0].mxu0
    %v1801 = vadd.f32 0.0, %v1800
    %v1802 = vpop.f32.mrb[0].mxu0
    %v1803 = vpop.f32.mrb[0].mxu0
    %v1804 = vadd.f32 0.0, %v1803
    %v1805 = vpop.f32.mrb[0].mxu0
    %1806 = vmatprep.mubr.bf16.mxu0 0
    %1807 = vmatmul.mubr.bf16.gmra.mrb[0].mxu0 %v1723
    %v1808 = vpop.f32.mrb[0].mxu0
    %v1809 = vadd.f32 0.0, %v1808
    %v1810 = vpop.f32.mrb[0].mxu0
    %v1811 = vpop.f32.mrb[0].mxu0
    %v1812 = vadd.f32 0.0, %v1811
    %v1813 = vpop.f32.mrb[0].mxu0
    %1814 = vmatprep.mubr.bf16.mxu0 0
    %1815 = vmatmul.mubr.bf16.gmra.mrb[0].mxu0 %v1726
    %v1816 = vpop.f32.mrb[0].mxu0
    %v1817 = vadd.f32 0.0, %v1816
    %v1818 = vpop.f32.mrb[0].mxu0
    %v1819 = vpop.f32.mrb[0].mxu0
    %v1820 = vadd.f32 0.0, %v1819
    %v1821 = vpop.f32.mrb[0].mxu0
    %1822 = vmatprep.mubr.bf16.mxu0 0
    %1823 = vmatmul.mubr.bf16.gmra.mrb[0].mxu0 %v1729
    %v1824 = vpop.f32.mrb[0].mxu0
    %v1825 = vadd.f32 0.0, %v1824
    %v1826 = vpop.f32.mrb[0].mxu0
    %v1827 = vpop.f32.mrb[0].mxu0
    %v1828 = vadd.f32 0.0, %v1827
    %v1829 = vpop.f32.mrb[0].mxu0
    %1830 = vdwg.mxu0
    %v1831 = vadd.f32 %v1649, %v1769
    %v1832 = vadd.f32 %v1650, %v1772
    %v1833 = vadd.f32 %v1651, %v1777
    %v1834 = vadd.f32 %v1652, %v1780
    %v1835 = vadd.f32 %v1653, %v1785
    %v1836 = vadd.f32 %v1654, %v1788
    %v1837 = vadd.f32 %v1655, %v1793
    %v1838 = vadd.f32 %v1656, %v1796
    %v1839 = vadd.f32 %v1657, %v1801
    %v1840 = vadd.f32 %v1658, %v1804
    %v1841 = vadd.f32 %v1659, %v1809
    %v1842 = vadd.f32 %v1660, %v1812
    %v1843 = vadd.f32 %v1661, %v1817
    %v1844 = vadd.f32 %v1662, %v1820
    %v1845 = vadd.f32 %v1663, %v1825
    %v1846 = vadd.f32 %v1664, %v1828
    %v1847 = vld [vmem:[%s2] sm:$0x1]
    %v1848 = vld [vmem:[%s3] sm:$0x1]
    %vm1849 = vcmask 64512
    %v1850 = vsel %vm1849, %v1831, 0.0
    %v1851 = vsel %vm1849, %v1832, 0.0
    %v1852 = vadd.f32 %v1850, %v1851
    %v1853 = vsel %vm1849, %v1833, 0.0
    %v1854 = vadd.f32 %v1852, %v1853
    %v1855 = vsel %vm1849, %v1834, 0.0
    %v1856 = vadd.f32 %v1854, %v1855
    %v1857 = vsel %vm1849, %v1835, 0.0
    %v1858 = vadd.f32 %v1856, %v1857
    %v1859 = vsel %vm1849, %v1836, 0.0
    %v1860 = vadd.f32 %v1858, %v1859
    %v1861 = vsel %vm1849, %v1837, 0.0
    %v1862 = vadd.f32 %v1860, %v1861
    %v1863 = vsel %vm1849, %v1838, 0.0
    %v1864 = vadd.f32 %v1862, %v1863
    %v1865 = vsel %vm1849, %v1839, 0.0
    %v1866 = vadd.f32 %v1864, %v1865
    %v1867 = vsel %vm1849, %v1840, 0.0
    %v1868 = vadd.f32 %v1866, %v1867
    %v1869 = vsel %vm1849, %v1841, 0.0
    %v1870 = vadd.f32 %v1868, %v1869
    %v1871 = vsel %vm1849, %v1842, 0.0
    %v1872 = vadd.f32 %v1870, %v1871
    %v1873 = vsel %vm1849, %v1843, 0.0
    %v1874 = vadd.f32 %v1872, %v1873
    %v1875 = vsel %vm1849, %v1844, 0.0
    %v1876 = vadd.f32 %v1874, %v1875
    %v1877 = vsel %vm1849, %v1845, 0.0
    %v1878 = vadd.f32 %v1876, %v1877
    %v1879 = vsel %vm1849, %v1846, 0.0
    %v1880 = vadd.f32 %v1878, %v1879
    %v1881 = vrot.slane %v1880, 4
    %v1882 = vadd.f32 %v1880, %v1881
    %v1883 = vrot.slane %v1882, 2
    %v1884 = vadd.f32 %v1882, %v1883
    %v1885 = vrot.slane %v1884, 1
    %v1886 = vadd.f32 %v1884, %v1885
    %v1887 = vmul.f32 %v1831, %v1831
    %v1888 = vmul.f32 %v1832, %v1832
    %v1889 = vmul.f32 %v1833, %v1833
    %v1890 = vmul.f32 %v1834, %v1834
    %v1891 = vmul.f32 %v1835, %v1835
    %v1892 = vmul.f32 %v1836, %v1836
    %v1893 = vmul.f32 %v1837, %v1837
    %v1894 = vmul.f32 %v1838, %v1838
    %v1895 = vmul.f32 %v1839, %v1839
    %v1896 = vmul.f32 %v1840, %v1840
    %v1897 = vmul.f32 %v1841, %v1841
    %v1898 = vmul.f32 %v1842, %v1842
    %v1899 = vmul.f32 %v1843, %v1843
    %v1900 = vmul.f32 %v1844, %v1844
    %v1901 = vmul.f32 %v1845, %v1845
    %v1902 = vmul.f32 %v1846, %v1846
    %v1903 = vsel %vm1849, %v1887, 0.0
    %v1904 = vsel %vm1849, %v1888, 0.0
    %v1905 = vadd.f32 %v1903, %v1904
    %v1906 = vsel %vm1849, %v1889, 0.0
    %v1907 = vadd.f32 %v1905, %v1906
    %v1908 = vsel %vm1849, %v1890, 0.0
    %v1909 = vadd.f32 %v1907, %v1908
    %v1910 = vsel %vm1849, %v1891, 0.0
    %v1911 = vadd.f32 %v1909, %v1910
    %v1912 = vsel %vm1849, %v1892, 0.0
    %v1913 = vadd.f32 %v1911, %v1912
    %v1914 = vsel %vm1849, %v1893, 0.0
    %v1915 = vadd.f32 %v1913, %v1914
    %v1916 = vsel %vm1849, %v1894, 0.0
    %v1917 = vadd.f32 %v1915, %v1916
    %v1918 = vsel %vm1849, %v1895, 0.0
    %v1919 = vadd.f32 %v1917, %v1918
    %v1920 = vsel %vm1849, %v1896, 0.0
    %v1921 = vadd.f32 %v1919, %v1920
    %v1922 = vsel %vm1849, %v1897, 0.0
    %v1923 = vadd.f32 %v1921, %v1922
    %v1924 = vsel %vm1849, %v1898, 0.0
    %v1925 = vadd.f32 %v1923, %v1924
    %v1926 = vsel %vm1849, %v1899, 0.0
    %v1927 = vadd.f32 %v1925, %v1926
    %v1928 = vsel %vm1849, %v1900, 0.0
    %v1929 = vadd.f32 %v1927, %v1928
    %v1930 = vsel %vm1849, %v1901, 0.0
    %v1931 = vadd.f32 %v1929, %v1930
    %v1932 = vsel %vm1849, %v1902, 0.0
    %v1933 = vadd.f32 %v1931, %v1932
    %v1934 = vrot.slane %v1933, 4
    %v1935 = vadd.f32 %v1933, %v1934
    %v1936 = vrot.slane %v1935, 2
    %v1937 = vadd.f32 %v1935, %v1936
    %v1938 = vrot.slane %v1937, 1
    %v1939 = vadd.f32 %v1937, %v1938
    %v1940 = vmul.f32 %v1886, 0.0078125
    %v1941 = vmul.f32 %v1939, 0.0078125
    %v1942 = vmul.f32 %v1940, %v1940
    %v1943 = vsub.f32 %v1941, %v1942
    %v1944 = vmax.f32 %v1943, 0.0
    %v1945 = vsub.f32 %v1831, %v1940
    %v1946 = vsub.f32 %v1832, %v1940
    %v1947 = vsub.f32 %v1833, %v1940
    %v1948 = vsub.f32 %v1834, %v1940
    %v1949 = vsub.f32 %v1835, %v1940
    %v1950 = vsub.f32 %v1836, %v1940
    %v1951 = vsub.f32 %v1837, %v1940
    %v1952 = vsub.f32 %v1838, %v1940
    %v1953 = vsub.f32 %v1839, %v1940
    %v1954 = vsub.f32 %v1840, %v1940
    %v1955 = vsub.f32 %v1841, %v1940
    %v1956 = vsub.f32 %v1842, %v1940
    %v1957 = vsub.f32 %v1843, %v1940
    %v1958 = vsub.f32 %v1844, %v1940
    %v1959 = vsub.f32 %v1845, %v1940
    %v1960 = vsub.f32 %v1846, %v1940
    %v1961 = vadd.f32 %v1944, 1e-05
    %v1962 = vrsqrt.pop %v1961
    %v1963 = vmul.f32 %v1945, %v1962
    %v1964 = vmul.f32 %v1946, %v1962
    %v1965 = vmul.f32 %v1947, %v1962
    %v1966 = vmul.f32 %v1948, %v1962
    %v1967 = vmul.f32 %v1949, %v1962
    %v1968 = vmul.f32 %v1950, %v1962
    %v1969 = vmul.f32 %v1951, %v1962
    %v1970 = vmul.f32 %v1952, %v1962
    %v1971 = vmul.f32 %v1953, %v1962
    %v1972 = vmul.f32 %v1954, %v1962
    %v1973 = vmul.f32 %v1955, %v1962
    %v1974 = vmul.f32 %v1956, %v1962
    %v1975 = vmul.f32 %v1957, %v1962
    %v1976 = vmul.f32 %v1958, %v1962
    %v1977 = vmul.f32 %v1959, %v1962
    %v1978 = vmul.f32 %v1960, %v1962
    %v1980 = vlaneseq
    %v1981 = vshrl.u32 %v1980, 7
    %v1982 = vsub.s32 0, %v1981
    %v1983 = vrot.slane %v1847, %v1982
    %v1985 = vmul.f32 %v1963, %v1983
    %v1986 = vmul.f32 %v1964, %v1983
    %v1987 = vmul.f32 %v1965, %v1983
    %v1988 = vmul.f32 %v1966, %v1983
    %v1989 = vmul.f32 %v1967, %v1983
    %v1990 = vmul.f32 %v1968, %v1983
    %v1991 = vmul.f32 %v1969, %v1983
    %v1992 = vmul.f32 %v1970, %v1983
    %v1993 = vmul.f32 %v1971, %v1983
    %v1994 = vmul.f32 %v1972, %v1983
    %v1995 = vmul.f32 %v1973, %v1983
    %v1996 = vmul.f32 %v1974, %v1983
    %v1997 = vmul.f32 %v1975, %v1983
    %v1998 = vmul.f32 %v1976, %v1983
    %v1999 = vmul.f32 %v1977, %v1983
    %v2000 = vmul.f32 %v1978, %v1983
    %v2002 = vlaneseq
    %v2003 = vshrl.u32 %v2002, 7
    %v2004 = vsub.s32 0, %v2003
    %v2005 = vrot.slane %v1848, %v2004
    %v2007 = vadd.f32 %v1985, %v2005
    %v2008 = vadd.f32 %v1986, %v2005
    %v2009 = vadd.f32 %v1987, %v2005
    %v2010 = vadd.f32 %v1988, %v2005
    %v2011 = vadd.f32 %v1989, %v2005
    %v2012 = vadd.f32 %v1990, %v2005
    %v2013 = vadd.f32 %v1991, %v2005
    %v2014 = vadd.f32 %v1992, %v2005
    %v2015 = vadd.f32 %v1993, %v2005
    %v2016 = vadd.f32 %v1994, %v2005
    %v2017 = vadd.f32 %v1995, %v2005
    %v2018 = vadd.f32 %v1996, %v2005
    %v2019 = vadd.f32 %v1997, %v2005
    %v2020 = vadd.f32 %v1998, %v2005
    %v2021 = vadd.f32 %v1999, %v2005
    %v2022 = vadd.f32 %v2000, %v2005
    %v2023 = vmax.f32 %v2007, 0.0
    %v2024 = vmax.f32 %v2008, 0.0
    %v2025 = vmax.f32 %v2009, 0.0
    %v2026 = vmax.f32 %v2010, 0.0
    %v2027 = vmax.f32 %v2011, 0.0
    %v2028 = vmax.f32 %v2012, 0.0
    %v2029 = vmax.f32 %v2013, 0.0
    %v2030 = vmax.f32 %v2014, 0.0
    %v2031 = vmax.f32 %v2015, 0.0
    %v2032 = vmax.f32 %v2016, 0.0
    %v2033 = vmax.f32 %v2017, 0.0
    %v2034 = vmax.f32 %v2018, 0.0
    %v2035 = vmax.f32 %v2019, 0.0
    %v2036 = vmax.f32 %v2020, 0.0
    %v2037 = vmax.f32 %v2021, 0.0
    %v2038 = vmax.f32 %v2022, 0.0
    %2039 = vst.msk [vmem:[#allocation3] sm:$0xff] %vm1849, 0.0
    %vm2040 = vcmask 58368
    %2041 = vst.msk [vmem:[#allocation3 + $0x8] sm:$0x3] %vm2040, 0.0
    %2042 = vst.msk [vmem:[#allocation3 + $0xa0] sm:$0xff] %vm1849, 0.0
    %2043 = vst.msk [vmem:[#allocation3 + $0xa8] sm:$0x3] %vm2040, 0.0
    %s2044 = scalar_lea.vmem [#allocation3], 144
    %2045 = vst.msk [vmem:[%s2044] sm:$0xff] %vm1849, 0.0
    %2046 = vst.msk [vmem:[%s2044 + $0x8] sm:$0x3] %vm2040, 0.0
    %2047 = vst.msk [vmem:[%s2044 + $0xa0] sm:$0xff] %vm1849, 0.0
    %2048 = vst.msk [vmem:[%s2044 + $0xa8] sm:$0x3] %vm2040, 0.0
    %s2049 = scalar_lea.vmem [#allocation3], 16
    %vm2050 = vcmask 57344
    %2051 = vst.msk [vmem:[%s2049] sm:$0x1] %vm2050, 0.0
    %2052 = vst.msk [vmem:[%s2049 + $0x10] sm:$0x1] %vm2050, 0.0
    %2053 = vst.msk [vmem:[%s2049 + $0x20] sm:$0x1] %vm2050, 0.0
    %2054 = vst.msk [vmem:[%s2049 + $0x30] sm:$0x1] %vm2050, 0.0
    %2055 = vst.msk [vmem:[%s2049 + $0x40] sm:$0x1] %vm2050, 0.0
    %2056 = vst.msk [vmem:[%s2049 + $0x50] sm:$0x1] %vm2050, 0.0
    %2057 = vst.msk [vmem:[%s2049 + $0x60] sm:$0x1] %vm2050, 0.0
    %2058 = vst.msk [vmem:[%s2049 + $0x70] sm:$0x1] %vm2050, 0.0
    %2059 = vst.msk [vmem:[%s2049 + $0xa0] sm:$0x1] %vm2050, 0.0
    %2060 = vst.msk [vmem:[%s2049 + $0xb0] sm:$0x1] %vm2050, 0.0
    %2061 = vst.msk [vmem:[%s2049 + $0xc0] sm:$0x1] %vm2050, 0.0
    %2062 = vst.msk [vmem:[%s2049 + $0xd0] sm:$0x1] %vm2050, 0.0
    %2063 = vst.msk [vmem:[%s2049 + $0xe0] sm:$0x1] %vm2050, 0.0
    %2064 = vst.msk [vmem:[%s2049 + $0xf0] sm:$0x1] %vm2050, 0.0
    %2065 = vst.msk [vmem:[%s2049 + $0x100] sm:$0x1] %vm2050, 0.0
    %2066 = vst.msk [vmem:[%s2049 + $0x110] sm:$0x1] %vm2050, 0.0
    %2067 = vst.msk [vmem:[%s2049 + $0x9] sm:$0x1] %vm2050, 0.0
    %2068 = vst.msk [vmem:[%s2049 + $0x19] sm:$0x1] %vm2050, 0.0
    %2069 = vst.msk [vmem:[%s2049 + $0x29] sm:$0x1] %vm2050, 0.0
    %2070 = vst.msk [vmem:[%s2049 + $0x39] sm:$0x1] %vm2050, 0.0
    %2071 = vst.msk [vmem:[%s2049 + $0x49] sm:$0x1] %vm2050, 0.0
    %2072 = vst.msk [vmem:[%s2049 + $0x59] sm:$0x1] %vm2050, 0.0
    %2073 = vst.msk [vmem:[%s2049 + $0x69] sm:$0x1] %vm2050, 0.0
    %2074 = vst.msk [vmem:[%s2049 + $0x79] sm:$0x1] %vm2050, 0.0
    %2075 = vst.msk [vmem:[%s2049 + $0xa9] sm:$0x1] %vm2050, 0.0
    %2076 = vst.msk [vmem:[%s2049 + $0xb9] sm:$0x1] %vm2050, 0.0
    %2077 = vst.msk [vmem:[%s2049 + $0xc9] sm:$0x1] %vm2050, 0.0
    %2078 = vst.msk [vmem:[%s2049 + $0xd9] sm:$0x1] %vm2050, 0.0
    %2079 = vst.msk [vmem:[%s2049 + $0xe9] sm:$0x1] %vm2050, 0.0
    %2080 = vst.msk [vmem:[%s2049 + $0xf9] sm:$0x1] %vm2050, 0.0
    %2081 = vst.msk [vmem:[%s2049 + $0x109] sm:$0x1] %vm2050, 0.0
    %2082 = vst.msk [vmem:[%s2049 + $0x119] sm:$0x1] %vm2050, 0.0
    %2083 = vst.msk [vmem:[%s2049 + $0x1] sm:$0xff] %vm1849, %v2023
    %2084 = vst.msk [vmem:[%s2049 + $0x11] sm:$0xff] %vm1849, %v2024
    %2085 = vst.msk [vmem:[%s2049 + $0x21] sm:$0xff] %vm1849, %v2025
    %2086 = vst.msk [vmem:[%s2049 + $0x31] sm:$0xff] %vm1849, %v2026
    %2087 = vst.msk [vmem:[%s2049 + $0x41] sm:$0xff] %vm1849, %v2027
    %2088 = vst.msk [vmem:[%s2049 + $0x51] sm:$0xff] %vm1849, %v2028
    %2089 = vst.msk [vmem:[%s2049 + $0x61] sm:$0xff] %vm1849, %v2029
    %2090 = vst.msk [vmem:[%s2049 + $0x71] sm:$0xff] %vm1849, %v2030
    %2091 = vst.msk [vmem:[%s2049 + $0xa1] sm:$0xff] %vm1849, %v2031
    %2092 = vst.msk [vmem:[%s2049 + $0xb1] sm:$0xff] %vm1849, %v2032
    %2093 = vst.msk [vmem:[%s2049 + $0xc1] sm:$0xff] %vm1849, %v2033
    %2094 = vst.msk [vmem:[%s2049 + $0xd1] sm:$0xff] %vm1849, %v2034
    %2095 = vst.msk [vmem:[%s2049 + $0xe1] sm:$0xff] %vm1849, %v2035
    %2096 = vst.msk [vmem:[%s2049 + $0xf1] sm:$0xff] %vm1849, %v2036
    %2097 = vst.msk [vmem:[%s2049 + $0x101] sm:$0xff] %vm1849, %v2037
    %2098 = vst.msk [vmem:[%s2049 + $0x111] sm:$0xff] %vm1849, %v2038
    %v2099 = vld [vmem:[#allocation3] sm:$0xff]
    %v2100 = vld [vmem:[#allocation3 + $0x10] sm:$0xff]
    %v2101 = vld [vmem:[#allocation3 + $0x20] sm:$0xff]
    %v2102 = vld [vmem:[#allocation3 + $0x30] sm:$0xff]
    %v2103 = vld [vmem:[#allocation3 + $0x40] sm:$0xff]
    %v2104 = vld [vmem:[#allocation3 + $0x50] sm:$0xff]
    %v2105 = vld [vmem:[#allocation3 + $0x60] sm:$0xff]
    %v2106 = vld [vmem:[#allocation3 + $0x70] sm:$0xff]
    %v2107 = vld [vmem:[#allocation3 + $0xa0] sm:$0xff]
    %v2108 = vld [vmem:[#allocation3 + $0xb0] sm:$0xff]
    %v2109 = vld [vmem:[#allocation3 + $0xc0] sm:$0xff]
    %v2110 = vld [vmem:[#allocation3 + $0xd0] sm:$0xff]
    %v2111 = vld [vmem:[#allocation3 + $0xe0] sm:$0xff]
    %v2112 = vld [vmem:[#allocation3 + $0xf0] sm:$0xff]
    %v2113 = vld [vmem:[#allocation3 + $0x100] sm:$0xff]
    %v2114 = vld [vmem:[#allocation3 + $0x110] sm:$0xff]
    %v2115 = vpack.c.bf16 %v2100, %v2099
    %v2116 = vpack.c.bf16 %v2102, %v2101
    %v2117 = vpack.c.bf16 %v2104, %v2103
    %v2118 = vpack.c.bf16 %v2106, %v2105
    %v2119 = vpack.c.bf16 %v2108, %v2107
    %v2120 = vpack.c.bf16 %v2110, %v2109
    %v2121 = vpack.c.bf16 %v2112, %v2111
    %v2122 = vpack.c.bf16 %v2114, %v2113
    %v2123 = vld [vmem:[%s4] sm:$0xf]
    %v2124 = vld [vmem:[#allocation3 + $0x1] sm:$0xff]
    %v2125 = vld [vmem:[#allocation3 + $0x11] sm:$0xff]
    %v2126 = vld [vmem:[#allocation3 + $0x21] sm:$0xff]
    %v2127 = vld [vmem:[#allocation3 + $0x31] sm:$0xff]
    %v2128 = vld [vmem:[#allocation3 + $0x41] sm:$0xff]
    %v2129 = vld [vmem:[#allocation3 + $0x51] sm:$0xff]
    %v2130 = vld [vmem:[#allocation3 + $0x61] sm:$0xff]
    %v2131 = vld [vmem:[#allocation3 + $0x71] sm:$0xff]
    %v2132 = vld [vmem:[#allocation3 + $0xa1] sm:$0xff]
    %v2133 = vld [vmem:[#allocation3 + $0xb1] sm:$0xff]
    %v2134 = vld [vmem:[#allocation3 + $0xc1] sm:$0xff]
    %v2135 = vld [vmem:[#allocation3 + $0xd1] sm:$0xff]
    %v2136 = vld [vmem:[#allocation3 + $0xe1] sm:$0xff]
    %v2137 = vld [vmem:[#allocation3 + $0xf1] sm:$0xff]
    %v2138 = vld [vmem:[#allocation3 + $0x101] sm:$0xff]
    %v2139 = vld [vmem:[#allocation3 + $0x111] sm:$0xff]
    %v2140 = vpack.c.bf16 %v2125, %v2124
    %v2141 = vpack.c.bf16 %v2127, %v2126
    %v2142 = vpack.c.bf16 %v2129, %v2128
    %v2143 = vpack.c.bf16 %v2131, %v2130
    %v2144 = vpack.c.bf16 %v2133, %v2132
    %v2145 = vpack.c.bf16 %v2135, %v2134
    %v2146 = vpack.c.bf16 %v2137, %v2136
    %v2147 = vpack.c.bf16 %v2139, %v2138
    %s2148 = scalar_lea.vmem %s4, 4
    %v2149 = vld [vmem:[%s2148] sm:$0xf]
    %v2151 = vsel %vm1849, %v2140, 0
    %v2154 = vsel %vm1849, %v2141, 0
    %v2157 = vsel %vm1849, %v2142, 0
    %v2160 = vsel %vm1849, %v2143, 0
    %v2163 = vsel %vm1849, %v2144, 0
    %v2166 = vsel %vm1849, %v2145, 0
    %v2169 = vsel %vm1849, %v2146, 0
    %v2172 = vsel %vm1849, %v2147, 0
    %vm2174 = vcmask 1043456
    %v2176 = vsel %vm2174, %v2149, 0
    %2178 = vmatprep.subr.bf16.mxu0 0
    %2179 = vmatpush1.bf16.msra.mxu0 %v2176
    %2180 = vmatprep.subr.bf16.mxu0 0
    %2181 = vmatpush1.bf16.msra.mxu0 0
    %2182 = vmatprep.subr.bf16.mxu0 0
    %2183 = vmatpush1.bf16.msra.mxu0 0
    %2184 = vmatprep.subr.bf16.mxu0 0
    %2185 = vmatpush1.bf16.msra.mxu0 0
    %2186 = vmatprep.subr.bf16.mxu0 0
    %2187 = vmatpush1.bf16.msra.mxu0 0
    %2188 = vmatprep.subr.bf16.mxu0 0
    %2189 = vmatpush1.bf16.msra.mxu0 0
    %2190 = vmatprep.subr.bf16.mxu0 0
    %2191 = vmatpush1.bf16.msra.mxu0 0
    %2192 = vmatprep.subr.bf16.mxu0 0
    %2193 = vmatpush1.bf16.msra.mxu0 0
    %2194 = vmatprep.subr.bf16.mxu0 0
    %2195 = vmatpush1.bf16.msra.mxu0 0
    %2196 = vmatprep.subr.bf16.mxu0 0
    %2197 = vmatpush1.bf16.msra.mxu0 0
    %2198 = vmatprep.subr.bf16.mxu0 0
    %2199 = vmatpush1.bf16.msra.mxu0 0
    %2200 = vmatprep.subr.bf16.mxu0 0
    %2201 = vmatpush1.bf16.msra.mxu0 0
    %2202 = vmatprep.subr.bf16.mxu0 0
    %2203 = vmatpush1.bf16.msra.mxu0 0
    %2204 = vmatprep.subr.bf16.mxu0 0
    %2205 = vmatpush1.bf16.msra.mxu0 0
    %2206 = vmatprep.subr.bf16.mxu0 0
    %2207 = vmatpush1.bf16.msra.mxu0 0
    %2208 = vmatprep.subr.bf16.mxu0 0
    %2209 = vmatpush1.bf16.msra.mxu0 0
    %2210 = vmatprep.mubr.bf16.mxu0 0
    %2211 = vmatmul.mubr.bf16.gmra.mrb[0].mxu0 %v2151
    %v2212 = vpop.f32.mrb[0].mxu0
    %v2213 = vadd.f32 0.0, %v2212
    %v2214 = vpop.f32.mrb[0].mxu0
    %v2215 = vpop.f32.mrb[0].mxu0
    %v2216 = vadd.f32 0.0, %v2215
    %v2217 = vpop.f32.mrb[0].mxu0
    %2218 = vmatprep.mubr.bf16.mxu0 0
    %2219 = vmatmul.mubr.bf16.gmra.mrb[0].mxu0 %v2154
    %v2220 = vpop.f32.mrb[0].mxu0
    %v2221 = vadd.f32 0.0, %v2220
    %v2222 = vpop.f32.mrb[0].mxu0
    %v2223 = vpop.f32.mrb[0].mxu0
    %v2224 = vadd.f32 0.0, %v2223
    %v2225 = vpop.f32.mrb[0].mxu0
    %2226 = vmatprep.mubr.bf16.mxu0 0
    %2227 = vmatmul.mubr.bf16.gmra.mrb[0].mxu0 %v2157
    %v2228 = vpop.f32.mrb[0].mxu0
    %v2229 = vadd.f32 0.0, %v2228
    %v2230 = vpop.f32.mrb[0].mxu0
    %v2231 = vpop.f32.mrb[0].mxu0
    %v2232 = vadd.f32 0.0, %v2231
    %v2233 = vpop.f32.mrb[0].mxu0
    %2234 = vmatprep.mubr.bf16.mxu0 0
    %2235 = vmatmul.mubr.bf16.gmra.mrb[0].mxu0 %v2160
    %v2236 = vpop.f32.mrb[0].mxu0
    %v2237 = vadd.f32 0.0, %v2236
    %v2238 = vpop.f32.mrb[0].mxu0
    %v2239 = vpop.f32.mrb[0].mxu0
    %v2240 = vadd.f32 0.0, %v2239
    %v2241 = vpop.f32.mrb[0].mxu0
    %2242 = vmatprep.mubr.bf16.mxu0 0
    %2243 = vmatmul.mubr.bf16.gmra.mrb[0].mxu0 %v2163
    %v2244 = vpop.f32.mrb[0].mxu0
    %v2245 = vadd.f32 0.0, %v2244
    %v2246 = vpop.f32.mrb[0].mxu0
    %v2247 = vpop.f32.mrb[0].mxu0
    %v2248 = vadd.f32 0.0, %v2247
    %v2249 = vpop.f32.mrb[0].mxu0
    %2250 = vmatprep.mubr.bf16.mxu0 0
    %2251 = vmatmul.mubr.bf16.gmra.mrb[0].mxu0 %v2166
    %v2252 = vpop.f32.mrb[0].mxu0
    %v2253 = vadd.f32 0.0, %v2252
    %v2254 = vpop.f32.mrb[0].mxu0
    %v2255 = vpop.f32.mrb[0].mxu0
    %v2256 = vadd.f32 0.0, %v2255
    %v2257 = vpop.f32.mrb[0].mxu0
    %2258 = vmatprep.mubr.bf16.mxu0 0
    %2259 = vmatmul.mubr.bf16.gmra.mrb[0].mxu0 %v2169
    %v2260 = vpop.f32.mrb[0].mxu0
    %v2261 = vadd.f32 0.0, %v2260
    %v2262 = vpop.f32.mrb[0].mxu0
    %v2263 = vpop.f32.mrb[0].mxu0
    %v2264 = vadd.f32 0.0, %v2263
    %v2265 = vpop.f32.mrb[0].mxu0
    %2266 = vmatprep.mubr.bf16.mxu0 0
    %2267 = vmatmul.mubr.bf16.gmra.mrb[0].mxu0 %v2172
    %v2268 = vpop.f32.mrb[0].mxu0
    %v2269 = vadd.f32 0.0, %v2268
    %v2270 = vpop.f32.mrb[0].mxu0
    %v2271 = vpop.f32.mrb[0].mxu0
    %v2272 = vadd.f32 0.0, %v2271
    %v2273 = vpop.f32.mrb[0].mxu0
    %2274 = vdwg.mxu0
    %v2276 = vsel %vm1849, %v2115, 0
    %v2279 = vsel %vm1849, %v2116, 0
    %v2282 = vsel %vm1849, %v2117, 0
    %v2285 = vsel %vm1849, %v2118, 0
    %v2288 = vsel %vm1849, %v2119, 0
    %v2291 = vsel %vm1849, %v2120, 0
    %v2294 = vsel %vm1849, %v2121, 0
    %v2297 = vsel %vm1849, %v2122, 0
    %v2300 = vsel %vm2174, %v2123, 0
    %2302 = vmatprep.subr.bf16.mxu0 0
    %2303 = vmatpush1.bf16.msra.mxu0 %v2300
    %2304 = vmatprep.subr.bf16.mxu0 0
    %2305 = vmatpush1.bf16.msra.mxu0 0
    %2306 = vmatprep.subr.bf16.mxu0 0
    %2307 = vmatpush1.bf16.msra.mxu0 0
    %2308 = vmatprep.subr.bf16.mxu0 0
    %2309 = vmatpush1.bf16.msra.mxu0 0
    %2310 = vmatprep.subr.bf16.mxu0 0
    %2311 = vmatpush1.bf16.msra.mxu0 0
    %2312 = vmatprep.subr.bf16.mxu0 0
    %2313 = vmatpush1.bf16.msra.mxu0 0
    %2314 = vmatprep.subr.bf16.mxu0 0
    %2315 = vmatpush1.bf16.msra.mxu0 0
    %2316 = vmatprep.subr.bf16.mxu0 0
    %2317 = vmatpush1.bf16.msra.mxu0 0
    %2318 = vmatprep.subr.bf16.mxu0 0
    %2319 = vmatpush1.bf16.msra.mxu0 0
    %2320 = vmatprep.subr.bf16.mxu0 0
    %2321 = vmatpush1.bf16.msra.mxu0 0
    %2322 = vmatprep.subr.bf16.mxu0 0
    %2323 = vmatpush1.bf16.msra.mxu0 0
    %2324 = vmatprep.subr.bf16.mxu0 0
    %2325 = vmatpush1.bf16.msra.mxu0 0
    %2326 = vmatprep.subr.bf16.mxu0 0
    %2327 = vmatpush1.bf16.msra.mxu0 0
    %2328 = vmatprep.subr.bf16.mxu0 0
    %2329 = vmatpush1.bf16.msra.mxu0 0
    %2330 = vmatprep.subr.bf16.mxu0 0
    %2331 = vmatpush1.bf16.msra.mxu0 0
    %2332 = vmatprep.subr.bf16.mxu0 0
    %2333 = vmatpush1.bf16.msra.mxu0 0
    %2334 = vmatprep.mubr.bf16.mxu0 0
    %2335 = vmatmul.mubr.bf16.gmra.mrb[0].mxu0 %v2276
    %v2336 = vpop.f32.mrb[0].mxu0
    %v2337 = vadd.f32 %v2213, %v2336
    %v2338 = vpop.f32.mrb[0].mxu0
    %v2339 = vpop.f32.mrb[0].mxu0
    %v2340 = vadd.f32 %v2216, %v2339
    %v2341 = vpop.f32.mrb[0].mxu0
    %2342 = vmatprep.mubr.bf16.mxu0 0
    %2343 = vmatmul.mubr.bf16.gmra.mrb[0].mxu0 %v2279
    %v2344 = vpop.f32.mrb[0].mxu0
    %v2345 = vadd.f32 %v2221, %v2344
    %v2346 = vpop.f32.mrb[0].mxu0
    %v2347 = vpop.f32.mrb[0].mxu0
    %v2348 = vadd.f32 %v2224, %v2347
    %v2349 = vpop.f32.mrb[0].mxu0
    %2350 = vmatprep.mubr.bf16.mxu0 0
    %2351 = vmatmul.mubr.bf16.gmra.mrb[0].mxu0 %v2282
    %v2352 = vpop.f32.mrb[0].mxu0
    %v2353 = vadd.f32 %v2229, %v2352
    %v2354 = vpop.f32.mrb[0].mxu0
    %v2355 = vpop.f32.mrb[0].mxu0
    %v2356 = vadd.f32 %v2232, %v2355
    %v2357 = vpop.f32.mrb[0].mxu0
    %2358 = vmatprep.mubr.bf16.mxu0 0
    %2359 = vmatmul.mubr.bf16.gmra.mrb[0].mxu0 %v2285
    %v2360 = vpop.f32.mrb[0].mxu0
    %v2361 = vadd.f32 %v2237, %v2360
    %v2362 = vpop.f32.mrb[0].mxu0
    %v2363 = vpop.f32.mrb[0].mxu0
    %v2364 = vadd.f32 %v2240, %v2363
    %v2365 = vpop.f32.mrb[0].mxu0
    %2366 = vmatprep.mubr.bf16.mxu0 0
    %2367 = vmatmul.mubr.bf16.gmra.mrb[0].mxu0 %v2288
    %v2368 = vpop.f32.mrb[0].mxu0
    %v2369 = vadd.f32 %v2245, %v2368
    %v2370 = vpop.f32.mrb[0].mxu0
    %v2371 = vpop.f32.mrb[0].mxu0
    %v2372 = vadd.f32 %v2248, %v2371
    %v2373 = vpop.f32.mrb[0].mxu0
    %2374 = vmatprep.mubr.bf16.mxu0 0
    %2375 = vmatmul.mubr.bf16.gmra.mrb[0].mxu0 %v2291
    %v2376 = vpop.f32.mrb[0].mxu0
    %v2377 = vadd.f32 %v2253, %v2376
    %v2378 = vpop.f32.mrb[0].mxu0
    %v2379 = vpop.f32.mrb[0].mxu0
    %v2380 = vadd.f32 %v2256, %v2379
    %v2381 = vpop.f32.mrb[0].mxu0
    %2382 = vmatprep.mubr.bf16.mxu0 0
    %2383 = vmatmul.mubr.bf16.gmra.mrb[0].mxu0 %v2294
    %v2384 = vpop.f32.mrb[0].mxu0
    %v2385 = vadd.f32 %v2261, %v2384
    %v2386 = vpop.f32.mrb[0].mxu0
    %v2387 = vpop.f32.mrb[0].mxu0
    %v2388 = vadd.f32 %v2264, %v2387
    %v2389 = vpop.f32.mrb[0].mxu0
    %2390 = vmatprep.mubr.bf16.mxu0 0
    %2391 = vmatmul.mubr.bf16.gmra.mrb[0].mxu0 %v2297
    %v2392 = vpop.f32.mrb[0].mxu0
    %v2393 = vadd.f32 %v2269, %v2392
    %v2394 = vpop.f32.mrb[0].mxu0
    %v2395 = vpop.f32.mrb[0].mxu0
    %v2396 = vadd.f32 %v2272, %v2395
    %v2397 = vpop.f32.mrb[0].mxu0
    %2398 = vdwg.mxu0
    %v2399 = vld [vmem:[#allocation3 + $0x2] sm:$0xff]
    %v2400 = vld [vmem:[#allocation3 + $0x12] sm:$0xff]
    %v2401 = vld [vmem:[#allocation3 + $0x22] sm:$0xff]
    %v2402 = vld [vmem:[#allocation3 + $0x32] sm:$0xff]
    %v2403 = vld [vmem:[#allocation3 + $0x42] sm:$0xff]
    %v2404 = vld [vmem:[#allocation3 + $0x52] sm:$0xff]
    %v2405 = vld [vmem:[#allocation3 + $0x62] sm:$0xff]
    %v2406 = vld [vmem:[#allocation3 + $0x72] sm:$0xff]
    %v2407 = vld [vmem:[#allocation3 + $0xa2] sm:$0xff]
    %v2408 = vld [vmem:[#allocation3 + $0xb2] sm:$0xff]
    %v2409 = vld [vmem:[#allocation3 + $0xc2] sm:$0xff]
    %v2410 = vld [vmem:[#allocation3 + $0xd2] sm:$0xff]
    %v2411 = vld [vmem:[#allocation3 + $0xe2] sm:$0xff]
    %v2412 = vld [vmem:[#allocation3 + $0xf2] sm:$0xff]
    %v2413 = vld [vmem:[#allocation3 + $0x102] sm:$0xff]
    %v2414 = vld [vmem:[#allocation3 + $0x112] sm:$0xff]
    %v2415 = vpack.c.bf16 %v2400, %v2399
    %v2416 = vpack.c.bf16 %v2402, %v2401
    %v2417 = vpack.c.bf16 %v2404, %v2403
    %v2418 = vpack.c.bf16 %v2406, %v2405
    %v2419 = vpack.c.bf16 %v2408, %v2407
    %v2420 = vpack.c.bf16 %v2410, %v2409
    %v2421 = vpack.c.bf16 %v2412, %v2411
    %v2422 = vpack.c.bf16 %v2414, %v2413
    %s2423 = scalar_lea.vmem %s4, 8
    %v2424 = vld [vmem:[%s2423] sm:$0xf]
    %v2426 = vsel %vm1849, %v2415, 0
    %v2429 = vsel %vm1849, %v2416, 0
    %v2432 = vsel %vm1849, %v2417, 0
    %v2435 = vsel %vm1849, %v2418, 0
    %v2438 = vsel %vm1849, %v2419, 0
    %v2441 = vsel %vm1849, %v2420, 0
    %v2444 = vsel %vm1849, %v2421, 0
    %v2447 = vsel %vm1849, %v2422, 0
    %v2450 = vsel %vm2174, %v2424, 0
    %2452 = vmatprep.subr.bf16.mxu0 0
    %2453 = vmatpush1.bf16.msra.mxu0 %v2450
    %2454 = vmatprep.subr.bf16.mxu0 0
    %2455 = vmatpush1.bf16.msra.mxu0 0
    %2456 = vmatprep.subr.bf16.mxu0 0
    %2457 = vmatpush1.bf16.msra.mxu0 0
    %2458 = vmatprep.subr.bf16.mxu0 0
    %2459 = vmatpush1.bf16.msra.mxu0 0
    %2460 = vmatprep.subr.bf16.mxu0 0
    %2461 = vmatpush1.bf16.msra.mxu0 0
    %2462 = vmatprep.subr.bf16.mxu0 0
    %2463 = vmatpush1.bf16.msra.mxu0 0
    %2464 = vmatprep.subr.bf16.mxu0 0
    %2465 = vmatpush1.bf16.msra.mxu0 0
    %2466 = vmatprep.subr.bf16.mxu0 0
    %2467 = vmatpush1.bf16.msra.mxu0 0
    %2468 = vmatprep.subr.bf16.mxu0 0
    %2469 = vmatpush1.bf16.msra.mxu0 0
    %2470 = vmatprep.subr.bf16.mxu0 0
    %2471 = vmatpush1.bf16.msra.mxu0 0
    %2472 = vmatprep.subr.bf16.mxu0 0
    %2473 = vmatpush1.bf16.msra.mxu0 0
    %2474 = vmatprep.subr.bf16.mxu0 0
    %2475 = vmatpush1.bf16.msra.mxu0 0
    %2476 = vmatprep.subr.bf16.mxu0 0
    %2477 = vmatpush1.bf16.msra.mxu0 0
    %2478 = vmatprep.subr.bf16.mxu0 0
    %2479 = vmatpush1.bf16.msra.mxu0 0
    %2480 = vmatprep.subr.bf16.mxu0 0
    %2481 = vmatpush1.bf16.msra.mxu0 0
    %2482 = vmatprep.subr.bf16.mxu0 0
    %2483 = vmatpush1.bf16.msra.mxu0 0
    %2484 = vmatprep.mubr.bf16.mxu0 0
    %2485 = vmatmul.mubr.bf16.gmra.mrb[0].mxu0 %v2426
    %v2486 = vpop.f32.mrb[0].mxu0
    %v2487 = vadd.f32 0.0, %v2486
    %v2488 = vpop.f32.mrb[0].mxu0
    %v2489 = vpop.f32.mrb[0].mxu0
    %v2490 = vadd.f32 0.0, %v2489
    %v2491 = vpop.f32.mrb[0].mxu0
    %2492 = vmatprep.mubr.bf16.mxu0 0
    %2493 = vmatmul.mubr.bf16.gmra.mrb[0].mxu0 %v2429
    %v2494 = vpop.f32.mrb[0].mxu0
    %v2495 = vadd.f32 0.0, %v2494
    %v2496 = vpop.f32.mrb[0].mxu0
    %v2497 = vpop.f32.mrb[0].mxu0
    %v2498 = vadd.f32 0.0, %v2497
    %v2499 = vpop.f32.mrb[0].mxu0
    %2500 = vmatprep.mubr.bf16.mxu0 0
    %2501 = vmatmul.mubr.bf16.gmra.mrb[0].mxu0 %v2432
    %v2502 = vpop.f32.mrb[0].mxu0
    %v2503 = vadd.f32 0.0, %v2502
    %v2504 = vpop.f32.mrb[0].mxu0
    %v2505 = vpop.f32.mrb[0].mxu0
    %v2506 = vadd.f32 0.0, %v2505
    %v2507 = vpop.f32.mrb[0].mxu0
    %2508 = vmatprep.mubr.bf16.mxu0 0
    %2509 = vmatmul.mubr.bf16.gmra.mrb[0].mxu0 %v2435
    %v2510 = vpop.f32.mrb[0].mxu0
    %v2511 = vadd.f32 0.0, %v2510
    %v2512 = vpop.f32.mrb[0].mxu0
    %v2513 = vpop.f32.mrb[0].mxu0
    %v2514 = vadd.f32 0.0, %v2513
    %v2515 = vpop.f32.mrb[0].mxu0
    %2516 = vmatprep.mubr.bf16.mxu0 0
    %2517 = vmatmul.mubr.bf16.gmra.mrb[0].mxu0 %v2438
    %v2518 = vpop.f32.mrb[0].mxu0
    %v2519 = vadd.f32 0.0, %v2518
    %v2520 = vpop.f32.mrb[0].mxu0
    %v2521 = vpop.f32.mrb[0].mxu0
    %v2522 = vadd.f32 0.0, %v2521
    %v2523 = vpop.f32.mrb[0].mxu0
    %2524 = vmatprep.mubr.bf16.mxu0 0
    %2525 = vmatmul.mubr.bf16.gmra.mrb[0].mxu0 %v2441
    %v2526 = vpop.f32.mrb[0].mxu0
    %v2527 = vadd.f32 0.0, %v2526
    %v2528 = vpop.f32.mrb[0].mxu0
    %v2529 = vpop.f32.mrb[0].mxu0
    %v2530 = vadd.f32 0.0, %v2529
    %v2531 = vpop.f32.mrb[0].mxu0
    %2532 = vmatprep.mubr.bf16.mxu0 0
    %2533 = vmatmul.mubr.bf16.gmra.mrb[0].mxu0 %v2444
    %v2534 = vpop.f32.mrb[0].mxu0
    %v2535 = vadd.f32 0.0, %v2534
    %v2536 = vpop.f32.mrb[0].mxu0
    %v2537 = vpop.f32.mrb[0].mxu0
    %v2538 = vadd.f32 0.0, %v2537
    %v2539 = vpop.f32.mrb[0].mxu0
    %2540 = vmatprep.mubr.bf16.mxu0 0
    %2541 = vmatmul.mubr.bf16.gmra.mrb[0].mxu0 %v2447
    %v2542 = vpop.f32.mrb[0].mxu0
    %v2543 = vadd.f32 0.0, %v2542
    %v2544 = vpop.f32.mrb[0].mxu0
    %v2545 = vpop.f32.mrb[0].mxu0
    %v2546 = vadd.f32 0.0, %v2545
    %v2547 = vpop.f32.mrb[0].mxu0
    %2548 = vdwg.mxu0
    %v2549 = vadd.f32 %v2337, %v2487
    %v2550 = vadd.f32 %v2340, %v2490
    %v2551 = vadd.f32 %v2345, %v2495
    %v2552 = vadd.f32 %v2348, %v2498
    %v2553 = vadd.f32 %v2353, %v2503
    %v2554 = vadd.f32 %v2356, %v2506
    %v2555 = vadd.f32 %v2361, %v2511
    %v2556 = vadd.f32 %v2364, %v2514
    %v2557 = vadd.f32 %v2369, %v2519
    %v2558 = vadd.f32 %v2372, %v2522
    %v2559 = vadd.f32 %v2377, %v2527
    %v2560 = vadd.f32 %v2380, %v2530
    %v2561 = vadd.f32 %v2385, %v2535
    %v2562 = vadd.f32 %v2388, %v2538
    %v2563 = vadd.f32 %v2393, %v2543
    %v2564 = vadd.f32 %v2396, %v2546
    %v2565 = vld [vmem:[%s2049] sm:$0xff]
    %v2566 = vld [vmem:[%s2049 + $0x10] sm:$0xff]
    %v2567 = vld [vmem:[%s2049 + $0x20] sm:$0xff]
    %v2568 = vld [vmem:[%s2049 + $0x30] sm:$0xff]
    %v2569 = vld [vmem:[%s2049 + $0x40] sm:$0xff]
    %v2570 = vld [vmem:[%s2049 + $0x50] sm:$0xff]
    %v2571 = vld [vmem:[%s2049 + $0x60] sm:$0xff]
    %v2572 = vld [vmem:[%s2049 + $0x70] sm:$0xff]
    %v2573 = vld [vmem:[%s2049 + $0xa0] sm:$0xff]
    %v2574 = vld [vmem:[%s2049 + $0xb0] sm:$0xff]
    %v2575 = vld [vmem:[%s2049 + $0xc0] sm:$0xff]
    %v2576 = vld [vmem:[%s2049 + $0xd0] sm:$0xff]
    %v2577 = vld [vmem:[%s2049 + $0xe0] sm:$0xff]
    %v2578 = vld [vmem:[%s2049 + $0xf0] sm:$0xff]
    %v2579 = vld [vmem:[%s2049 + $0x100] sm:$0xff]
    %v2580 = vld [vmem:[%s2049 + $0x110] sm:$0xff]
    %v2581 = vpack.c.bf16 %v2566, %v2565
    %v2582 = vpack.c.bf16 %v2568, %v2567
    %v2583 = vpack.c.bf16 %v2570, %v2569
    %v2584 = vpack.c.bf16 %v2572, %v2571
    %v2585 = vpack.c.bf16 %v2574, %v2573
    %v2586 = vpack.c.bf16 %v2576, %v2575
    %v2587 = vpack.c.bf16 %v2578, %v2577
    %v2588 = vpack.c.bf16 %v2580, %v2579
    %s2589 = scalar_lea.vmem %s4, 12
    %v2590 = vld [vmem:[%s2589] sm:$0xf]
    %v2592 = vsel %vm1849, %v2581, 0
    %v2595 = vsel %vm1849, %v2582, 0
    %v2598 = vsel %vm1849, %v2583, 0
    %v2601 = vsel %vm1849, %v2584, 0
    %v2604 = vsel %vm1849, %v2585, 0
    %v2607 = vsel %vm1849, %v2586, 0
    %v2610 = vsel %vm1849, %v2587, 0
    %v2613 = vsel %vm1849, %v2588, 0
    %v2616 = vsel %vm2174, %v2590, 0
    %2618 = vmatprep.subr.bf16.mxu0 0
    %2619 = vmatpush1.bf16.msra.mxu0 %v2616
    %2620 = vmatprep.subr.bf16.mxu0 0
    %2621 = vmatpush1.bf16.msra.mxu0 0
    %2622 = vmatprep.subr.bf16.mxu0 0
    %2623 = vmatpush1.bf16.msra.mxu0 0
    %2624 = vmatprep.subr.bf16.mxu0 0
    %2625 = vmatpush1.bf16.msra.mxu0 0
    %2626 = vmatprep.subr.bf16.mxu0 0
    %2627 = vmatpush1.bf16.msra.mxu0 0
    %2628 = vmatprep.subr.bf16.mxu0 0
    %2629 = vmatpush1.bf16.msra.mxu0 0
    %2630 = vmatprep.subr.bf16.mxu0 0
    %2631 = vmatpush1.bf16.msra.mxu0 0
    %2632 = vmatprep.subr.bf16.mxu0 0
    %2633 = vmatpush1.bf16.msra.mxu0 0
    %2634 = vmatprep.subr.bf16.mxu0 0
    %2635 = vmatpush1.bf16.msra.mxu0 0
    %2636 = vmatprep.subr.bf16.mxu0 0
    %2637 = vmatpush1.bf16.msra.mxu0 0
    %2638 = vmatprep.subr.bf16.mxu0 0
    %2639 = vmatpush1.bf16.msra.mxu0 0
    %2640 = vmatprep.subr.bf16.mxu0 0
    %2641 = vmatpush1.bf16.msra.mxu0 0
    %2642 = vmatprep.subr.bf16.mxu0 0
    %2643 = vmatpush1.bf16.msra.mxu0 0
    %2644 = vmatprep.subr.bf16.mxu0 0
    %2645 = vmatpush1.bf16.msra.mxu0 0
    %2646 = vmatprep.subr.bf16.mxu0 0
    %2647 = vmatpush1.bf16.msra.mxu0 0
    %2648 = vmatprep.subr.bf16.mxu0 0
    %2649 = vmatpush1.bf16.msra.mxu0 0
    %2650 = vmatprep.mubr.bf16.mxu0 0
    %2651 = vmatmul.mubr.bf16.gmra.mrb[0].mxu0 %v2592
    %v2652 = vpop.f32.mrb[0].mxu0
    %v2653 = vadd.f32 0.0, %v2652
    %v2654 = vpop.f32.mrb[0].mxu0
    %v2655 = vpop.f32.mrb[0].mxu0
    %v2656 = vadd.f32 0.0, %v2655
    %v2657 = vpop.f32.mrb[0].mxu0
    %2658 = vmatprep.mubr.bf16.mxu0 0
    %2659 = vmatmul.mubr.bf16.gmra.mrb[0].mxu0 %v2595
    %v2660 = vpop.f32.mrb[0].mxu0
    %v2661 = vadd.f32 0.0, %v2660
    %v2662 = vpop.f32.mrb[0].mxu0
    %v2663 = vpop.f32.mrb[0].mxu0
    %v2664 = vadd.f32 0.0, %v2663
    %v2665 = vpop.f32.mrb[0].mxu0
    %2666 = vmatprep.mubr.bf16.mxu0 0
    %2667 = vmatmul.mubr.bf16.gmra.mrb[0].mxu0 %v2598
    %v2668 = vpop.f32.mrb[0].mxu0
    %v2669 = vadd.f32 0.0, %v2668
    %v2670 = vpop.f32.mrb[0].mxu0
    %v2671 = vpop.f32.mrb[0].mxu0
    %v2672 = vadd.f32 0.0, %v2671
    %v2673 = vpop.f32.mrb[0].mxu0
    %2674 = vmatprep.mubr.bf16.mxu0 0
    %2675 = vmatmul.mubr.bf16.gmra.mrb[0].mxu0 %v2601
    %v2676 = vpop.f32.mrb[0].mxu0
    %v2677 = vadd.f32 0.0, %v2676
    %v2678 = vpop.f32.mrb[0].mxu0
    %v2679 = vpop.f32.mrb[0].mxu0
    %v2680 = vadd.f32 0.0, %v2679
    %v2681 = vpop.f32.mrb[0].mxu0
    %2682 = vmatprep.mubr.bf16.mxu0 0
    %2683 = vmatmul.mubr.bf16.gmra.mrb[0].mxu0 %v2604
    %v2684 = vpop.f32.mrb[0].mxu0
    %v2685 = vadd.f32 0.0, %v2684
    %v2686 = vpop.f32.mrb[0].mxu0
    %v2687 = vpop.f32.mrb[0].mxu0
    %v2688 = vadd.f32 0.0, %v2687
    %v2689 = vpop.f32.mrb[0].mxu0
    %2690 = vmatprep.mubr.bf16.mxu0 0
    %2691 = vmatmul.mubr.bf16.gmra.mrb[0].mxu0 %v2607
    %v2692 = vpop.f32.mrb[0].mxu0
    %v2693 = vadd.f32 0.0, %v2692
    %v2694 = vpop.f32.mrb[0].mxu0
    %v2695 = vpop.f32.mrb[0].mxu0
    %v2696 = vadd.f32 0.0, %v2695
    %v2697 = vpop.f32.mrb[0].mxu0
    %2698 = vmatprep.mubr.bf16.mxu0 0
    %2699 = vmatmul.mubr.bf16.gmra.mrb[0].mxu0 %v2610
    %v2700 = vpop.f32.mrb[0].mxu0
    %v2701 = vadd.f32 0.0, %v2700
    %v2702 = vpop.f32.mrb[0].mxu0
    %v2703 = vpop.f32.mrb[0].mxu0
    %v2704 = vadd.f32 0.0, %v2703
    %v2705 = vpop.f32.mrb[0].mxu0
    %2706 = vmatprep.mubr.bf16.mxu0 0
    %2707 = vmatmul.mubr.bf16.gmra.mrb[0].mxu0 %v2613
    %v2708 = vpop.f32.mrb[0].mxu0
    %v2709 = vadd.f32 0.0, %v2708
    %v2710 = vpop.f32.mrb[0].mxu0
    %v2711 = vpop.f32.mrb[0].mxu0
    %v2712 = vadd.f32 0.0, %v2711
    %v2713 = vpop.f32.mrb[0].mxu0
    %2714 = vdwg.mxu0
    %v2715 = vadd.f32 %v2549, %v2653
    %v2716 = vadd.f32 %v2550, %v2656
    %v2717 = vadd.f32 %v2551, %v2661
    %v2718 = vadd.f32 %v2552, %v2664
    %v2719 = vadd.f32 %v2553, %v2669
    %v2720 = vadd.f32 %v2554, %v2672
    %v2721 = vadd.f32 %v2555, %v2677
    %v2722 = vadd.f32 %v2556, %v2680
    %v2723 = vadd.f32 %v2557, %v2685
    %v2724 = vadd.f32 %v2558, %v2688
    %v2725 = vadd.f32 %v2559, %v2693
    %v2726 = vadd.f32 %v2560, %v2696
    %v2727 = vadd.f32 %v2561, %v2701
    %v2728 = vadd.f32 %v2562, %v2704
    %v2729 = vadd.f32 %v2563, %v2709
    %v2730 = vadd.f32 %v2564, %v2712
    %v2731 = vld [vmem:[%s2049 + $0x1] sm:$0xff]
    %v2732 = vld [vmem:[%s2049 + $0x11] sm:$0xff]
    %v2733 = vld [vmem:[%s2049 + $0x21] sm:$0xff]
    %v2734 = vld [vmem:[%s2049 + $0x31] sm:$0xff]
    %v2735 = vld [vmem:[%s2049 + $0x41] sm:$0xff]
    %v2736 = vld [vmem:[%s2049 + $0x51] sm:$0xff]
    %v2737 = vld [vmem:[%s2049 + $0x61] sm:$0xff]
    %v2738 = vld [vmem:[%s2049 + $0x71] sm:$0xff]
    %v2739 = vld [vmem:[%s2049 + $0xa1] sm:$0xff]
    %v2740 = vld [vmem:[%s2049 + $0xb1] sm:$0xff]
    %v2741 = vld [vmem:[%s2049 + $0xc1] sm:$0xff]
    %v2742 = vld [vmem:[%s2049 + $0xd1] sm:$0xff]
    %v2743 = vld [vmem:[%s2049 + $0xe1] sm:$0xff]
    %v2744 = vld [vmem:[%s2049 + $0xf1] sm:$0xff]
    %v2745 = vld [vmem:[%s2049 + $0x101] sm:$0xff]
    %v2746 = vld [vmem:[%s2049 + $0x111] sm:$0xff]
    %v2747 = vpack.c.bf16 %v2732, %v2731
    %v2748 = vpack.c.bf16 %v2734, %v2733
    %v2749 = vpack.c.bf16 %v2736, %v2735
    %v2750 = vpack.c.bf16 %v2738, %v2737
    %v2751 = vpack.c.bf16 %v2740, %v2739
    %v2752 = vpack.c.bf16 %v2742, %v2741
    %v2753 = vpack.c.bf16 %v2744, %v2743
    %v2754 = vpack.c.bf16 %v2746, %v2745
    %s2755 = scalar_lea.vmem %s4, 16
    %v2756 = vld [vmem:[%s2755] sm:$0xf]
    %v2758 = vsel %vm1849, %v2747, 0
    %v2761 = vsel %vm1849, %v2748, 0
    %v2764 = vsel %vm1849, %v2749, 0
    %v2767 = vsel %vm1849, %v2750, 0
    %v2770 = vsel %vm1849, %v2751, 0
    %v2773 = vsel %vm1849, %v2752, 0
    %v2776 = vsel %vm1849, %v2753, 0
    %v2779 = vsel %vm1849, %v2754, 0
    %v2782 = vsel %vm2174, %v2756, 0
    %2784 = vmatprep.subr.bf16.mxu0 0
    %2785 = vmatpush1.bf16.msra.mxu0 %v2782
    %2786 = vmatprep.subr.bf16.mxu0 0
    %2787 = vmatpush1.bf16.msra.mxu0 0
    %2788 = vmatprep.subr.bf16.mxu0 0
    %2789 = vmatpush1.bf16.msra.mxu0 0
    %2790 = vmatprep.subr.bf16.mxu0 0
    %2791 = vmatpush1.bf16.msra.mxu0 0
    %2792 = vmatprep.subr.bf16.mxu0 0
    %2793 = vmatpush1.bf16.msra.mxu0 0
    %2794 = vmatprep.subr.bf16.mxu0 0
    %2795 = vmatpush1.bf16.msra.mxu0 0
    %2796 = vmatprep.subr.bf16.mxu0 0
    %2797 = vmatpush1.bf16.msra.mxu0 0
    %2798 = vmatprep.subr.bf16.mxu0 0
    %2799 = vmatpush1.bf16.msra.mxu0 0
    %2800 = vmatprep.subr.bf16.mxu0 0
    %2801 = vmatpush1.bf16.msra.mxu0 0
    %2802 = vmatprep.subr.bf16.mxu0 0
    %2803 = vmatpush1.bf16.msra.mxu0 0
    %2804 = vmatprep.subr.bf16.mxu0 0
    %2805 = vmatpush1.bf16.msra.mxu0 0
    %2806 = vmatprep.subr.bf16.mxu0 0
    %2807 = vmatpush1.bf16.msra.mxu0 0
    %2808 = vmatprep.subr.bf16.mxu0 0
    %2809 = vmatpush1.bf16.msra.mxu0 0
    %2810 = vmatprep.subr.bf16.mxu0 0
    %2811 = vmatpush1.bf16.msra.mxu0 0
    %2812 = vmatprep.subr.bf16.mxu0 0
    %2813 = vmatpush1.bf16.msra.mxu0 0
    %2814 = vmatprep.subr.bf16.mxu0 0
    %2815 = vmatpush1.bf16.msra.mxu0 0
    %2816 = vmatprep.mubr.bf16.mxu0 0
    %2817 = vmatmul.mubr.bf16.gmra.mrb[0].mxu0 %v2758
    %v2818 = vpop.f32.mrb[0].mxu0
    %v2819 = vadd.f32 0.0, %v2818
    %v2820 = vpop.f32.mrb[0].mxu0
    %v2821 = vpop.f32.mrb[0].mxu0
    %v2822 = vadd.f32 0.0, %v2821
    %v2823 = vpop.f32.mrb[0].mxu0
    %2824 = vmatprep.mubr.bf16.mxu0 0
    %2825 = vmatmul.mubr.bf16.gmra.mrb[0].mxu0 %v2761
    %v2826 = vpop.f32.mrb[0].mxu0
    %v2827 = vadd.f32 0.0, %v2826
    %v2828 = vpop.f32.mrb[0].mxu0
    %v2829 = vpop.f32.mrb[0].mxu0
    %v2830 = vadd.f32 0.0, %v2829
    %v2831 = vpop.f32.mrb[0].mxu0
    %2832 = vmatprep.mubr.bf16.mxu0 0
    %2833 = vmatmul.mubr.bf16.gmra.mrb[0].mxu0 %v2764
    %v2834 = vpop.f32.mrb[0].mxu0
    %v2835 = vadd.f32 0.0, %v2834
    %v2836 = vpop.f32.mrb[0].mxu0
    %v2837 = vpop.f32.mrb[0].mxu0
    %v2838 = vadd.f32 0.0, %v2837
    %v2839 = vpop.f32.mrb[0].mxu0
    %2840 = vmatprep.mubr.bf16.mxu0 0
    %2841 = vmatmul.mubr.bf16.gmra.mrb[0].mxu0 %v2767
    %v2842 = vpop.f32.mrb[0].mxu0
    %v2843 = vadd.f32 0.0, %v2842
    %v2844 = vpop.f32.mrb[0].mxu0
    %v2845 = vpop.f32.mrb[0].mxu0
    %v2846 = vadd.f32 0.0, %v2845
    %v2847 = vpop.f32.mrb[0].mxu0
    %2848 = vmatprep.mubr.bf16.mxu0 0
    %2849 = vmatmul.mubr.bf16.gmra.mrb[0].mxu0 %v2770
    %v2850 = vpop.f32.mrb[0].mxu0
    %v2851 = vadd.f32 0.0, %v2850
    %v2852 = vpop.f32.mrb[0].mxu0
    %v2853 = vpop.f32.mrb[0].mxu0
    %v2854 = vadd.f32 0.0, %v2853
    %v2855 = vpop.f32.mrb[0].mxu0
    %2856 = vmatprep.mubr.bf16.mxu0 0
    %2857 = vmatmul.mubr.bf16.gmra.mrb[0].mxu0 %v2773
    %v2858 = vpop.f32.mrb[0].mxu0
    %v2859 = vadd.f32 0.0, %v2858
    %v2860 = vpop.f32.mrb[0].mxu0
    %v2861 = vpop.f32.mrb[0].mxu0
    %v2862 = vadd.f32 0.0, %v2861
    %v2863 = vpop.f32.mrb[0].mxu0
    %2864 = vmatprep.mubr.bf16.mxu0 0
    %2865 = vmatmul.mubr.bf16.gmra.mrb[0].mxu0 %v2776
    %v2866 = vpop.f32.mrb[0].mxu0
    %v2867 = vadd.f32 0.0, %v2866
    %v2868 = vpop.f32.mrb[0].mxu0
    %v2869 = vpop.f32.mrb[0].mxu0
    %v2870 = vadd.f32 0.0, %v2869
    %v2871 = vpop.f32.mrb[0].mxu0
    %2872 = vmatprep.mubr.bf16.mxu0 0
    %2873 = vmatmul.mubr.bf16.gmra.mrb[0].mxu0 %v2779
    %v2874 = vpop.f32.mrb[0].mxu0
    %v2875 = vadd.f32 0.0, %v2874
    %v2876 = vpop.f32.mrb[0].mxu0
    %v2877 = vpop.f32.mrb[0].mxu0
    %v2878 = vadd.f32 0.0, %v2877
    %v2879 = vpop.f32.mrb[0].mxu0
    %2880 = vdwg.mxu0
    %v2881 = vadd.f32 %v2715, %v2819
    %v2882 = vadd.f32 %v2716, %v2822
    %v2883 = vadd.f32 %v2717, %v2827
    %v2884 = vadd.f32 %v2718, %v2830
    %v2885 = vadd.f32 %v2719, %v2835
    %v2886 = vadd.f32 %v2720, %v2838
    %v2887 = vadd.f32 %v2721, %v2843
    %v2888 = vadd.f32 %v2722, %v2846
    %v2889 = vadd.f32 %v2723, %v2851
    %v2890 = vadd.f32 %v2724, %v2854
    %v2891 = vadd.f32 %v2725, %v2859
    %v2892 = vadd.f32 %v2726, %v2862
    %v2893 = vadd.f32 %v2727, %v2867
    %v2894 = vadd.f32 %v2728, %v2870
    %v2895 = vadd.f32 %v2729, %v2875
    %v2896 = vadd.f32 %v2730, %v2878
    %v2897 = vld [vmem:[%s2049 + $0x2] sm:$0xff]
    %v2898 = vld [vmem:[%s2049 + $0x12] sm:$0xff]
    %v2899 = vld [vmem:[%s2049 + $0x22] sm:$0xff]
    %v2900 = vld [vmem:[%s2049 + $0x32] sm:$0xff]
    %v2901 = vld [vmem:[%s2049 + $0x42] sm:$0xff]
    %v2902 = vld [vmem:[%s2049 + $0x52] sm:$0xff]
    %v2903 = vld [vmem:[%s2049 + $0x62] sm:$0xff]
    %v2904 = vld [vmem:[%s2049 + $0x72] sm:$0xff]
    %v2905 = vld [vmem:[%s2049 + $0xa2] sm:$0xff]
    %v2906 = vld [vmem:[%s2049 + $0xb2] sm:$0xff]
    %v2907 = vld [vmem:[%s2049 + $0xc2] sm:$0xff]
    %v2908 = vld [vmem:[%s2049 + $0xd2] sm:$0xff]
    %v2909 = vld [vmem:[%s2049 + $0xe2] sm:$0xff]
    %v2910 = vld [vmem:[%s2049 + $0xf2] sm:$0xff]
    %v2911 = vld [vmem:[%s2049 + $0x102] sm:$0xff]
    %v2912 = vld [vmem:[%s2049 + $0x112] sm:$0xff]
    %v2913 = vpack.c.bf16 %v2898, %v2897
    %v2914 = vpack.c.bf16 %v2900, %v2899
    %v2915 = vpack.c.bf16 %v2902, %v2901
    %v2916 = vpack.c.bf16 %v2904, %v2903
    %v2917 = vpack.c.bf16 %v2906, %v2905
    %v2918 = vpack.c.bf16 %v2908, %v2907
    %v2919 = vpack.c.bf16 %v2910, %v2909
    %v2920 = vpack.c.bf16 %v2912, %v2911
    %s2921 = scalar_lea.vmem %s4, 20
    %v2922 = vld [vmem:[%s2921] sm:$0xf]
    %v2924 = vsel %vm1849, %v2913, 0
    %v2927 = vsel %vm1849, %v2914, 0
    %v2930 = vsel %vm1849, %v2915, 0
    %v2933 = vsel %vm1849, %v2916, 0
    %v2936 = vsel %vm1849, %v2917, 0
    %v2939 = vsel %vm1849, %v2918, 0
    %v2942 = vsel %vm1849, %v2919, 0
    %v2945 = vsel %vm1849, %v2920, 0
    %v2948 = vsel %vm2174, %v2922, 0
    %2950 = vmatprep.subr.bf16.mxu0 0
    %2951 = vmatpush1.bf16.msra.mxu0 %v2948
    %2952 = vmatprep.subr.bf16.mxu0 0
    %2953 = vmatpush1.bf16.msra.mxu0 0
    %2954 = vmatprep.subr.bf16.mxu0 0
    %2955 = vmatpush1.bf16.msra.mxu0 0
    %2956 = vmatprep.subr.bf16.mxu0 0
    %2957 = vmatpush1.bf16.msra.mxu0 0
    %2958 = vmatprep.subr.bf16.mxu0 0
    %2959 = vmatpush1.bf16.msra.mxu0 0
    %2960 = vmatprep.subr.bf16.mxu0 0
    %2961 = vmatpush1.bf16.msra.mxu0 0
    %2962 = vmatprep.subr.bf16.mxu0 0
    %2963 = vmatpush1.bf16.msra.mxu0 0
    %2964 = vmatprep.subr.bf16.mxu0 0
    %2965 = vmatpush1.bf16.msra.mxu0 0
    %2966 = vmatprep.subr.bf16.mxu0 0
    %2967 = vmatpush1.bf16.msra.mxu0 0
    %2968 = vmatprep.subr.bf16.mxu0 0
    %2969 = vmatpush1.bf16.msra.mxu0 0
    %2970 = vmatprep.subr.bf16.mxu0 0
    %2971 = vmatpush1.bf16.msra.mxu0 0
    %2972 = vmatprep.subr.bf16.mxu0 0
    %2973 = vmatpush1.bf16.msra.mxu0 0
    %2974 = vmatprep.subr.bf16.mxu0 0
    %2975 = vmatpush1.bf16.msra.mxu0 0
    %2976 = vmatprep.subr.bf16.mxu0 0
    %2977 = vmatpush1.bf16.msra.mxu0 0
    %2978 = vmatprep.subr.bf16.mxu0 0
    %2979 = vmatpush1.bf16.msra.mxu0 0
    %2980 = vmatprep.subr.bf16.mxu0 0
    %2981 = vmatpush1.bf16.msra.mxu0 0
    %2982 = vmatprep.mubr.bf16.mxu0 0
    %2983 = vmatmul.mubr.bf16.gmra.mrb[0].mxu0 %v2924
    %v2984 = vpop.f32.mrb[0].mxu0
    %v2985 = vadd.f32 0.0, %v2984
    %v2986 = vpop.f32.mrb[0].mxu0
    %v2987 = vpop.f32.mrb[0].mxu0
    %v2988 = vadd.f32 0.0, %v2987
    %v2989 = vpop.f32.mrb[0].mxu0
    %2990 = vmatprep.mubr.bf16.mxu0 0
    %2991 = vmatmul.mubr.bf16.gmra.mrb[0].mxu0 %v2927
    %v2992 = vpop.f32.mrb[0].mxu0
    %v2993 = vadd.f32 0.0, %v2992
    %v2994 = vpop.f32.mrb[0].mxu0
    %v2995 = vpop.f32.mrb[0].mxu0
    %v2996 = vadd.f32 0.0, %v2995
    %v2997 = vpop.f32.mrb[0].mxu0
    %2998 = vmatprep.mubr.bf16.mxu0 0
    %2999 = vmatmul.mubr.bf16.gmra.mrb[0].mxu0 %v2930
    %v3000 = vpop.f32.mrb[0].mxu0
    %v3001 = vadd.f32 0.0, %v3000
    %v3002 = vpop.f32.mrb[0].mxu0
    %v3003 = vpop.f32.mrb[0].mxu0
    %v3004 = vadd.f32 0.0, %v3003
    %v3005 = vpop.f32.mrb[0].mxu0
    %3006 = vmatprep.mubr.bf16.mxu0 0
    %3007 = vmatmul.mubr.bf16.gmra.mrb[0].mxu0 %v2933
    %v3008 = vpop.f32.mrb[0].mxu0
    %v3009 = vadd.f32 0.0, %v3008
    %v3010 = vpop.f32.mrb[0].mxu0
    %v3011 = vpop.f32.mrb[0].mxu0
    %v3012 = vadd.f32 0.0, %v3011
    %v3013 = vpop.f32.mrb[0].mxu0
    %3014 = vmatprep.mubr.bf16.mxu0 0
    %3015 = vmatmul.mubr.bf16.gmra.mrb[0].mxu0 %v2936
    %v3016 = vpop.f32.mrb[0].mxu0
    %v3017 = vadd.f32 0.0, %v3016
    %v3018 = vpop.f32.mrb[0].mxu0
    %v3019 = vpop.f32.mrb[0].mxu0
    %v3020 = vadd.f32 0.0, %v3019
    %v3021 = vpop.f32.mrb[0].mxu0
    %3022 = vmatprep.mubr.bf16.mxu0 0
    %3023 = vmatmul.mubr.bf16.gmra.mrb[0].mxu0 %v2939
    %v3024 = vpop.f32.mrb[0].mxu0
    %v3025 = vadd.f32 0.0, %v3024
    %v3026 = vpop.f32.mrb[0].mxu0
    %v3027 = vpop.f32.mrb[0].mxu0
    %v3028 = vadd.f32 0.0, %v3027
    %v3029 = vpop.f32.mrb[0].mxu0
    %3030 = vmatprep.mubr.bf16.mxu0 0
    %3031 = vmatmul.mubr.bf16.gmra.mrb[0].mxu0 %v2942
    %v3032 = vpop.f32.mrb[0].mxu0
    %v3033 = vadd.f32 0.0, %v3032
    %v3034 = vpop.f32.mrb[0].mxu0
    %v3035 = vpop.f32.mrb[0].mxu0
    %v3036 = vadd.f32 0.0, %v3035
    %v3037 = vpop.f32.mrb[0].mxu0
    %3038 = vmatprep.mubr.bf16.mxu0 0
    %3039 = vmatmul.mubr.bf16.gmra.mrb[0].mxu0 %v2945
    %v3040 = vpop.f32.mrb[0].mxu0
    %v3041 = vadd.f32 0.0, %v3040
    %v3042 = vpop.f32.mrb[0].mxu0
    %v3043 = vpop.f32.mrb[0].mxu0
    %v3044 = vadd.f32 0.0, %v3043
    %v3045 = vpop.f32.mrb[0].mxu0
    %3046 = vdwg.mxu0
    %v3047 = vadd.f32 %v2881, %v2985
    %v3048 = vadd.f32 %v2882, %v2988
    %v3049 = vadd.f32 %v2883, %v2993
    %v3050 = vadd.f32 %v2884, %v2996
    %v3051 = vadd.f32 %v2885, %v3001
    %v3052 = vadd.f32 %v2886, %v3004
    %v3053 = vadd.f32 %v2887, %v3009
    %v3054 = vadd.f32 %v2888, %v3012
    %v3055 = vadd.f32 %v2889, %v3017
    %v3056 = vadd.f32 %v2890, %v3020
    %v3057 = vadd.f32 %v2891, %v3025
    %v3058 = vadd.f32 %v2892, %v3028
    %v3059 = vadd.f32 %v2893, %v3033
    %v3060 = vadd.f32 %v2894, %v3036
    %v3061 = vadd.f32 %v2895, %v3041
    %v3062 = vadd.f32 %v2896, %v3044
    %s3063 = scalar_lea.vmem [#allocation3], 32
    %v3064 = vld [vmem:[%s3063] sm:$0xff]
    %v3065 = vld [vmem:[%s3063 + $0x10] sm:$0xff]
    %v3066 = vld [vmem:[%s3063 + $0x20] sm:$0xff]
    %v3067 = vld [vmem:[%s3063 + $0x30] sm:$0xff]
    %v3068 = vld [vmem:[%s3063 + $0x40] sm:$0xff]
    %v3069 = vld [vmem:[%s3063 + $0x50] sm:$0xff]
    %v3070 = vld [vmem:[%s3063 + $0x60] sm:$0xff]
    %v3071 = vld [vmem:[%s3063 + $0x70] sm:$0xff]
    %v3072 = vld [vmem:[%s3063 + $0xa0] sm:$0xff]
    %v3073 = vld [vmem:[%s3063 + $0xb0] sm:$0xff]
    %v3074 = vld [vmem:[%s3063 + $0xc0] sm:$0xff]
    %v3075 = vld [vmem:[%s3063 + $0xd0] sm:$0xff]
    %v3076 = vld [vmem:[%s3063 + $0xe0] sm:$0xff]
    %v3077 = vld [vmem:[%s3063 + $0xf0] sm:$0xff]
    %v3078 = vld [vmem:[%s3063 + $0x100] sm:$0xff]
    %v3079 = vld [vmem:[%s3063 + $0x110] sm:$0xff]
    %v3080 = vpack.c.bf16 %v3065, %v3064
    %v3081 = vpack.c.bf16 %v3067, %v3066
    %v3082 = vpack.c.bf16 %v3069, %v3068
    %v3083 = vpack.c.bf16 %v3071, %v3070
    %v3084 = vpack.c.bf16 %v3073, %v3072
    %v3085 = vpack.c.bf16 %v3075, %v3074
    %v3086 = vpack.c.bf16 %v3077, %v3076
    %v3087 = vpack.c.bf16 %v3079, %v3078
    %s3088 = scalar_lea.vmem %s4, 24
    %v3089 = vld [vmem:[%s3088] sm:$0xf]
    %v3091 = vsel %vm1849, %v3080, 0
    %v3094 = vsel %vm1849, %v3081, 0
    %v3097 = vsel %vm1849, %v3082, 0
    %v3100 = vsel %vm1849, %v3083, 0
    %v3103 = vsel %vm1849, %v3084, 0
    %v3106 = vsel %vm1849, %v3085, 0
    %v3109 = vsel %vm1849, %v3086, 0
    %v3112 = vsel %vm1849, %v3087, 0
    %v3115 = vsel %vm2174, %v3089, 0
    %3117 = vmatprep.subr.bf16.mxu0 0
    %3118 = vmatpush1.bf16.msra.mxu0 %v3115
    %3119 = vmatprep.subr.bf16.mxu0 0
    %3120 = vmatpush1.bf16.msra.mxu0 0
    %3121 = vmatprep.subr.bf16.mxu0 0
    %3122 = vmatpush1.bf16.msra.mxu0 0
    %3123 = vmatprep.subr.bf16.mxu0 0
    %3124 = vmatpush1.bf16.msra.mxu0 0
    %3125 = vmatprep.subr.bf16.mxu0 0
    %3126 = vmatpush1.bf16.msra.mxu0 0
    %3127 = vmatprep.subr.bf16.mxu0 0
    %3128 = vmatpush1.bf16.msra.mxu0 0
    %3129 = vmatprep.subr.bf16.mxu0 0
    %3130 = vmatpush1.bf16.msra.mxu0 0
    %3131 = vmatprep.subr.bf16.mxu0 0
    %3132 = vmatpush1.bf16.msra.mxu0 0
    %3133 = vmatprep.subr.bf16.mxu0 0
    %3134 = vmatpush1.bf16.msra.mxu0 0
    %3135 = vmatprep.subr.bf16.mxu0 0
    %3136 = vmatpush1.bf16.msra.mxu0 0
    %3137 = vmatprep.subr.bf16.mxu0 0
    %3138 = vmatpush1.bf16.msra.mxu0 0
    %3139 = vmatprep.subr.bf16.mxu0 0
    %3140 = vmatpush1.bf16.msra.mxu0 0
    %3141 = vmatprep.subr.bf16.mxu0 0
    %3142 = vmatpush1.bf16.msra.mxu0 0
    %3143 = vmatprep.subr.bf16.mxu0 0
    %3144 = vmatpush1.bf16.msra.mxu0 0
    %3145 = vmatprep.subr.bf16.mxu0 0
    %3146 = vmatpush1.bf16.msra.mxu0 0
    %3147 = vmatprep.subr.bf16.mxu0 0
    %3148 = vmatpush1.bf16.msra.mxu0 0
    %3149 = vmatprep.mubr.bf16.mxu0 0
    %3150 = vmatmul.mubr.bf16.gmra.mrb[0].mxu0 %v3091
    %v3151 = vpop.f32.mrb[0].mxu0
    %v3152 = vadd.f32 0.0, %v3151
    %v3153 = vpop.f32.mrb[0].mxu0
    %v3154 = vpop.f32.mrb[0].mxu0
    %v3155 = vadd.f32 0.0, %v3154
    %v3156 = vpop.f32.mrb[0].mxu0
    %3157 = vmatprep.mubr.bf16.mxu0 0
    %3158 = vmatmul.mubr.bf16.gmra.mrb[0].mxu0 %v3094
    %v3159 = vpop.f32.mrb[0].mxu0
    %v3160 = vadd.f32 0.0, %v3159
    %v3161 = vpop.f32.mrb[0].mxu0
    %v3162 = vpop.f32.mrb[0].mxu0
    %v3163 = vadd.f32 0.0, %v3162
    %v3164 = vpop.f32.mrb[0].mxu0
    %3165 = vmatprep.mubr.bf16.mxu0 0
    %3166 = vmatmul.mubr.bf16.gmra.mrb[0].mxu0 %v3097
    %v3167 = vpop.f32.mrb[0].mxu0
    %v3168 = vadd.f32 0.0, %v3167
    %v3169 = vpop.f32.mrb[0].mxu0
    %v3170 = vpop.f32.mrb[0].mxu0
    %v3171 = vadd.f32 0.0, %v3170
    %v3172 = vpop.f32.mrb[0].mxu0
    %3173 = vmatprep.mubr.bf16.mxu0 0
    %3174 = vmatmul.mubr.bf16.gmra.mrb[0].mxu0 %v3100
    %v3175 = vpop.f32.mrb[0].mxu0
    %v3176 = vadd.f32 0.0, %v3175
    %v3177 = vpop.f32.mrb[0].mxu0
    %v3178 = vpop.f32.mrb[0].mxu0
    %v3179 = vadd.f32 0.0, %v3178
    %v3180 = vpop.f32.mrb[0].mxu0
    %3181 = vmatprep.mubr.bf16.mxu0 0
    %3182 = vmatmul.mubr.bf16.gmra.mrb[0].mxu0 %v3103
    %v3183 = vpop.f32.mrb[0].mxu0
    %v3184 = vadd.f32 0.0, %v3183
    %v3185 = vpop.f32.mrb[0].mxu0
    %v3186 = vpop.f32.mrb[0].mxu0
    %v3187 = vadd.f32 0.0, %v3186
    %v3188 = vpop.f32.mrb[0].mxu0
    %3189 = vmatprep.mubr.bf16.mxu0 0
    %3190 = vmatmul.mubr.bf16.gmra.mrb[0].mxu0 %v3106
    %v3191 = vpop.f32.mrb[0].mxu0
    %v3192 = vadd.f32 0.0, %v3191
    %v3193 = vpop.f32.mrb[0].mxu0
    %v3194 = vpop.f32.mrb[0].mxu0
    %v3195 = vadd.f32 0.0, %v3194
    %v3196 = vpop.f32.mrb[0].mxu0
    %3197 = vmatprep.mubr.bf16.mxu0 0
    %3198 = vmatmul.mubr.bf16.gmra.mrb[0].mxu0 %v3109
    %v3199 = vpop.f32.mrb[0].mxu0
    %v3200 = vadd.f32 0.0, %v3199
    %v3201 = vpop.f32.mrb[0].mxu0
    %v3202 = vpop.f32.mrb[0].mxu0
    %v3203 = vadd.f32 0.0, %v3202
    %v3204 = vpop.f32.mrb[0].mxu0
    %3205 = vmatprep.mubr.bf16.mxu0 0
    %3206 = vmatmul.mubr.bf16.gmra.mrb[0].mxu0 %v3112
    %v3207 = vpop.f32.mrb[0].mxu0
    %v3208 = vadd.f32 0.0, %v3207
    %v3209 = vpop.f32.mrb[0].mxu0
    %v3210 = vpop.f32.mrb[0].mxu0
    %v3211 = vadd.f32 0.0, %v3210
    %v3212 = vpop.f32.mrb[0].mxu0
    %3213 = vdwg.mxu0
    %v3214 = vadd.f32 %v3047, %v3152
    %v3215 = vadd.f32 %v3048, %v3155
    %v3216 = vadd.f32 %v3049, %v3160
    %v3217 = vadd.f32 %v3050, %v3163
    %v3218 = vadd.f32 %v3051, %v3168
    %v3219 = vadd.f32 %v3052, %v3171
    %v3220 = vadd.f32 %v3053, %v3176
    %v3221 = vadd.f32 %v3054, %v3179
    %v3222 = vadd.f32 %v3055, %v3184
    %v3223 = vadd.f32 %v3056, %v3187
    %v3224 = vadd.f32 %v3057, %v3192
    %v3225 = vadd.f32 %v3058, %v3195
    %v3226 = vadd.f32 %v3059, %v3200
    %v3227 = vadd.f32 %v3060, %v3203
    %v3228 = vadd.f32 %v3061, %v3208
    %v3229 = vadd.f32 %v3062, %v3211
    %v3230 = vld [vmem:[%s3063 + $0x1] sm:$0xff]
    %v3231 = vld [vmem:[%s3063 + $0x11] sm:$0xff]
    %v3232 = vld [vmem:[%s3063 + $0x21] sm:$0xff]
    %v3233 = vld [vmem:[%s3063 + $0x31] sm:$0xff]
    %v3234 = vld [vmem:[%s3063 + $0x41] sm:$0xff]
    %v3235 = vld [vmem:[%s3063 + $0x51] sm:$0xff]
    %v3236 = vld [vmem:[%s3063 + $0x61] sm:$0xff]
    %v3237 = vld [vmem:[%s3063 + $0x71] sm:$0xff]
    %v3238 = vld [vmem:[%s3063 + $0xa1] sm:$0xff]
    %v3239 = vld [vmem:[%s3063 + $0xb1] sm:$0xff]
    %v3240 = vld [vmem:[%s3063 + $0xc1] sm:$0xff]
    %v3241 = vld [vmem:[%s3063 + $0xd1] sm:$0xff]
    %v3242 = vld [vmem:[%s3063 + $0xe1] sm:$0xff]
    %v3243 = vld [vmem:[%s3063 + $0xf1] sm:$0xff]
    %v3244 = vld [vmem:[%s3063 + $0x101] sm:$0xff]
    %v3245 = vld [vmem:[%s3063 + $0x111] sm:$0xff]
    %v3246 = vpack.c.bf16 %v3231, %v3230
    %v3247 = vpack.c.bf16 %v3233, %v3232
    %v3248 = vpack.c.bf16 %v3235, %v3234
    %v3249 = vpack.c.bf16 %v3237, %v3236
    %v3250 = vpack.c.bf16 %v3239, %v3238
    %v3251 = vpack.c.bf16 %v3241, %v3240
    %v3252 = vpack.c.bf16 %v3243, %v3242
    %v3253 = vpack.c.bf16 %v3245, %v3244
    %s3254 = scalar_lea.vmem %s4, 28
    %v3255 = vld [vmem:[%s3254] sm:$0xf]
    %v3257 = vsel %vm1849, %v3246, 0
    %v3260 = vsel %vm1849, %v3247, 0
    %v3263 = vsel %vm1849, %v3248, 0
    %v3266 = vsel %vm1849, %v3249, 0
    %v3269 = vsel %vm1849, %v3250, 0
    %v3272 = vsel %vm1849, %v3251, 0
    %v3275 = vsel %vm1849, %v3252, 0
    %v3278 = vsel %vm1849, %v3253, 0
    %v3281 = vsel %vm2174, %v3255, 0
    %3283 = vmatprep.subr.bf16.mxu0 0
    %3284 = vmatpush1.bf16.msra.mxu0 %v3281
    %3285 = vmatprep.subr.bf16.mxu0 0
    %3286 = vmatpush1.bf16.msra.mxu0 0
    %3287 = vmatprep.subr.bf16.mxu0 0
    %3288 = vmatpush1.bf16.msra.mxu0 0
    %3289 = vmatprep.subr.bf16.mxu0 0
    %3290 = vmatpush1.bf16.msra.mxu0 0
    %3291 = vmatprep.subr.bf16.mxu0 0
    %3292 = vmatpush1.bf16.msra.mxu0 0
    %3293 = vmatprep.subr.bf16.mxu0 0
    %3294 = vmatpush1.bf16.msra.mxu0 0
    %3295 = vmatprep.subr.bf16.mxu0 0
    %3296 = vmatpush1.bf16.msra.mxu0 0
    %3297 = vmatprep.subr.bf16.mxu0 0
    %3298 = vmatpush1.bf16.msra.mxu0 0
    %3299 = vmatprep.subr.bf16.mxu0 0
    %3300 = vmatpush1.bf16.msra.mxu0 0
    %3301 = vmatprep.subr.bf16.mxu0 0
    %3302 = vmatpush1.bf16.msra.mxu0 0
    %3303 = vmatprep.subr.bf16.mxu0 0
    %3304 = vmatpush1.bf16.msra.mxu0 0
    %3305 = vmatprep.subr.bf16.mxu0 0
    %3306 = vmatpush1.bf16.msra.mxu0 0
    %3307 = vmatprep.subr.bf16.mxu0 0
    %3308 = vmatpush1.bf16.msra.mxu0 0
    %3309 = vmatprep.subr.bf16.mxu0 0
    %3310 = vmatpush1.bf16.msra.mxu0 0
    %3311 = vmatprep.subr.bf16.mxu0 0
    %3312 = vmatpush1.bf16.msra.mxu0 0
    %3313 = vmatprep.subr.bf16.mxu0 0
    %3314 = vmatpush1.bf16.msra.mxu0 0
    %3315 = vmatprep.mubr.bf16.mxu0 0
    %3316 = vmatmul.mubr.bf16.gmra.mrb[0].mxu0 %v3257
    %v3317 = vpop.f32.mrb[0].mxu0
    %v3318 = vadd.f32 0.0, %v3317
    %v3319 = vpop.f32.mrb[0].mxu0
    %v3320 = vpop.f32.mrb[0].mxu0
    %v3321 = vadd.f32 0.0, %v3320
    %v3322 = vpop.f32.mrb[0].mxu0
    %3323 = vmatprep.mubr.bf16.mxu0 0
    %3324 = vmatmul.mubr.bf16.gmra.mrb[0].mxu0 %v3260
    %v3325 = vpop.f32.mrb[0].mxu0
    %v3326 = vadd.f32 0.0, %v3325
    %v3327 = vpop.f32.mrb[0].mxu0
    %v3328 = vpop.f32.mrb[0].mxu0
    %v3329 = vadd.f32 0.0, %v3328
    %v3330 = vpop.f32.mrb[0].mxu0
    %3331 = vmatprep.mubr.bf16.mxu0 0
    %3332 = vmatmul.mubr.bf16.gmra.mrb[0].mxu0 %v3263
    %v3333 = vpop.f32.mrb[0].mxu0
    %v3334 = vadd.f32 0.0, %v3333
    %v3335 = vpop.f32.mrb[0].mxu0
    %v3336 = vpop.f32.mrb[0].mxu0
    %v3337 = vadd.f32 0.0, %v3336
    %v3338 = vpop.f32.mrb[0].mxu0
    %3339 = vmatprep.mubr.bf16.mxu0 0
    %3340 = vmatmul.mubr.bf16.gmra.mrb[0].mxu0 %v3266
    %v3341 = vpop.f32.mrb[0].mxu0
    %v3342 = vadd.f32 0.0, %v3341
    %v3343 = vpop.f32.mrb[0].mxu0
    %v3344 = vpop.f32.mrb[0].mxu0
    %v3345 = vadd.f32 0.0, %v3344
    %v3346 = vpop.f32.mrb[0].mxu0
    %3347 = vmatprep.mubr.bf16.mxu0 0
    %3348 = vmatmul.mubr.bf16.gmra.mrb[0].mxu0 %v3269
    %v3349 = vpop.f32.mrb[0].mxu0
    %v3350 = vadd.f32 0.0, %v3349
    %v3351 = vpop.f32.mrb[0].mxu0
    %v3352 = vpop.f32.mrb[0].mxu0
    %v3353 = vadd.f32 0.0, %v3352
    %v3354 = vpop.f32.mrb[0].mxu0
    %3355 = vmatprep.mubr.bf16.mxu0 0
    %3356 = vmatmul.mubr.bf16.gmra.mrb[0].mxu0 %v3272
    %v3357 = vpop.f32.mrb[0].mxu0
    %v3358 = vadd.f32 0.0, %v3357
    %v3359 = vpop.f32.mrb[0].mxu0
    %v3360 = vpop.f32.mrb[0].mxu0
    %v3361 = vadd.f32 0.0, %v3360
    %v3362 = vpop.f32.mrb[0].mxu0
    %3363 = vmatprep.mubr.bf16.mxu0 0
    %3364 = vmatmul.mubr.bf16.gmra.mrb[0].mxu0 %v3275
    %v3365 = vpop.f32.mrb[0].mxu0
    %v3366 = vadd.f32 0.0, %v3365
    %v3367 = vpop.f32.mrb[0].mxu0
    %v3368 = vpop.f32.mrb[0].mxu0
    %v3369 = vadd.f32 0.0, %v3368
    %v3370 = vpop.f32.mrb[0].mxu0
    %3371 = vmatprep.mubr.bf16.mxu0 0
    %3372 = vmatmul.mubr.bf16.gmra.mrb[0].mxu0 %v3278
    %v3373 = vpop.f32.mrb[0].mxu0
    %v3374 = vadd.f32 0.0, %v3373
    %v3375 = vpop.f32.mrb[0].mxu0
    %v3376 = vpop.f32.mrb[0].mxu0
    %v3377 = vadd.f32 0.0, %v3376
    %v3378 = vpop.f32.mrb[0].mxu0
    %3379 = vdwg.mxu0
    %v3380 = vadd.f32 %v3214, %v3318
    %v3381 = vadd.f32 %v3215, %v3321
    %v3382 = vadd.f32 %v3216, %v3326
    %v3383 = vadd.f32 %v3217, %v3329
    %v3384 = vadd.f32 %v3218, %v3334
    %v3385 = vadd.f32 %v3219, %v3337
    %v3386 = vadd.f32 %v3220, %v3342
    %v3387 = vadd.f32 %v3221, %v3345
    %v3388 = vadd.f32 %v3222, %v3350
    %v3389 = vadd.f32 %v3223, %v3353
    %v3390 = vadd.f32 %v3224, %v3358
    %v3391 = vadd.f32 %v3225, %v3361
    %v3392 = vadd.f32 %v3226, %v3366
    %v3393 = vadd.f32 %v3227, %v3369
    %v3394 = vadd.f32 %v3228, %v3374
    %v3395 = vadd.f32 %v3229, %v3377
    %v3396 = vld [vmem:[%s3063 + $0x2] sm:$0xff]
    %v3397 = vld [vmem:[%s3063 + $0x12] sm:$0xff]
    %v3398 = vld [vmem:[%s3063 + $0x22] sm:$0xff]
    %v3399 = vld [vmem:[%s3063 + $0x32] sm:$0xff]
    %v3400 = vld [vmem:[%s3063 + $0x42] sm:$0xff]
    %v3401 = vld [vmem:[%s3063 + $0x52] sm:$0xff]
    %v3402 = vld [vmem:[%s3063 + $0x62] sm:$0xff]
    %v3403 = vld [vmem:[%s3063 + $0x72] sm:$0xff]
    %v3404 = vld [vmem:[%s3063 + $0xa2] sm:$0xff]
    %v3405 = vld [vmem:[%s3063 + $0xb2] sm:$0xff]
    %v3406 = vld [vmem:[%s3063 + $0xc2] sm:$0xff]
    %v3407 = vld [vmem:[%s3063 + $0xd2] sm:$0xff]
    %v3408 = vld [vmem:[%s3063 + $0xe2] sm:$0xff]
    %v3409 = vld [vmem:[%s3063 + $0xf2] sm:$0xff]
    %v3410 = vld [vmem:[%s3063 + $0x102] sm:$0xff]
    %v3411 = vld [vmem:[%s3063 + $0x112] sm:$0xff]
    %v3412 = vpack.c.bf16 %v3397, %v3396
    %v3413 = vpack.c.bf16 %v3399, %v3398
    %v3414 = vpack.c.bf16 %v3401, %v3400
    %v3415 = vpack.c.bf16 %v3403, %v3402
    %v3416 = vpack.c.bf16 %v3405, %v3404
    %v3417 = vpack.c.bf16 %v3407, %v3406
    %v3418 = vpack.c.bf16 %v3409, %v3408
    %v3419 = vpack.c.bf16 %v3411, %v3410
    %s3420 = scalar_lea.vmem %s4, 32
    %v3421 = vld [vmem:[%s3420] sm:$0xf]
    %v3423 = vsel %vm1849, %v3412, 0
    %v3426 = vsel %vm1849, %v3413, 0
    %v3429 = vsel %vm1849, %v3414, 0
    %v3432 = vsel %vm1849, %v3415, 0
    %v3435 = vsel %vm1849, %v3416, 0
    %v3438 = vsel %vm1849, %v3417, 0
    %v3441 = vsel %vm1849, %v3418, 0
    %v3444 = vsel %vm1849, %v3419, 0
    %v3447 = vsel %vm2174, %v3421, 0
    %3449 = vmatprep.subr.bf16.mxu0 0
    %3450 = vmatpush1.bf16.msra.mxu0 %v3447
    %3451 = vmatprep.subr.bf16.mxu0 0
    %3452 = vmatpush1.bf16.msra.mxu0 0
    %3453 = vmatprep.subr.bf16.mxu0 0
    %3454 = vmatpush1.bf16.msra.mxu0 0
    %3455 = vmatprep.subr.bf16.mxu0 0
    %3456 = vmatpush1.bf16.msra.mxu0 0
    %3457 = vmatprep.subr.bf16.mxu0 0
    %3458 = vmatpush1.bf16.msra.mxu0 0
    %3459 = vmatprep.subr.bf16.mxu0 0
    %3460 = vmatpush1.bf16.msra.mxu0 0
    %3461 = vmatprep.subr.bf16.mxu0 0
    %3462 = vmatpush1.bf16.msra.mxu0 0
    %3463 = vmatprep.subr.bf16.mxu0 0
    %3464 = vmatpush1.bf16.msra.mxu0 0
    %3465 = vmatprep.subr.bf16.mxu0 0
    %3466 = vmatpush1.bf16.msra.mxu0 0
    %3467 = vmatprep.subr.bf16.mxu0 0
    %3468 = vmatpush1.bf16.msra.mxu0 0
    %3469 = vmatprep.subr.bf16.mxu0 0
    %3470 = vmatpush1.bf16.msra.mxu0 0
    %3471 = vmatprep.subr.bf16.mxu0 0
    %3472 = vmatpush1.bf16.msra.mxu0 0
    %3473 = vmatprep.subr.bf16.mxu0 0
    %3474 = vmatpush1.bf16.msra.mxu0 0
    %3475 = vmatprep.subr.bf16.mxu0 0
    %3476 = vmatpush1.bf16.msra.mxu0 0
    %3477 = vmatprep.subr.bf16.mxu0 0
    %3478 = vmatpush1.bf16.msra.mxu0 0
    %3479 = vmatprep.subr.bf16.mxu0 0
    %3480 = vmatpush1.bf16.msra.mxu0 0
    %3481 = vmatprep.mubr.bf16.mxu0 0
    %3482 = vmatmul.mubr.bf16.gmra.mrb[0].mxu0 %v3423
    %v3483 = vpop.f32.mrb[0].mxu0
    %v3484 = vadd.f32 0.0, %v3483
    %v3485 = vpop.f32.mrb[0].mxu0
    %v3486 = vpop.f32.mrb[0].mxu0
    %v3487 = vadd.f32 0.0, %v3486
    %v3488 = vpop.f32.mrb[0].mxu0
    %3489 = vmatprep.mubr.bf16.mxu0 0
    %3490 = vmatmul.mubr.bf16.gmra.mrb[0].mxu0 %v3426
    %v3491 = vpop.f32.mrb[0].mxu0
    %v3492 = vadd.f32 0.0, %v3491
    %v3493 = vpop.f32.mrb[0].mxu0
    %v3494 = vpop.f32.mrb[0].mxu0
    %v3495 = vadd.f32 0.0, %v3494
    %v3496 = vpop.f32.mrb[0].mxu0
    %3497 = vmatprep.mubr.bf16.mxu0 0
    %3498 = vmatmul.mubr.bf16.gmra.mrb[0].mxu0 %v3429
    %v3499 = vpop.f32.mrb[0].mxu0
    %v3500 = vadd.f32 0.0, %v3499
    %v3501 = vpop.f32.mrb[0].mxu0
    %v3502 = vpop.f32.mrb[0].mxu0
    %v3503 = vadd.f32 0.0, %v3502
    %v3504 = vpop.f32.mrb[0].mxu0
    %3505 = vmatprep.mubr.bf16.mxu0 0
    %3506 = vmatmul.mubr.bf16.gmra.mrb[0].mxu0 %v3432
    %v3507 = vpop.f32.mrb[0].mxu0
    %v3508 = vadd.f32 0.0, %v3507
    %v3509 = vpop.f32.mrb[0].mxu0
    %v3510 = vpop.f32.mrb[0].mxu0
    %v3511 = vadd.f32 0.0, %v3510
    %v3512 = vpop.f32.mrb[0].mxu0
    %3513 = vmatprep.mubr.bf16.mxu0 0
    %3514 = vmatmul.mubr.bf16.gmra.mrb[0].mxu0 %v3435
    %v3515 = vpop.f32.mrb[0].mxu0
    %v3516 = vadd.f32 0.0, %v3515
    %v3517 = vpop.f32.mrb[0].mxu0
    %v3518 = vpop.f32.mrb[0].mxu0
    %v3519 = vadd.f32 0.0, %v3518
    %v3520 = vpop.f32.mrb[0].mxu0
    %3521 = vmatprep.mubr.bf16.mxu0 0
    %3522 = vmatmul.mubr.bf16.gmra.mrb[0].mxu0 %v3438
    %v3523 = vpop.f32.mrb[0].mxu0
    %v3524 = vadd.f32 0.0, %v3523
    %v3525 = vpop.f32.mrb[0].mxu0
    %v3526 = vpop.f32.mrb[0].mxu0
    %v3527 = vadd.f32 0.0, %v3526
    %v3528 = vpop.f32.mrb[0].mxu0
    %3529 = vmatprep.mubr.bf16.mxu0 0
    %3530 = vmatmul.mubr.bf16.gmra.mrb[0].mxu0 %v3441
    %v3531 = vpop.f32.mrb[0].mxu0
    %v3532 = vadd.f32 0.0, %v3531
    %v3533 = vpop.f32.mrb[0].mxu0
    %v3534 = vpop.f32.mrb[0].mxu0
    %v3535 = vadd.f32 0.0, %v3534
    %v3536 = vpop.f32.mrb[0].mxu0
    %3537 = vmatprep.mubr.bf16.mxu0 0
    %3538 = vmatmul.mubr.bf16.gmra.mrb[0].mxu0 %v3444
    %v3539 = vpop.f32.mrb[0].mxu0
    %v3540 = vadd.f32 0.0, %v3539
    %v3541 = vpop.f32.mrb[0].mxu0
    %v3542 = vpop.f32.mrb[0].mxu0
    %v3543 = vadd.f32 0.0, %v3542
    %v3544 = vpop.f32.mrb[0].mxu0
    %3545 = vdwg.mxu0
    %v3546 = vadd.f32 %v3380, %v3484
    %v3547 = vadd.f32 %v3381, %v3487
    %v3548 = vadd.f32 %v3382, %v3492
    %v3549 = vadd.f32 %v3383, %v3495
    %v3550 = vadd.f32 %v3384, %v3500
    %v3551 = vadd.f32 %v3385, %v3503
    %v3552 = vadd.f32 %v3386, %v3508
    %v3553 = vadd.f32 %v3387, %v3511
    %v3554 = vadd.f32 %v3388, %v3516
    %v3555 = vadd.f32 %v3389, %v3519
    %v3556 = vadd.f32 %v3390, %v3524
    %v3557 = vadd.f32 %v3391, %v3527
    %v3558 = vadd.f32 %v3392, %v3532
    %v3559 = vadd.f32 %v3393, %v3535
    %v3560 = vadd.f32 %v3394, %v3540
    %v3561 = vadd.f32 %v3395, %v3543
    %v3562 = vld [vmem:[%s5] sm:$0x1]
    %v3563 = vld [vmem:[%s6] sm:$0x1]
    %v3564 = vsel %vm1849, %v3546, 0.0
    %v3565 = vsel %vm1849, %v3547, 0.0
    %v3566 = vadd.f32 %v3564, %v3565
    %v3567 = vsel %vm1849, %v3548, 0.0
    %v3568 = vadd.f32 %v3566, %v3567
    %v3569 = vsel %vm1849, %v3549, 0.0
    %v3570 = vadd.f32 %v3568, %v3569
    %v3571 = vsel %vm1849, %v3550, 0.0
    %v3572 = vadd.f32 %v3570, %v3571
    %v3573 = vsel %vm1849, %v3551, 0.0
    %v3574 = vadd.f32 %v3572, %v3573
    %v3575 = vsel %vm1849, %v3552, 0.0
    %v3576 = vadd.f32 %v3574, %v3575
    %v3577 = vsel %vm1849, %v3553, 0.0
    %v3578 = vadd.f32 %v3576, %v3577
    %v3579 = vsel %vm1849, %v3554, 0.0
    %v3580 = vadd.f32 %v3578, %v3579
    %v3581 = vsel %vm1849, %v3555, 0.0
    %v3582 = vadd.f32 %v3580, %v3581
    %v3583 = vsel %vm1849, %v3556, 0.0
    %v3584 = vadd.f32 %v3582, %v3583
    %v3585 = vsel %vm1849, %v3557, 0.0
    %v3586 = vadd.f32 %v3584, %v3585
    %v3587 = vsel %vm1849, %v3558, 0.0
    %v3588 = vadd.f32 %v3586, %v3587
    %v3589 = vsel %vm1849, %v3559, 0.0
    %v3590 = vadd.f32 %v3588, %v3589
    %v3591 = vsel %vm1849, %v3560, 0.0
    %v3592 = vadd.f32 %v3590, %v3591
    %v3593 = vsel %vm1849, %v3561, 0.0
    %v3594 = vadd.f32 %v3592, %v3593
    %v3595 = vrot.slane %v3594, 4
    %v3596 = vadd.f32 %v3594, %v3595
    %v3597 = vrot.slane %v3596, 2
    %v3598 = vadd.f32 %v3596, %v3597
    %v3599 = vrot.slane %v3598, 1
    %v3600 = vadd.f32 %v3598, %v3599
    %v3601 = vmul.f32 %v3546, %v3546
    %v3602 = vmul.f32 %v3547, %v3547
    %v3603 = vmul.f32 %v3548, %v3548
    %v3604 = vmul.f32 %v3549, %v3549
    %v3605 = vmul.f32 %v3550, %v3550
    %v3606 = vmul.f32 %v3551, %v3551
    %v3607 = vmul.f32 %v3552, %v3552
    %v3608 = vmul.f32 %v3553, %v3553
    %v3609 = vmul.f32 %v3554, %v3554
    %v3610 = vmul.f32 %v3555, %v3555
    %v3611 = vmul.f32 %v3556, %v3556
    %v3612 = vmul.f32 %v3557, %v3557
    %v3613 = vmul.f32 %v3558, %v3558
    %v3614 = vmul.f32 %v3559, %v3559
    %v3615 = vmul.f32 %v3560, %v3560
    %v3616 = vmul.f32 %v3561, %v3561
    %v3617 = vsel %vm1849, %v3601, 0.0
    %v3618 = vsel %vm1849, %v3602, 0.0
    %v3619 = vadd.f32 %v3617, %v3618
    %v3620 = vsel %vm1849, %v3603, 0.0
    %v3621 = vadd.f32 %v3619, %v3620
    %v3622 = vsel %vm1849, %v3604, 0.0
    %v3623 = vadd.f32 %v3621, %v3622
    %v3624 = vsel %vm1849, %v3605, 0.0
    %v3625 = vadd.f32 %v3623, %v3624
    %v3626 = vsel %vm1849, %v3606, 0.0
    %v3627 = vadd.f32 %v3625, %v3626
    %v3628 = vsel %vm1849, %v3607, 0.0
    %v3629 = vadd.f32 %v3627, %v3628
    %v3630 = vsel %vm1849, %v3608, 0.0
    %v3631 = vadd.f32 %v3629, %v3630
    %v3632 = vsel %vm1849, %v3609, 0.0
    %v3633 = vadd.f32 %v3631, %v3632
    %v3634 = vsel %vm1849, %v3610, 0.0
    %v3635 = vadd.f32 %v3633, %v3634
    %v3636 = vsel %vm1849, %v3611, 0.0
    %v3637 = vadd.f32 %v3635, %v3636
    %v3638 = vsel %vm1849, %v3612, 0.0
    %v3639 = vadd.f32 %v3637, %v3638
    %v3640 = vsel %vm1849, %v3613, 0.0
    %v3641 = vadd.f32 %v3639, %v3640
    %v3642 = vsel %vm1849, %v3614, 0.0
    %v3643 = vadd.f32 %v3641, %v3642
    %v3644 = vsel %vm1849, %v3615, 0.0
    %v3645 = vadd.f32 %v3643, %v3644
    %v3646 = vsel %vm1849, %v3616, 0.0
    %v3647 = vadd.f32 %v3645, %v3646
    %v3648 = vrot.slane %v3647, 4
    %v3649 = vadd.f32 %v3647, %v3648
    %v3650 = vrot.slane %v3649, 2
    %v3651 = vadd.f32 %v3649, %v3650
    %v3652 = vrot.slane %v3651, 1
    %v3653 = vadd.f32 %v3651, %v3652
    %v3654 = vmul.f32 %v3600, 0.0078125
    %v3655 = vmul.f32 %v3653, 0.0078125
    %v3656 = vmul.f32 %v3654, %v3654
    %v3657 = vsub.f32 %v3655, %v3656
    %v3658 = vmax.f32 %v3657, 0.0
    %v3659 = vsub.f32 %v3546, %v3654
    %v3660 = vsub.f32 %v3547, %v3654
    %v3661 = vsub.f32 %v3548, %v3654
    %v3662 = vsub.f32 %v3549, %v3654
    %v3663 = vsub.f32 %v3550, %v3654
    %v3664 = vsub.f32 %v3551, %v3654
    %v3665 = vsub.f32 %v3552, %v3654
    %v3666 = vsub.f32 %v3553, %v3654
    %v3667 = vsub.f32 %v3554, %v3654
    %v3668 = vsub.f32 %v3555, %v3654
    %v3669 = vsub.f32 %v3556, %v3654
    %v3670 = vsub.f32 %v3557, %v3654
    %v3671 = vsub.f32 %v3558, %v3654
    %v3672 = vsub.f32 %v3559, %v3654
    %v3673 = vsub.f32 %v3560, %v3654
    %v3674 = vsub.f32 %v3561, %v3654
    %v3675 = vadd.f32 %v3658, 1e-05
    %v3676 = vrsqrt.pop %v3675
    %v3677 = vmul.f32 %v3659, %v3676
    %v3678 = vmul.f32 %v3660, %v3676
    %v3679 = vmul.f32 %v3661, %v3676
    %v3680 = vmul.f32 %v3662, %v3676
    %v3681 = vmul.f32 %v3663, %v3676
    %v3682 = vmul.f32 %v3664, %v3676
    %v3683 = vmul.f32 %v3665, %v3676
    %v3684 = vmul.f32 %v3666, %v3676
    %v3685 = vmul.f32 %v3667, %v3676
    %v3686 = vmul.f32 %v3668, %v3676
    %v3687 = vmul.f32 %v3669, %v3676
    %v3688 = vmul.f32 %v3670, %v3676
    %v3689 = vmul.f32 %v3671, %v3676
    %v3690 = vmul.f32 %v3672, %v3676
    %v3691 = vmul.f32 %v3673, %v3676
    %v3692 = vmul.f32 %v3674, %v3676
    %v3694 = vlaneseq
    %v3695 = vshrl.u32 %v3694, 7
    %v3696 = vsub.s32 0, %v3695
    %v3697 = vrot.slane %v3562, %v3696
    %v3699 = vmul.f32 %v3677, %v3697
    %v3700 = vmul.f32 %v3678, %v3697
    %v3701 = vmul.f32 %v3679, %v3697
    %v3702 = vmul.f32 %v3680, %v3697
    %v3703 = vmul.f32 %v3681, %v3697
    %v3704 = vmul.f32 %v3682, %v3697
    %v3705 = vmul.f32 %v3683, %v3697
    %v3706 = vmul.f32 %v3684, %v3697
    %v3707 = vmul.f32 %v3685, %v3697
    %v3708 = vmul.f32 %v3686, %v3697
    %v3709 = vmul.f32 %v3687, %v3697
    %v3710 = vmul.f32 %v3688, %v3697
    %v3711 = vmul.f32 %v3689, %v3697
    %v3712 = vmul.f32 %v3690, %v3697
    %v3713 = vmul.f32 %v3691, %v3697
    %v3714 = vmul.f32 %v3692, %v3697
    %v3716 = vlaneseq
    %v3717 = vshrl.u32 %v3716, 7
    %v3718 = vsub.s32 0, %v3717
    %v3719 = vrot.slane %v3563, %v3718
    %v3721 = vadd.f32 %v3699, %v3719
    %v3722 = vadd.f32 %v3700, %v3719
    %v3723 = vadd.f32 %v3701, %v3719
    %v3724 = vadd.f32 %v3702, %v3719
    %v3725 = vadd.f32 %v3703, %v3719
    %v3726 = vadd.f32 %v3704, %v3719
    %v3727 = vadd.f32 %v3705, %v3719
    %v3728 = vadd.f32 %v3706, %v3719
    %v3729 = vadd.f32 %v3707, %v3719
    %v3730 = vadd.f32 %v3708, %v3719
    %v3731 = vadd.f32 %v3709, %v3719
    %v3732 = vadd.f32 %v3710, %v3719
    %v3733 = vadd.f32 %v3711, %v3719
    %v3734 = vadd.f32 %v3712, %v3719
    %v3735 = vadd.f32 %v3713, %v3719
    %v3736 = vadd.f32 %v3714, %v3719
    %v3737 = vld [vmem:[%s0] ss:$2 sm:$0xff]
    %s3738 = scalar_lea.vmem %s0, 32
    %v3739 = vld [vmem:[%s3738] ss:$2 sm:$0xff]
    %s3740 = scalar_lea.vmem %s0, 64
    %v3741 = vld [vmem:[%s3740] ss:$2 sm:$0xff]
    %s3742 = scalar_lea.vmem %s0, 96
    %v3743 = vld [vmem:[%s3742] ss:$2 sm:$0xff]
    %s3744 = scalar_lea.vmem %s0, 128
    %v3745 = vld [vmem:[%s3744] ss:$2 sm:$0xff]
    %s3746 = scalar_lea.vmem %s0, 160
    %v3747 = vld [vmem:[%s3746] ss:$2 sm:$0xff]
    %s3748 = scalar_lea.vmem %s0, 192
    %v3749 = vld [vmem:[%s3748] ss:$2 sm:$0xff]
    %s3750 = scalar_lea.vmem %s0, 224
    %v3751 = vld [vmem:[%s3750] ss:$2 sm:$0xff]
    %s3752 = scalar_lea.vmem %s0, 256
    %v3753 = vld [vmem:[%s3752] ss:$2 sm:$0xff]
    %s3754 = scalar_lea.vmem %s0, 288
    %v3755 = vld [vmem:[%s3754] ss:$2 sm:$0xff]
    %s3756 = scalar_lea.vmem %s0, 320
    %v3757 = vld [vmem:[%s3756] ss:$2 sm:$0xff]
    %s3758 = scalar_lea.vmem %s0, 352
    %v3759 = vld [vmem:[%s3758] ss:$2 sm:$0xff]
    %s3760 = scalar_lea.vmem %s0, 384
    %v3761 = vld [vmem:[%s3760] ss:$2 sm:$0xff]
    %s3762 = scalar_lea.vmem %s0, 416
    %v3763 = vld [vmem:[%s3762] ss:$2 sm:$0xff]
    %s3764 = scalar_lea.vmem %s0, 448
    %v3765 = vld [vmem:[%s3764] ss:$2 sm:$0xff]
    %s3766 = scalar_lea.vmem %s0, 480
    %v3767 = vld [vmem:[%s3766] ss:$2 sm:$0xff]
    %v3768 = vpack.c.bf16 %v3739, %v3737
    %v3769 = vpack.c.bf16 %v3743, %v3741
    %v3770 = vpack.c.bf16 %v3747, %v3745
    %v3771 = vpack.c.bf16 %v3751, %v3749
    %v3772 = vpack.c.bf16 %v3755, %v3753
    %v3773 = vpack.c.bf16 %v3759, %v3757
    %v3774 = vpack.c.bf16 %v3763, %v3761
    %v3775 = vpack.c.bf16 %v3767, %v3765
    %v3776 = vld [vmem:[%s7] sm:$0x3]
    %v3777 = vld [vmem:[%s8] sm:$0x1]
    %v3779 = vlaneseq
    %v3780 = vshrl.u32 %v3779, 7
    %v3781 = vsub.s32 0, %v3780
    %v3782 = vrot.slane %v3777, %v3781
    %v3785 = vsel %vm34, %v3768, 0
    %v3788 = vsel %vm34, %v3769, 0
    %v3791 = vsel %vm34, %v3770, 0
    %v3794 = vsel %vm34, %v3771, 0
    %v3797 = vsel %vm34, %v3772, 0
    %v3800 = vsel %vm34, %v3773, 0
    %v3803 = vsel %vm34, %v3774, 0
    %v3806 = vsel %vm34, %v3775, 0
    %v3809 = vsel %vm349, %v3776, 0
    %3811 = vmatprep.subr.bf16.mxu0 0
    %3812 = vmatpush1.bf16.msra.mxu0 %v3809
    %3813 = vmatprep.subr.bf16.mxu0 0
    %3814 = vmatpush1.bf16.msra.mxu0 0
    %3815 = vmatprep.subr.bf16.mxu0 0
    %3816 = vmatpush1.bf16.msra.mxu0 0
    %3817 = vmatprep.subr.bf16.mxu0 0
    %3818 = vmatpush1.bf16.msra.mxu0 0
    %3819 = vmatprep.subr.bf16.mxu0 0
    %3820 = vmatpush1.bf16.msra.mxu0 0
    %3821 = vmatprep.subr.bf16.mxu0 0
    %3822 = vmatpush1.bf16.msra.mxu0 0
    %3823 = vmatprep.subr.bf16.mxu0 0
    %3824 = vmatpush1.bf16.msra.mxu0 0
    %3825 = vmatprep.subr.bf16.mxu0 0
    %3826 = vmatpush1.bf16.msra.mxu0 0
    %3827 = vmatprep.subr.bf16.mxu0 0
    %3828 = vmatpush1.bf16.msra.mxu0 0
    %3829 = vmatprep.subr.bf16.mxu0 0
    %3830 = vmatpush1.bf16.msra.mxu0 0
    %3831 = vmatprep.subr.bf16.mxu0 0
    %3832 = vmatpush1.bf16.msra.mxu0 0
    %3833 = vmatprep.subr.bf16.mxu0 0
    %3834 = vmatpush1.bf16.msra.mxu0 0
    %3835 = vmatprep.subr.bf16.mxu0 0
    %3836 = vmatpush1.bf16.msra.mxu0 0
    %3837 = vmatprep.subr.bf16.mxu0 0
    %3838 = vmatpush1.bf16.msra.mxu0 0
    %3839 = vmatprep.subr.bf16.mxu0 0
    %3840 = vmatpush1.bf16.msra.mxu0 0
    %3841 = vmatprep.subr.bf16.mxu0 0
    %3842 = vmatpush1.bf16.msra.mxu0 0
    %3843 = vmatprep.mubr.bf16.mxu0 0
    %3844 = vmatmul.mubr.bf16.gmra.mrb[0].mxu0 %v3785
    %v3845 = vpop.f32.mrb[0].mxu0
    %v3846 = vadd.f32 %v3782, %v3845
    %v3847 = vpop.f32.mrb[0].mxu0
    %v3848 = vpop.f32.mrb[0].mxu0
    %v3849 = vadd.f32 %v3782, %v3848
    %v3850 = vpop.f32.mrb[0].mxu0
    %3851 = vmatprep.mubr.bf16.mxu0 0
    %3852 = vmatmul.mubr.bf16.gmra.mrb[0].mxu0 %v3788
    %v3853 = vpop.f32.mrb[0].mxu0
    %v3854 = vadd.f32 %v3782, %v3853
    %v3855 = vpop.f32.mrb[0].mxu0
    %v3856 = vpop.f32.mrb[0].mxu0
    %v3857 = vadd.f32 %v3782, %v3856
    %v3858 = vpop.f32.mrb[0].mxu0
    %3859 = vmatprep.mubr.bf16.mxu0 0
    %3860 = vmatmul.mubr.bf16.gmra.mrb[0].mxu0 %v3791
    %v3861 = vpop.f32.mrb[0].mxu0
    %v3862 = vadd.f32 %v3782, %v3861
    %v3863 = vpop.f32.mrb[0].mxu0
    %v3864 = vpop.f32.mrb[0].mxu0
    %v3865 = vadd.f32 %v3782, %v3864
    %v3866 = vpop.f32.mrb[0].mxu0
    %3867 = vmatprep.mubr.bf16.mxu0 0
    %3868 = vmatmul.mubr.bf16.gmra.mrb[0].mxu0 %v3794
    %v3869 = vpop.f32.mrb[0].mxu0
    %v3870 = vadd.f32 %v3782, %v3869
    %v3871 = vpop.f32.mrb[0].mxu0
    %v3872 = vpop.f32.mrb[0].mxu0
    %v3873 = vadd.f32 %v3782, %v3872
    %v3874 = vpop.f32.mrb[0].mxu0
    %3875 = vmatprep.mubr.bf16.mxu0 0
    %3876 = vmatmul.mubr.bf16.gmra.mrb[0].mxu0 %v3797
    %v3877 = vpop.f32.mrb[0].mxu0
    %v3878 = vadd.f32 %v3782, %v3877
    %v3879 = vpop.f32.mrb[0].mxu0
    %v3880 = vpop.f32.mrb[0].mxu0
    %v3881 = vadd.f32 %v3782, %v3880
    %v3882 = vpop.f32.mrb[0].mxu0
    %3883 = vmatprep.mubr.bf16.mxu0 0
    %3884 = vmatmul.mubr.bf16.gmra.mrb[0].mxu0 %v3800
    %v3885 = vpop.f32.mrb[0].mxu0
    %v3886 = vadd.f32 %v3782, %v3885
    %v3887 = vpop.f32.mrb[0].mxu0
    %v3888 = vpop.f32.mrb[0].mxu0
    %v3889 = vadd.f32 %v3782, %v3888
    %v3890 = vpop.f32.mrb[0].mxu0
    %3891 = vmatprep.mubr.bf16.mxu0 0
    %3892 = vmatmul.mubr.bf16.gmra.mrb[0].mxu0 %v3803
    %v3893 = vpop.f32.mrb[0].mxu0
    %v3894 = vadd.f32 %v3782, %v3893
    %v3895 = vpop.f32.mrb[0].mxu0
    %v3896 = vpop.f32.mrb[0].mxu0
    %v3897 = vadd.f32 %v3782, %v3896
    %v3898 = vpop.f32.mrb[0].mxu0
    %3899 = vmatprep.mubr.bf16.mxu0 0
    %3900 = vmatmul.mubr.bf16.gmra.mrb[0].mxu0 %v3806
    %v3901 = vpop.f32.mrb[0].mxu0
    %v3902 = vadd.f32 %v3782, %v3901
    %v3903 = vpop.f32.mrb[0].mxu0
    %v3904 = vpop.f32.mrb[0].mxu0
    %v3905 = vadd.f32 %v3782, %v3904
    %v3906 = vpop.f32.mrb[0].mxu0
    %3907 = vdwg.mxu0
    %v3908 = vadd.f32 %v3721, %v3846
    %v3909 = vadd.f32 %v3722, %v3849
    %v3910 = vadd.f32 %v3723, %v3854
    %v3911 = vadd.f32 %v3724, %v3857
    %v3912 = vadd.f32 %v3725, %v3862
    %v3913 = vadd.f32 %v3726, %v3865
    %v3914 = vadd.f32 %v3727, %v3870
    %v3915 = vadd.f32 %v3728, %v3873
    %v3916 = vadd.f32 %v3729, %v3878
    %v3917 = vadd.f32 %v3730, %v3881
    %v3918 = vadd.f32 %v3731, %v3886
    %v3919 = vadd.f32 %v3732, %v3889
    %v3920 = vadd.f32 %v3733, %v3894
    %v3921 = vadd.f32 %v3734, %v3897
    %v3922 = vadd.f32 %v3735, %v3902
    %v3923 = vadd.f32 %v3736, %v3905
    %v3924 = vmax.f32 %v3908, 0.0
    %v3925 = vmax.f32 %v3909, 0.0
    %v3926 = vmax.f32 %v3910, 0.0
    %v3927 = vmax.f32 %v3911, 0.0
    %v3928 = vmax.f32 %v3912, 0.0
    %v3929 = vmax.f32 %v3913, 0.0
    %v3930 = vmax.f32 %v3914, 0.0
    %v3931 = vmax.f32 %v3915, 0.0
    %v3932 = vmax.f32 %v3916, 0.0
    %v3933 = vmax.f32 %v3917, 0.0
    %v3934 = vmax.f32 %v3918, 0.0
    %v3935 = vmax.f32 %v3919, 0.0
    %v3936 = vmax.f32 %v3920, 0.0
    %v3937 = vmax.f32 %v3921, 0.0
    %v3938 = vmax.f32 %v3922, 0.0
    %v3939 = vmax.f32 %v3923, 0.0
    %3940 = vst.msk [vmem:[#allocation4] sm:$0xff] %vm1849, %v3924
    %3941 = vst.msk [vmem:[#allocation4 + $0x8] sm:$0xff] %vm1849, %v3925
    %3942 = vst.msk [vmem:[#allocation4 + $0x10] sm:$0xff] %vm1849, %v3926
    %3943 = vst.msk [vmem:[#allocation4 + $0x18] sm:$0xff] %vm1849, %v3927
    %3944 = vst.msk [vmem:[#allocation4 + $0x20] sm:$0xff] %vm1849, %v3928
    %3945 = vst.msk [vmem:[#allocation4 + $0x28] sm:$0xff] %vm1849, %v3929
    %3946 = vst.msk [vmem:[#allocation4 + $0x30] sm:$0xff] %vm1849, %v3930
    %3947 = vst.msk [vmem:[#allocation4 + $0x38] sm:$0xff] %vm1849, %v3931
    %3948 = vst.msk [vmem:[#allocation4 + $0x40] sm:$0xff] %vm1849, %v3932
    %3949 = vst.msk [vmem:[#allocation4 + $0x48] sm:$0xff] %vm1849, %v3933
    %3950 = vst.msk [vmem:[#allocation4 + $0x50] sm:$0xff] %vm1849, %v3934
    %3951 = vst.msk [vmem:[#allocation4 + $0x58] sm:$0xff] %vm1849, %v3935
    %3952 = vst.msk [vmem:[#allocation4 + $0x60] sm:$0xff] %vm1849, %v3936
    %3953 = vst.msk [vmem:[#allocation4 + $0x68] sm:$0xff] %vm1849, %v3937
    %3954 = vst.msk [vmem:[#allocation4 + $0x70] sm:$0xff] %vm1849, %v3938
    %3955 = vst.msk [vmem:[#allocation4 + $0x78] sm:$0xff] %vm1849, %v3939
    // Predicated region
    $region38: #{tpu_custom_call.1} parent=1 // pred_check
      _
    $region39: #{tpu_custom_call.1} parent=1 // pred_check_branch
      %3957 = sbr.rel (0) target = $region41
    $region40: #{tpu_custom_call.1} parent=1 // pred_region
      %s3959 = ssub.s32 2048, 2048
      %3960 = vsyncadd [#allocation5], %s3959
      %s3961 = sshll.u32 [#allocation4], 4
      %s3962 = int_to_ptr.vmem [resolvable:$true] %s3961
      %3967 = dma.vmem_to_hbm [thread:$0]  %s3962, 2048, %s9, [#allocation5], 128, 128, 8
    $region41: #{tpu_custom_call.1} parent=1 // pred_fallthru
      _
    // Predicated region
    $region42: #{tpu_custom_call.1} parent=1 // pred_check
      _
    $region43: #{tpu_custom_call.1} parent=1 // pred_check_branch
      %3969 = sbr.rel (0) target = $region45
    $region44: #{tpu_custom_call.1} parent=1 // pred_region
      %3970 = dma.done [#allocation5], 2048
    $region45: #{tpu_custom_call.1} parent=1 // pred_fallthru
      _
    %3971 = vsyncpa [#allocation5], 1

</llo_original>
